<compile_context>
chip_gen: v7x
topology: tpu7x:2x2x1
jax: 0.10.0
libtpu: 0.0.40
codegen_flags: <defaults>
</compile_context>

<pallas_src>
import functools

import jax
import jax.numpy as jnp
from jax.experimental import pallas as pl
from jax.experimental.pallas import tpu as pltpu

MAX_PAD = 3                    # halo of the effective 7x7 convolution
KW = 2 * MAX_PAD + 1           # 7
KTAPS = KW * KW                # 49


def _fused_conv_softmax_kernel(x_ref, w_ref, b_ref, o_ref, xflat_ref, patch_ref,
                               *, ch, H, W):
    # x_ref     : (B, ch, H*W)     input, spatial flattened onto lanes (VMEM)
    # w_ref     : (ch, ch*49)      folded 7x7 weights, columns ordered (ky,kx,ci) (VMEM)
    # b_ref     : (ch, 1)          folded bias column (VMEM)
    # o_ref     : (B, ch, H*W)     softmax output (VMEM)
    # xflat_ref : (ch, Hp*Wp)      zero-padded plane of one batch element, flattened (scratch)
    # patch_ref : (ch*49, NP)      im2col patch matrix (scratch)
    B = x_ref.shape[0]
    Wp = W + 2 * MAX_PAD
    NP = (H - 1) * Wp + W              # columns covering every valid output pixel
    row0 = MAX_PAD * Wp + MAX_PAD      # flat offset of output pixel (0, 0)

    # Zero the padded plane once; only the interior is rewritten per batch
    # element, so the halo stays zero across the (unrolled) batch loop.
    xflat_ref[...] = jnp.zeros_like(xflat_ref)

    for b in range(B):                 # whole batch handled in this single grid step
        # Scatter the unpadded rows into the interior of the padded flat plane
        # (replaces the wrapper-side jnp.pad + extra HBM copy).
        for y in range(H):
            xflat_ref[:, pl.ds(row0 + y * Wp, W)] = x_ref[b, :, pl.ds(y * W, W)]

        # im2col: tap (ky, kx) of the 7x7 window is the padded flat plane
        # shifted by ky*Wp + kx -- one static lane-offset copy per tap, shared
        # by all input channels (49 copies total, not 49*ch*ch slices).
        for ky in range(KW):
            for kx in range(KW):
                t = ky * KW + kx
                patch_ref[pl.ds(t * ch, ch), :] = xflat_ref[:, pl.ds(ky * Wp + kx, NP)]

        # One MXU GEMM over the folded contraction (K = ch*49), f32 accumulate.
        logits = jnp.dot(w_ref[...], patch_ref[...],
                         preferred_element_type=jnp.float32) + b_ref[...]

        # Channel softmax = sublane reduction (channels on sublanes, spatial on lanes).
        m = jnp.max(logits, axis=0, keepdims=True)
        e = jnp.exp(logits - m)
        denom = jnp.sum(e, axis=0, keepdims=True)
        # NOTE: pl.reciprocal(denom, approx=True) would push this onto the EUP
        # slot, but exact division keeps the kernel tight against the f32 reference.
        probs = e / denom

        # Compact the Wp-strided valid columns into the dense (ch, H*W) output rows.
        for y in range(H):
            o_ref[b, :, pl.ds(y * W, W)] = probs[:, y * Wp:y * Wp + W]


@jax.jit
def _one_step(params, x):
    B, ch, H, W = x.shape
    Wp = W + 2 * MAX_PAD
    HW = H * W
    NP = (H - 1) * Wp + W
    FLAT = (H + 2 * MAX_PAD) * Wp

    # Free reshape (collapses contiguous minor dims) -> lane-dense layout.
    x_flat = x.reshape(B, ch, HW)

    kernel = functools.partial(_fused_conv_softmax_kernel, ch=ch, H=H, W=W)

    flops = 2 * B * ch * (ch * KTAPS) * HW
    bytes_accessed = 4 * (2 * B * ch * HW + ch * ch * KTAPS + ch)

    out = pl.pallas_call(
        kernel,
        out_shape=jax.ShapeDtypeStruct((B, ch, HW), jnp.float32),
        # Single grid step with the whole batch: per-grid-step overhead dominates
        # at this size on v5e/v6e.  (v7x: split batch with CORE_PARALLEL instead.)
        grid=(1,),
        in_specs=[
            pl.BlockSpec((B, ch, HW), lambda i: (0, 0, 0)),        # x (VMEM)
            pl.BlockSpec((ch, ch * KTAPS), lambda i: (0, 0)),       # folded weights (VMEM)
            pl.BlockSpec((ch, 1), lambda i: (0, 0)),                # folded bias (VMEM)
        ],
        out_specs=pl.BlockSpec((B, ch, HW), lambda i: (0, 0, 0)),
        scratch_shapes=[
            pltpu.VMEM((ch, FLAT), jnp.float32),          # padded flat plane
            pltpu.VMEM((ch * KTAPS, NP), jnp.float32),    # im2col patches
        ],
        compiler_params=pltpu.CompilerParams(
            dimension_semantics=("arbitrary",)),
        cost_estimate=pl.CostEstimate(
            flops=flops,
            transcendentals=B * ch * HW,
            bytes_accessed=bytes_accessed),
    )(x_flat, params["w_eff"], params["b_eff"])

    return out.reshape(B, ch, H, W)   # free reshape back to NCHW


class TripleConvModelPallas:
    """JAX/Pallas port of TripleConvModel(ch)."""

    def __init__(self, ch=10, *, key):
        self.ch = ch

        def conv_init(k, kk):
            # Mimic nn.Conv2d default init: uniform(-1/sqrt(fan_in), 1/sqrt(fan_in))
            fan_in = ch * kk * kk
            bound = 1.0 / jnp.sqrt(jnp.float32(fan_in))
            kw, kb = jax.random.split(k)
            w = jax.random.uniform(kw, (ch, ch, kk, kk), jnp.float32, -bound, bound)
            b = jax.random.uniform(kb, (ch,), jnp.float32, -bound, bound)
            return w, b

        keys = jax.random.split(key, 6)
        self.w3, self.b3 = conv_init(keys[0], 3)
        self.w5, self.b5 = conv_init(keys[1], 5)
        self.w7, self.b7 = conv_init(keys[2], 7)
        self.wo1, self.bo1 = conv_init(keys[3], 1)
        self.wo2, self.bo2 = conv_init(keys[4], 1)
        self.wo3, self.bo3 = conv_init(keys[5], 1)

        # Fold the three spatial convs and the three 1x1 convs (all linear, no
        # nonlinearity between them) into one effective 7x7 conv + bias.
        hi = jax.lax.Precision.HIGHEST
        m1 = self.wo1[:, :, 0, 0]
        m2 = self.wo2[:, :, 0, 0]
        m3 = self.wo3[:, :, 0, 0]
        w3p = jnp.pad(self.w3, ((0, 0), (0, 0), (2, 2), (2, 2)))   # 3x3 -> centered 7x7
        w5p = jnp.pad(self.w5, ((0, 0), (0, 0), (1, 1), (1, 1)))   # 5x5 -> centered 7x7
        w_eff = (jnp.einsum("om,mikl->oikl", m1, w3p, precision=hi)
                 + jnp.einsum("om,mikl->oikl", m2, w5p, precision=hi)
                 + jnp.einsum("om,mikl->oikl", m3, self.w7, precision=hi))
        b_eff = (jnp.einsum("om,m->o", m1, self.b3, precision=hi)
                 + jnp.einsum("om,m->o", m2, self.b5, precision=hi)
                 + jnp.einsum("om,m->o", m3, self.b7, precision=hi)
                 + self.bo1 + self.bo2 + self.bo3)

        # Folded once at init: (ch, ch*49) weight matrix with columns ordered
        # (ky, kx, ci) to match the im2col row order, plus the bias as a column.
        self._params = {
            "w_eff": jnp.asarray(w_eff.transpose(0, 2, 3, 1).reshape(ch, ch * KTAPS)),
            "b_eff": jnp.asarray(b_eff.reshape(ch, 1)),
        }

    def __call__(self, x, steps=1):
        # x: (B, ch, H, W), NCHW — matches the PyTorch caller.
        # TODO(synk): fuse steps>1 into a single pallas_call (carry x in VMEM).
        for _ in range(steps):
            x = _one_step(self._params, x)
        return x


# ---------------- plain-JAX reference (for the correctness check) ----------------

def _conv2d_ref(x, w, b, pad):
    y = jax.lax.conv_general_dilated(
        x, w, window_strides=(1, 1),
        padding=((pad, pad), (pad, pad)),
        dimension_numbers=("NCHW", "OIHW", "NCHW"),
        precision=jax.lax.Precision.HIGHEST)
    return y + b[None, :, None, None]


def _forward_ref(model, x, steps=1):
    for _ in range(steps):
        o1 = _conv2d_ref(x, model.w3, model.b3, 1)
        o2 = _conv2d_ref(x, model.w5, model.b5, 2)
        o3 = _conv2d_ref(x, model.w7, model.b7, 3)
        y = (_conv2d_ref(o1, model.wo1, model.bo1, 0)
             + _conv2d_ref(o2, model.wo2, model.bo2, 0)
             + _conv2d_ref(o3, model.wo3, model.bo3, 0))
        x = jax.nn.softmax(y, axis=1)
    return x


if __name__ == "__main__":
    key = jax.random.PRNGKey(0)
    k_params, k_x = jax.random.split(key)

    B, ch, H, W = 2, 4, 16, 16
    model = TripleConvModelPallas(ch=ch, key=k_params)

    x = jax.random.normal(k_x, (B, ch, H, W), jnp.float32)

    out = model(x, steps=1)
    out = jax.block_until_ready(out)

    ref = _forward_ref(model, x, steps=1)
    assert out.shape == (B, ch, H, W)
    max_err = float(jnp.max(jnp.abs(out - ref)))
    # The conv folding and the MXU GEMM reassociate sums vs. the six-conv
    # reference; allow a small drift on the softmax probabilities.
    assert max_err < 1e-3, max_err

    print("KERNEL_OK")
</pallas_src>

<mosaic_0001>
module attributes {stable_mosaic.version = 11 : i64} {
  func.func @_fused_conv_softmax_kernel(%arg0: i32, %arg1: memref<2x4x256xf32, #tpu.memory_space<vmem>>, %arg2: memref<4x196xf32, #tpu.memory_space<vmem>>, %arg3: memref<4x1xf32, #tpu.memory_space<vmem>>, %arg4: memref<2x4x256xf32, #tpu.memory_space<vmem>>, %arg5: memref<4x484xf32, #tpu.memory_space<vmem>>, %arg6: memref<196x346xf32, #tpu.memory_space<vmem>>) attributes {dimension_semantics = [#tpu.dimension_semantics<arbitrary>], iteration_bounds = array<i64: 1>, scalar_prefetch = 0 : i64, scratch_operands = 2 : i64, tpu.core_type = #tpu.core_type<tc>, window_params = [{pipeline_mode = #tpu.pipeline_mode<synchronous>, transform_indices = @transform_0, window_bounds = array<i64: 2, 4, 256>}, {pipeline_mode = #tpu.pipeline_mode<synchronous>, transform_indices = @transform_1, window_bounds = array<i64: 4, 196>}, {pipeline_mode = #tpu.pipeline_mode<synchronous>, transform_indices = @transform_2, window_bounds = array<i64: 4, 1>}, {pipeline_mode = #tpu.pipeline_mode<synchronous>, transform_indices = @transform_3, window_bounds = array<i64: 2, 4, 256>}]} {
    %cst = arith.constant 0.000000e+00 : f32
    %0 = vector.broadcast %cst : f32 to vector<4x484xf32>
    %c0 = arith.constant 0 : index
    %c0_0 = arith.constant 0 : index
    %1 = vector.load %arg5[%c0, %c0_0] : memref<4x484xf32, #tpu.memory_space<vmem>>, vector<4x484xf32>
    tpu.vector_store %arg5[%c0, %c0_0], %0 {strides = array<i32>} : memref<4x484xf32, #tpu.memory_space<vmem>>, vector<4x484xf32>,
    %c0_1 = arith.constant 0 : index
    %c0_2 = arith.constant 0 : index
    %c0_3 = arith.constant 0 : index
    %2 = vector.load %arg1[%c0_1, %c0_2, %c0_3] : memref<2x4x256xf32, #tpu.memory_space<vmem>>, vector<1x4x16xf32>
    %3 = vector.shape_cast %2 : vector<1x4x16xf32> to vector<4x16xf32>
    %c0_4 = arith.constant 0 : index
    %c69 = arith.constant 69 : index
    %4 = vector.load %arg5[%c0_4, %c69] : memref<4x484xf32, #tpu.memory_space<vmem>>, vector<4x16xf32>
    tpu.vector_store %arg5[%c0_4, %c69], %3 {strides = array<i32>} : memref<4x484xf32, #tpu.memory_space<vmem>>, vector<4x16xf32>,
    %c0_5 = arith.constant 0 : index
    %c0_6 = arith.constant 0 : index
    %c16 = arith.constant 16 : index
    %5 = vector.load %arg1[%c0_5, %c0_6, %c16] : memref<2x4x256xf32, #tpu.memory_space<vmem>>, vector<1x4x16xf32>
    %6 = vector.shape_cast %5 : vector<1x4x16xf32> to vector<4x16xf32>
    %c0_7 = arith.constant 0 : index
    %c91 = arith.constant 91 : index
    %7 = vector.load %arg5[%c0_7, %c91] : memref<4x484xf32, #tpu.memory_space<vmem>>, vector<4x16xf32>
    tpu.vector_store %arg5[%c0_7, %c91], %6 {strides = array<i32>} : memref<4x484xf32, #tpu.memory_space<vmem>>, vector<4x16xf32>,
    %c0_8 = arith.constant 0 : index
    %c0_9 = arith.constant 0 : index
    %c32 = arith.constant 32 : index
    %8 = vector.load %arg1[%c0_8, %c0_9, %c32] : memref<2x4x256xf32, #tpu.memory_space<vmem>>, vector<1x4x16xf32>
    %9 = vector.shape_cast %8 : vector<1x4x16xf32> to vector<4x16xf32>
    %c0_10 = arith.constant 0 : index
    %c113 = arith.constant 113 : index
    %10 = vector.load %arg5[%c0_10, %c113] : memref<4x484xf32, #tpu.memory_space<vmem>>, vector<4x16xf32>
    tpu.vector_store %arg5[%c0_10, %c113], %9 {strides = array<i32>} : memref<4x484xf32, #tpu.memory_space<vmem>>, vector<4x16xf32>,
    %c0_11 = arith.constant 0 : index
    %c0_12 = arith.constant 0 : index
    %c48 = arith.constant 48 : index
    %11 = vector.load %arg1[%c0_11, %c0_12, %c48] : memref<2x4x256xf32, #tpu.memory_space<vmem>>, vector<1x4x16xf32>
    %12 = vector.shape_cast %11 : vector<1x4x16xf32> to vector<4x16xf32>
    %c0_13 = arith.constant 0 : index
    %c135 = arith.constant 135 : index
    %13 = vector.load %arg5[%c0_13, %c135] : memref<4x484xf32, #tpu.memory_space<vmem>>, vector<4x16xf32>
    tpu.vector_store %arg5[%c0_13, %c135], %12 {strides = array<i32>} : memref<4x484xf32, #tpu.memory_space<vmem>>, vector<4x16xf32>,
    %c0_14 = arith.constant 0 : index
    %c0_15 = arith.constant 0 : index
    %c64 = arith.constant 64 : index
    %14 = vector.load %arg1[%c0_14, %c0_15, %c64] : memref<2x4x256xf32, #tpu.memory_space<vmem>>, vector<1x4x16xf32>
    %15 = vector.shape_cast %14 : vector<1x4x16xf32> to vector<4x16xf32>
    %c0_16 = arith.constant 0 : index
    %c157 = arith.constant 157 : index
    %16 = vector.load %arg5[%c0_16, %c157] : memref<4x484xf32, #tpu.memory_space<vmem>>, vector<4x16xf32>
    tpu.vector_store %arg5[%c0_16, %c157], %15 {strides = array<i32>} : memref<4x484xf32, #tpu.memory_space<vmem>>, vector<4x16xf32>,
    %c0_17 = arith.constant 0 : index
    %c0_18 = arith.constant 0 : index
    %c80 = arith.constant 80 : index
    %17 = vector.load %arg1[%c0_17, %c0_18, %c80] : memref<2x4x256xf32, #tpu.memory_space<vmem>>, vector<1x4x16xf32>
    %18 = vector.shape_cast %17 : vector<1x4x16xf32> to vector<4x16xf32>
    %c0_19 = arith.constant 0 : index
    %c179 = arith.constant 179 : index
    %19 = vector.load %arg5[%c0_19, %c179] : memref<4x484xf32, #tpu.memory_space<vmem>>, vector<4x16xf32>
    tpu.vector_store %arg5[%c0_19, %c179], %18 {strides = array<i32>} : memref<4x484xf32, #tpu.memory_space<vmem>>, vector<4x16xf32>,
    %c0_20 = arith.constant 0 : index
    %c0_21 = arith.constant 0 : index
    %c96 = arith.constant 96 : index
    %20 = vector.load %arg1[%c0_20, %c0_21, %c96] : memref<2x4x256xf32, #tpu.memory_space<vmem>>, vector<1x4x16xf32>
    %21 = vector.shape_cast %20 : vector<1x4x16xf32> to vector<4x16xf32>
    %c0_22 = arith.constant 0 : index
    %c201 = arith.constant 201 : index
    %22 = vector.load %arg5[%c0_22, %c201] : memref<4x484xf32, #tpu.memory_space<vmem>>, vector<4x16xf32>
    tpu.vector_store %arg5[%c0_22, %c201], %21 {strides = array<i32>} : memref<4x484xf32, #tpu.memory_space<vmem>>, vector<4x16xf32>,
    %c0_23 = arith.constant 0 : index
    %c0_24 = arith.constant 0 : index
    %c112 = arith.constant 112 : index
    %23 = vector.load %arg1[%c0_23, %c0_24, %c112] : memref<2x4x256xf32, #tpu.memory_space<vmem>>, vector<1x4x16xf32>
    %24 = vector.shape_cast %23 : vector<1x4x16xf32> to vector<4x16xf32>
    %c0_25 = arith.constant 0 : index
    %c223 = arith.constant 223 : index
    %25 = vector.load %arg5[%c0_25, %c223] : memref<4x484xf32, #tpu.memory_space<vmem>>, vector<4x16xf32>
    tpu.vector_store %arg5[%c0_25, %c223], %24 {strides = array<i32>} : memref<4x484xf32, #tpu.memory_space<vmem>>, vector<4x16xf32>,
    %c0_26 = arith.constant 0 : index
    %c0_27 = arith.constant 0 : index
    %c128 = arith.constant 128 : index
    %26 = vector.load %arg1[%c0_26, %c0_27, %c128] : memref<2x4x256xf32, #tpu.memory_space<vmem>>, vector<1x4x16xf32>
    %27 = vector.shape_cast %26 : vector<1x4x16xf32> to vector<4x16xf32>
    %c0_28 = arith.constant 0 : index
    %c245 = arith.constant 245 : index
    %28 = vector.load %arg5[%c0_28, %c245] : memref<4x484xf32, #tpu.memory_space<vmem>>, vector<4x16xf32>
    tpu.vector_store %arg5[%c0_28, %c245], %27 {strides = array<i32>} : memref<4x484xf32, #tpu.memory_space<vmem>>, vector<4x16xf32>,
    %c0_29 = arith.constant 0 : index
    %c0_30 = arith.constant 0 : index
    %c144 = arith.constant 144 : index
    %29 = vector.load %arg1[%c0_29, %c0_30, %c144] : memref<2x4x256xf32, #tpu.memory_space<vmem>>, vector<1x4x16xf32>
    %30 = vector.shape_cast %29 : vector<1x4x16xf32> to vector<4x16xf32>
    %c0_31 = arith.constant 0 : index
    %c267 = arith.constant 267 : index
    %31 = vector.load %arg5[%c0_31, %c267] : memref<4x484xf32, #tpu.memory_space<vmem>>, vector<4x16xf32>
    tpu.vector_store %arg5[%c0_31, %c267], %30 {strides = array<i32>} : memref<4x484xf32, #tpu.memory_space<vmem>>, vector<4x16xf32>,
    %c0_32 = arith.constant 0 : index
    %c0_33 = arith.constant 0 : index
    %c160 = arith.constant 160 : index
    %32 = vector.load %arg1[%c0_32, %c0_33, %c160] : memref<2x4x256xf32, #tpu.memory_space<vmem>>, vector<1x4x16xf32>
    %33 = vector.shape_cast %32 : vector<1x4x16xf32> to vector<4x16xf32>
    %c0_34 = arith.constant 0 : index
    %c289 = arith.constant 289 : index
    %34 = vector.load %arg5[%c0_34, %c289] : memref<4x484xf32, #tpu.memory_space<vmem>>, vector<4x16xf32>
    tpu.vector_store %arg5[%c0_34, %c289], %33 {strides = array<i32>} : memref<4x484xf32, #tpu.memory_space<vmem>>, vector<4x16xf32>,
    %c0_35 = arith.constant 0 : index
    %c0_36 = arith.constant 0 : index
    %c176 = arith.constant 176 : index
    %35 = vector.load %arg1[%c0_35, %c0_36, %c176] : memref<2x4x256xf32, #tpu.memory_space<vmem>>, vector<1x4x16xf32>
    %36 = vector.shape_cast %35 : vector<1x4x16xf32> to vector<4x16xf32>
    %c0_37 = arith.constant 0 : index
    %c311 = arith.constant 311 : index
    %37 = vector.load %arg5[%c0_37, %c311] : memref<4x484xf32, #tpu.memory_space<vmem>>, vector<4x16xf32>
    tpu.vector_store %arg5[%c0_37, %c311], %36 {strides = array<i32>} : memref<4x484xf32, #tpu.memory_space<vmem>>, vector<4x16xf32>,
    %c0_38 = arith.constant 0 : index
    %c0_39 = arith.constant 0 : index
    %c192 = arith.constant 192 : index
    %38 = vector.load %arg1[%c0_38, %c0_39, %c192] : memref<2x4x256xf32, #tpu.memory_space<vmem>>, vector<1x4x16xf32>
    %39 = vector.shape_cast %38 : vector<1x4x16xf32> to vector<4x16xf32>
    %c0_40 = arith.constant 0 : index
    %c333 = arith.constant 333 : index
    %40 = vector.load %arg5[%c0_40, %c333] : memref<4x484xf32, #tpu.memory_space<vmem>>, vector<4x16xf32>
    tpu.vector_store %arg5[%c0_40, %c333], %39 {strides = array<i32>} : memref<4x484xf32, #tpu.memory_space<vmem>>, vector<4x16xf32>,
    %c0_41 = arith.constant 0 : index
    %c0_42 = arith.constant 0 : index
    %c208 = arith.constant 208 : index
    %41 = vector.load %arg1[%c0_41, %c0_42, %c208] : memref<2x4x256xf32, #tpu.memory_space<vmem>>, vector<1x4x16xf32>
    %42 = vector.shape_cast %41 : vector<1x4x16xf32> to vector<4x16xf32>
    %c0_43 = arith.constant 0 : index
    %c355 = arith.constant 355 : index
    %43 = vector.load %arg5[%c0_43, %c355] : memref<4x484xf32, #tpu.memory_space<vmem>>, vector<4x16xf32>
    tpu.vector_store %arg5[%c0_43, %c355], %42 {strides = array<i32>} : memref<4x484xf32, #tpu.memory_space<vmem>>, vector<4x16xf32>,
    %c0_44 = arith.constant 0 : index
    %c0_45 = arith.constant 0 : index
    %c224 = arith.constant 224 : index
    %44 = vector.load %arg1[%c0_44, %c0_45, %c224] : memref<2x4x256xf32, #tpu.memory_space<vmem>>, vector<1x4x16xf32>
    %45 = vector.shape_cast %44 : vector<1x4x16xf32> to vector<4x16xf32>
    %c0_46 = arith.constant 0 : index
    %c377 = arith.constant 377 : index
    %46 = vector.load %arg5[%c0_46, %c377] : memref<4x484xf32, #tpu.memory_space<vmem>>, vector<4x16xf32>
    tpu.vector_store %arg5[%c0_46, %c377], %45 {strides = array<i32>} : memref<4x484xf32, #tpu.memory_space<vmem>>, vector<4x16xf32>,
    %c0_47 = arith.constant 0 : index
    %c0_48 = arith.constant 0 : index
    %c240 = arith.constant 240 : index
    %47 = vector.load %arg1[%c0_47, %c0_48, %c240] : memref<2x4x256xf32, #tpu.memory_space<vmem>>, vector<1x4x16xf32>
    %48 = vector.shape_cast %47 : vector<1x4x16xf32> to vector<4x16xf32>
    %c0_49 = arith.constant 0 : index
    %c399 = arith.constant 399 : index
    %49 = vector.load %arg5[%c0_49, %c399] : memref<4x484xf32, #tpu.memory_space<vmem>>, vector<4x16xf32>
    tpu.vector_store %arg5[%c0_49, %c399], %48 {strides = array<i32>} : memref<4x484xf32, #tpu.memory_space<vmem>>, vector<4x16xf32>,
    %c0_50 = arith.constant 0 : index
    %c0_51 = arith.constant 0 : index
    %50 = vector.load %arg5[%c0_50, %c0_51] : memref<4x484xf32, #tpu.memory_space<vmem>>, vector<4x346xf32>
    %c0_52 = arith.constant 0 : index
    %c0_53 = arith.constant 0 : index
    %51 = vector.load %arg6[%c0_52, %c0_53] : memref<196x346xf32, #tpu.memory_space<vmem>>, vector<4x346xf32>
    tpu.vector_store %arg6[%c0_52, %c0_53], %50 {strides = array<i32>} : memref<196x346xf32, #tpu.memory_space<vmem>>, vector<4x346xf32>,
    %c0_54 = arith.constant 0 : index
    %c1 = arith.constant 1 : index
    %52 = vector.load %arg5[%c0_54, %c1] : memref<4x484xf32, #tpu.memory_space<vmem>>, vector<4x346xf32>
    %c4 = arith.constant 4 : index
    %c0_55 = arith.constant 0 : index
    %53 = vector.load %arg6[%c4, %c0_55] : memref<196x346xf32, #tpu.memory_space<vmem>>, vector<4x346xf32>
    tpu.vector_store %arg6[%c4, %c0_55], %52 {strides = array<i32>} : memref<196x346xf32, #tpu.memory_space<vmem>>, vector<4x346xf32>,
    %c0_56 = arith.constant 0 : index
    %c2 = arith.constant 2 : index
    %54 = vector.load %arg5[%c0_56, %c2] : memref<4x484xf32, #tpu.memory_space<vmem>>, vector<4x346xf32>
    %c8 = arith.constant 8 : index
    %c0_57 = arith.constant 0 : index
    %55 = vector.load %arg6[%c8, %c0_57] : memref<196x346xf32, #tpu.memory_space<vmem>>, vector<4x346xf32>
    tpu.vector_store %arg6[%c8, %c0_57], %54 {strides = array<i32>} : memref<196x346xf32, #tpu.memory_space<vmem>>, vector<4x346xf32>,
    %c0_58 = arith.constant 0 : index
    %c3 = arith.constant 3 : index
    %56 = vector.load %arg5[%c0_58, %c3] : memref<4x484xf32, #tpu.memory_space<vmem>>, vector<4x346xf32>
    %c12 = arith.constant 12 : index
    %c0_59 = arith.constant 0 : index
    %57 = vector.load %arg6[%c12, %c0_59] : memref<196x346xf32, #tpu.memory_space<vmem>>, vector<4x346xf32>
    tpu.vector_store %arg6[%c12, %c0_59], %56 {strides = array<i32>} : memref<196x346xf32, #tpu.memory_space<vmem>>, vector<4x346xf32>,
    %c0_60 = arith.constant 0 : index
    %c4_61 = arith.constant 4 : index
    %58 = vector.load %arg5[%c0_60, %c4_61] : memref<4x484xf32, #tpu.memory_space<vmem>>, vector<4x346xf32>
    %c16_62 = arith.constant 16 : index
    %c0_63 = arith.constant 0 : index
    %59 = vector.load %arg6[%c16_62, %c0_63] : memref<196x346xf32, #tpu.memory_space<vmem>>, vector<4x346xf32>
    tpu.vector_store %arg6[%c16_62, %c0_63], %58 {strides = array<i32>} : memref<196x346xf32, #tpu.memory_space<vmem>>, vector<4x346xf32>,
    %c0_64 = arith.constant 0 : index
    %c5 = arith.constant 5 : index
    %60 = vector.load %arg5[%c0_64, %c5] : memref<4x484xf32, #tpu.memory_space<vmem>>, vector<4x346xf32>
    %c20 = arith.constant 20 : index
    %c0_65 = arith.constant 0 : index
    %61 = vector.load %arg6[%c20, %c0_65] : memref<196x346xf32, #tpu.memory_space<vmem>>, vector<4x346xf32>
    tpu.vector_store %arg6[%c20, %c0_65], %60 {strides = array<i32>} : memref<196x346xf32, #tpu.memory_space<vmem>>, vector<4x346xf32>,
    %c0_66 = arith.constant 0 : index
    %c6 = arith.constant 6 : index
    %62 = vector.load %arg5[%c0_66, %c6] : memref<4x484xf32, #tpu.memory_space<vmem>>, vector<4x346xf32>
    %c24 = arith.constant 24 : index
    %c0_67 = arith.constant 0 : index
    %63 = vector.load %arg6[%c24, %c0_67] : memref<196x346xf32, #tpu.memory_space<vmem>>, vector<4x346xf32>
    tpu.vector_store %arg6[%c24, %c0_67], %62 {strides = array<i32>} : memref<196x346xf32, #tpu.memory_space<vmem>>, vector<4x346xf32>,
    %c0_68 = arith.constant 0 : index
    %c22 = arith.constant 22 : index
    %64 = vector.load %arg5[%c0_68, %c22] : memref<4x484xf32, #tpu.memory_space<vmem>>, vector<4x346xf32>
    %c28 = arith.constant 28 : index
    %c0_69 = arith.constant 0 : index
    %65 = vector.load %arg6[%c28, %c0_69] : memref<196x346xf32, #tpu.memory_space<vmem>>, vector<4x346xf32>
    tpu.vector_store %arg6[%c28, %c0_69], %64 {strides = array<i32>} : memref<196x346xf32, #tpu.memory_space<vmem>>, vector<4x346xf32>,
    %c0_70 = arith.constant 0 : index
    %c23 = arith.constant 23 : index
    %66 = vector.load %arg5[%c0_70, %c23] : memref<4x484xf32, #tpu.memory_space<vmem>>, vector<4x346xf32>
    %c32_71 = arith.constant 32 : index
    %c0_72 = arith.constant 0 : index
    %67 = vector.load %arg6[%c32_71, %c0_72] : memref<196x346xf32, #tpu.memory_space<vmem>>, vector<4x346xf32>
    tpu.vector_store %arg6[%c32_71, %c0_72], %66 {strides = array<i32>} : memref<196x346xf32, #tpu.memory_space<vmem>>, vector<4x346xf32>,
    %c0_73 = arith.constant 0 : index
    %c24_74 = arith.constant 24 : index
    %68 = vector.load %arg5[%c0_73, %c24_74] : memref<4x484xf32, #tpu.memory_space<vmem>>, vector<4x346xf32>
    %c36 = arith.constant 36 : index
    %c0_75 = arith.constant 0 : index
    %69 = vector.load %arg6[%c36, %c0_75] : memref<196x346xf32, #tpu.memory_space<vmem>>, vector<4x346xf32>
    tpu.vector_store %arg6[%c36, %c0_75], %68 {strides = array<i32>} : memref<196x346xf32, #tpu.memory_space<vmem>>, vector<4x346xf32>,
    %c0_76 = arith.constant 0 : index
    %c25 = arith.constant 25 : index
    %70 = vector.load %arg5[%c0_76, %c25] : memref<4x484xf32, #tpu.memory_space<vmem>>, vector<4x346xf32>
    %c40 = arith.constant 40 : index
    %c0_77 = arith.constant 0 : index
    %71 = vector.load %arg6[%c40, %c0_77] : memref<196x346xf32, #tpu.memory_space<vmem>>, vector<4x346xf32>
    tpu.vector_store %arg6[%c40, %c0_77], %70 {strides = array<i32>} : memref<196x346xf32, #tpu.memory_space<vmem>>, vector<4x346xf32>,
    %c0_78 = arith.constant 0 : index
    %c26 = arith.constant 26 : index
    %72 = vector.load %arg5[%c0_78, %c26] : memref<4x484xf32, #tpu.memory_space<vmem>>, vector<4x346xf32>
    %c44 = arith.constant 44 : index
    %c0_79 = arith.constant 0 : index
    %73 = vector.load %arg6[%c44, %c0_79] : memref<196x346xf32, #tpu.memory_space<vmem>>, vector<4x346xf32>
    tpu.vector_store %arg6[%c44, %c0_79], %72 {strides = array<i32>} : memref<196x346xf32, #tpu.memory_space<vmem>>, vector<4x346xf32>,
    %c0_80 = arith.constant 0 : index
    %c27 = arith.constant 27 : index
    %74 = vector.load %arg5[%c0_80, %c27] : memref<4x484xf32, #tpu.memory_space<vmem>>, vector<4x346xf32>
    %c48_81 = arith.constant 48 : index
    %c0_82 = arith.constant 0 : index
    %75 = vector.load %arg6[%c48_81, %c0_82] : memref<196x346xf32, #tpu.memory_space<vmem>>, vector<4x346xf32>
    tpu.vector_store %arg6[%c48_81, %c0_82], %74 {strides = array<i32>} : memref<196x346xf32, #tpu.memory_space<vmem>>, vector<4x346xf32>,
    %c0_83 = arith.constant 0 : index
    %c28_84 = arith.constant 28 : index
    %76 = vector.load %arg5[%c0_83, %c28_84] : memref<4x484xf32, #tpu.memory_space<vmem>>, vector<4x346xf32>
    %c52 = arith.constant 52 : index
    %c0_85 = arith.constant 0 : index
    %77 = vector.load %arg6[%c52, %c0_85] : memref<196x346xf32, #tpu.memory_space<vmem>>, vector<4x346xf32>
    tpu.vector_store %arg6[%c52, %c0_85], %76 {strides = array<i32>} : memref<196x346xf32, #tpu.memory_space<vmem>>, vector<4x346xf32>,
    %c0_86 = arith.constant 0 : index
    %c44_87 = arith.constant 44 : index
    %78 = vector.load %arg5[%c0_86, %c44_87] : memref<4x484xf32, #tpu.memory_space<vmem>>, vector<4x346xf32>
    %c56 = arith.constant 56 : index
    %c0_88 = arith.constant 0 : index
    %79 = vector.load %arg6[%c56, %c0_88] : memref<196x346xf32, #tpu.memory_space<vmem>>, vector<4x346xf32>
    tpu.vector_store %arg6[%c56, %c0_88], %78 {strides = array<i32>} : memref<196x346xf32, #tpu.memory_space<vmem>>, vector<4x346xf32>,
    %c0_89 = arith.constant 0 : index
    %c45 = arith.constant 45 : index
    %80 = vector.load %arg5[%c0_89, %c45] : memref<4x484xf32, #tpu.memory_space<vmem>>, vector<4x346xf32>
    %c60 = arith.constant 60 : index
    %c0_90 = arith.constant 0 : index
    %81 = vector.load %arg6[%c60, %c0_90] : memref<196x346xf32, #tpu.memory_space<vmem>>, vector<4x346xf32>
    tpu.vector_store %arg6[%c60, %c0_90], %80 {strides = array<i32>} : memref<196x346xf32, #tpu.memory_space<vmem>>, vector<4x346xf32>,
    %c0_91 = arith.constant 0 : index
    %c46 = arith.constant 46 : index
    %82 = vector.load %arg5[%c0_91, %c46] : memref<4x484xf32, #tpu.memory_space<vmem>>, vector<4x346xf32>
    %c64_92 = arith.constant 64 : index
    %c0_93 = arith.constant 0 : index
    %83 = vector.load %arg6[%c64_92, %c0_93] : memref<196x346xf32, #tpu.memory_space<vmem>>, vector<4x346xf32>
    tpu.vector_store %arg6[%c64_92, %c0_93], %82 {strides = array<i32>} : memref<196x346xf32, #tpu.memory_space<vmem>>, vector<4x346xf32>,
    %c0_94 = arith.constant 0 : index
    %c47 = arith.constant 47 : index
    %84 = vector.load %arg5[%c0_94, %c47] : memref<4x484xf32, #tpu.memory_space<vmem>>, vector<4x346xf32>
    %c68 = arith.constant 68 : index
    %c0_95 = arith.constant 0 : index
    %85 = vector.load %arg6[%c68, %c0_95] : memref<196x346xf32, #tpu.memory_space<vmem>>, vector<4x346xf32>
    tpu.vector_store %arg6[%c68, %c0_95], %84 {strides = array<i32>} : memref<196x346xf32, #tpu.memory_space<vmem>>, vector<4x346xf32>,
    %c0_96 = arith.constant 0 : index
    %c48_97 = arith.constant 48 : index
    %86 = vector.load %arg5[%c0_96, %c48_97] : memref<4x484xf32, #tpu.memory_space<vmem>>, vector<4x346xf32>
    %c72 = arith.constant 72 : index
    %c0_98 = arith.constant 0 : index
    %87 = vector.load %arg6[%c72, %c0_98] : memref<196x346xf32, #tpu.memory_space<vmem>>, vector<4x346xf32>
    tpu.vector_store %arg6[%c72, %c0_98], %86 {strides = array<i32>} : memref<196x346xf32, #tpu.memory_space<vmem>>, vector<4x346xf32>,
    %c0_99 = arith.constant 0 : index
    %c49 = arith.constant 49 : index
    %88 = vector.load %arg5[%c0_99, %c49] : memref<4x484xf32, #tpu.memory_space<vmem>>, vector<4x346xf32>
    %c76 = arith.constant 76 : index
    %c0_100 = arith.constant 0 : index
    %89 = vector.load %arg6[%c76, %c0_100] : memref<196x346xf32, #tpu.memory_space<vmem>>, vector<4x346xf32>
    tpu.vector_store %arg6[%c76, %c0_100], %88 {strides = array<i32>} : memref<196x346xf32, #tpu.memory_space<vmem>>, vector<4x346xf32>,
    %c0_101 = arith.constant 0 : index
    %c50 = arith.constant 50 : index
    %90 = vector.load %arg5[%c0_101, %c50] : memref<4x484xf32, #tpu.memory_space<vmem>>, vector<4x346xf32>
    %c80_102 = arith.constant 80 : index
    %c0_103 = arith.constant 0 : index
    %91 = vector.load %arg6[%c80_102, %c0_103] : memref<196x346xf32, #tpu.memory_space<vmem>>, vector<4x346xf32>
    tpu.vector_store %arg6[%c80_102, %c0_103], %90 {strides = array<i32>} : memref<196x346xf32, #tpu.memory_space<vmem>>, vector<4x346xf32>,
    %c0_104 = arith.constant 0 : index
    %c66 = arith.constant 66 : index
    %92 = vector.load %arg5[%c0_104, %c66] : memref<4x484xf32, #tpu.memory_space<vmem>>, vector<4x346xf32>
    %c84 = arith.constant 84 : index
    %c0_105 = arith.constant 0 : index
    %93 = vector.load %arg6[%c84, %c0_105] : memref<196x346xf32, #tpu.memory_space<vmem>>, vector<4x346xf32>
    tpu.vector_store %arg6[%c84, %c0_105], %92 {strides = array<i32>} : memref<196x346xf32, #tpu.memory_space<vmem>>, vector<4x346xf32>,
    %c0_106 = arith.constant 0 : index
    %c67 = arith.constant 67 : index
    %94 = vector.load %arg5[%c0_106, %c67] : memref<4x484xf32, #tpu.memory_space<vmem>>, vector<4x346xf32>
    %c88 = arith.constant 88 : index
    %c0_107 = arith.constant 0 : index
    %95 = vector.load %arg6[%c88, %c0_107] : memref<196x346xf32, #tpu.memory_space<vmem>>, vector<4x346xf32>
    tpu.vector_store %arg6[%c88, %c0_107], %94 {strides = array<i32>} : memref<196x346xf32, #tpu.memory_space<vmem>>, vector<4x346xf32>,
    %c0_108 = arith.constant 0 : index
    %c68_109 = arith.constant 68 : index
    %96 = vector.load %arg5[%c0_108, %c68_109] : memref<4x484xf32, #tpu.memory_space<vmem>>, vector<4x346xf32>
    %c92 = arith.constant 92 : index
    %c0_110 = arith.constant 0 : index
    %97 = vector.load %arg6[%c92, %c0_110] : memref<196x346xf32, #tpu.memory_space<vmem>>, vector<4x346xf32>
    tpu.vector_store %arg6[%c92, %c0_110], %96 {strides = array<i32>} : memref<196x346xf32, #tpu.memory_space<vmem>>, vector<4x346xf32>,
    %c0_111 = arith.constant 0 : index
    %c69_112 = arith.constant 69 : index
    %98 = vector.load %arg5[%c0_111, %c69_112] : memref<4x484xf32, #tpu.memory_space<vmem>>, vector<4x346xf32>
    %c96_113 = arith.constant 96 : index
    %c0_114 = arith.constant 0 : index
    %99 = vector.load %arg6[%c96_113, %c0_114] : memref<196x346xf32, #tpu.memory_space<vmem>>, vector<4x346xf32>
    tpu.vector_store %arg6[%c96_113, %c0_114], %98 {strides = array<i32>} : memref<196x346xf32, #tpu.memory_space<vmem>>, vector<4x346xf32>,
    %c0_115 = arith.constant 0 : index
    %c70 = arith.constant 70 : index
    %100 = vector.load %arg5[%c0_115, %c70] : memref<4x484xf32, #tpu.memory_space<vmem>>, vector<4x346xf32>
    %c100 = arith.constant 100 : index
    %c0_116 = arith.constant 0 : index
    %101 = vector.load %arg6[%c100, %c0_116] : memref<196x346xf32, #tpu.memory_space<vmem>>, vector<4x346xf32>
    tpu.vector_store %arg6[%c100, %c0_116], %100 {strides = array<i32>} : memref<196x346xf32, #tpu.memory_space<vmem>>, vector<4x346xf32>,
    %c0_117 = arith.constant 0 : index
    %c71 = arith.constant 71 : index
    %102 = vector.load %arg5[%c0_117, %c71] : memref<4x484xf32, #tpu.memory_space<vmem>>, vector<4x346xf32>
    %c104 = arith.constant 104 : index
    %c0_118 = arith.constant 0 : index
    %103 = vector.load %arg6[%c104, %c0_118] : memref<196x346xf32, #tpu.memory_space<vmem>>, vector<4x346xf32>
    tpu.vector_store %arg6[%c104, %c0_118], %102 {strides = array<i32>} : memref<196x346xf32, #tpu.memory_space<vmem>>, vector<4x346xf32>,
    %c0_119 = arith.constant 0 : index
    %c72_120 = arith.constant 72 : index
    %104 = vector.load %arg5[%c0_119, %c72_120] : memref<4x484xf32, #tpu.memory_space<vmem>>, vector<4x346xf32>
    %c108 = arith.constant 108 : index
    %c0_121 = arith.constant 0 : index
    %105 = vector.load %arg6[%c108, %c0_121] : memref<196x346xf32, #tpu.memory_space<vmem>>, vector<4x346xf32>
    tpu.vector_store %arg6[%c108, %c0_121], %104 {strides = array<i32>} : memref<196x346xf32, #tpu.memory_space<vmem>>, vector<4x346xf32>,
    %c0_122 = arith.constant 0 : index
    %c88_123 = arith.constant 88 : index
    %106 = vector.load %arg5[%c0_122, %c88_123] : memref<4x484xf32, #tpu.memory_space<vmem>>, vector<4x346xf32>
    %c112_124 = arith.constant 112 : index
    %c0_125 = arith.constant 0 : index
    %107 = vector.load %arg6[%c112_124, %c0_125] : memref<196x346xf32, #tpu.memory_space<vmem>>, vector<4x346xf32>
    tpu.vector_store %arg6[%c112_124, %c0_125], %106 {strides = array<i32>} : memref<196x346xf32, #tpu.memory_space<vmem>>, vector<4x346xf32>,
    %c0_126 = arith.constant 0 : index
    %c89 = arith.constant 89 : index
    %108 = vector.load %arg5[%c0_126, %c89] : memref<4x484xf32, #tpu.memory_space<vmem>>, vector<4x346xf32>
    %c116 = arith.constant 116 : index
    %c0_127 = arith.constant 0 : index
    %109 = vector.load %arg6[%c116, %c0_127] : memref<196x346xf32, #tpu.memory_space<vmem>>, vector<4x346xf32>
    tpu.vector_store %arg6[%c116, %c0_127], %108 {strides = array<i32>} : memref<196x346xf32, #tpu.memory_space<vmem>>, vector<4x346xf32>,
    %c0_128 = arith.constant 0 : index
    %c90 = arith.constant 90 : index
    %110 = vector.load %arg5[%c0_128, %c90] : memref<4x484xf32, #tpu.memory_space<vmem>>, vector<4x346xf32>
    %c120 = arith.constant 120 : index
    %c0_129 = arith.constant 0 : index
    %111 = vector.load %arg6[%c120, %c0_129] : memref<196x346xf32, #tpu.memory_space<vmem>>, vector<4x346xf32>
    tpu.vector_store %arg6[%c120, %c0_129], %110 {strides = array<i32>} : memref<196x346xf32, #tpu.memory_space<vmem>>, vector<4x346xf32>,
    %c0_130 = arith.constant 0 : index
    %c91_131 = arith.constant 91 : index
    %112 = vector.load %arg5[%c0_130, %c91_131] : memref<4x484xf32, #tpu.memory_space<vmem>>, vector<4x346xf32>
    %c124 = arith.constant 124 : index
    %c0_132 = arith.constant 0 : index
    %113 = vector.load %arg6[%c124, %c0_132] : memref<196x346xf32, #tpu.memory_space<vmem>>, vector<4x346xf32>
    tpu.vector_store %arg6[%c124, %c0_132], %112 {strides = array<i32>} : memref<196x346xf32, #tpu.memory_space<vmem>>, vector<4x346xf32>,
    %c0_133 = arith.constant 0 : index
    %c92_134 = arith.constant 92 : index
    %114 = vector.load %arg5[%c0_133, %c92_134] : memref<4x484xf32, #tpu.memory_space<vmem>>, vector<4x346xf32>
    %c128_135 = arith.constant 128 : index
    %c0_136 = arith.constant 0 : index
    %115 = vector.load %arg6[%c128_135, %c0_136] : memref<196x346xf32, #tpu.memory_space<vmem>>, vector<4x346xf32>
    tpu.vector_store %arg6[%c128_135, %c0_136], %114 {strides = array<i32>} : memref<196x346xf32, #tpu.memory_space<vmem>>, vector<4x346xf32>,
    %c0_137 = arith.constant 0 : index
    %c93 = arith.constant 93 : index
    %116 = vector.load %arg5[%c0_137, %c93] : memref<4x484xf32, #tpu.memory_space<vmem>>, vector<4x346xf32>
    %c132 = arith.constant 132 : index
    %c0_138 = arith.constant 0 : index
    %117 = vector.load %arg6[%c132, %c0_138] : memref<196x346xf32, #tpu.memory_space<vmem>>, vector<4x346xf32>
    tpu.vector_store %arg6[%c132, %c0_138], %116 {strides = array<i32>} : memref<196x346xf32, #tpu.memory_space<vmem>>, vector<4x346xf32>,
    %c0_139 = arith.constant 0 : index
    %c94 = arith.constant 94 : index
    %118 = vector.load %arg5[%c0_139, %c94] : memref<4x484xf32, #tpu.memory_space<vmem>>, vector<4x346xf32>
    %c136 = arith.constant 136 : index
    %c0_140 = arith.constant 0 : index
    %119 = vector.load %arg6[%c136, %c0_140] : memref<196x346xf32, #tpu.memory_space<vmem>>, vector<4x346xf32>
    tpu.vector_store %arg6[%c136, %c0_140], %118 {strides = array<i32>} : memref<196x346xf32, #tpu.memory_space<vmem>>, vector<4x346xf32>,
    %c0_141 = arith.constant 0 : index
    %c110 = arith.constant 110 : index
    %120 = vector.load %arg5[%c0_141, %c110] : memref<4x484xf32, #tpu.memory_space<vmem>>, vector<4x346xf32>
    %c140 = arith.constant 140 : index
    %c0_142 = arith.constant 0 : index
    %121 = vector.load %arg6[%c140, %c0_142] : memref<196x346xf32, #tpu.memory_space<vmem>>, vector<4x346xf32>
    tpu.vector_store %arg6[%c140, %c0_142], %120 {strides = array<i32>} : memref<196x346xf32, #tpu.memory_space<vmem>>, vector<4x346xf32>,
    %c0_143 = arith.constant 0 : index
    %c111 = arith.constant 111 : index
    %122 = vector.load %arg5[%c0_143, %c111] : memref<4x484xf32, #tpu.memory_space<vmem>>, vector<4x346xf32>
    %c144_144 = arith.constant 144 : index
    %c0_145 = arith.constant 0 : index
    %123 = vector.load %arg6[%c144_144, %c0_145] : memref<196x346xf32, #tpu.memory_space<vmem>>, vector<4x346xf32>
    tpu.vector_store %arg6[%c144_144, %c0_145], %122 {strides = array<i32>} : memref<196x346xf32, #tpu.memory_space<vmem>>, vector<4x346xf32>,
    %c0_146 = arith.constant 0 : index
    %c112_147 = arith.constant 112 : index
    %124 = vector.load %arg5[%c0_146, %c112_147] : memref<4x484xf32, #tpu.memory_space<vmem>>, vector<4x346xf32>
    %c148 = arith.constant 148 : index
    %c0_148 = arith.constant 0 : index
    %125 = vector.load %arg6[%c148, %c0_148] : memref<196x346xf32, #tpu.memory_space<vmem>>, vector<4x346xf32>
    tpu.vector_store %arg6[%c148, %c0_148], %124 {strides = array<i32>} : memref<196x346xf32, #tpu.memory_space<vmem>>, vector<4x346xf32>,
    %c0_149 = arith.constant 0 : index
    %c113_150 = arith.constant 113 : index
    %126 = vector.load %arg5[%c0_149, %c113_150] : memref<4x484xf32, #tpu.memory_space<vmem>>, vector<4x346xf32>
    %c152 = arith.constant 152 : index
    %c0_151 = arith.constant 0 : index
    %127 = vector.load %arg6[%c152, %c0_151] : memref<196x346xf32, #tpu.memory_space<vmem>>, vector<4x346xf32>
    tpu.vector_store %arg6[%c152, %c0_151], %126 {strides = array<i32>} : memref<196x346xf32, #tpu.memory_space<vmem>>, vector<4x346xf32>,
    %c0_152 = arith.constant 0 : index
    %c114 = arith.constant 114 : index
    %128 = vector.load %arg5[%c0_152, %c114] : memref<4x484xf32, #tpu.memory_space<vmem>>, vector<4x346xf32>
    %c156 = arith.constant 156 : index
    %c0_153 = arith.constant 0 : index
    %129 = vector.load %arg6[%c156, %c0_153] : memref<196x346xf32, #tpu.memory_space<vmem>>, vector<4x346xf32>
    tpu.vector_store %arg6[%c156, %c0_153], %128 {strides = array<i32>} : memref<196x346xf32, #tpu.memory_space<vmem>>, vector<4x346xf32>,
    %c0_154 = arith.constant 0 : index
    %c115 = arith.constant 115 : index
    %130 = vector.load %arg5[%c0_154, %c115] : memref<4x484xf32, #tpu.memory_space<vmem>>, vector<4x346xf32>
    %c160_155 = arith.constant 160 : index
    %c0_156 = arith.constant 0 : index
    %131 = vector.load %arg6[%c160_155, %c0_156] : memref<196x346xf32, #tpu.memory_space<vmem>>, vector<4x346xf32>
    tpu.vector_store %arg6[%c160_155, %c0_156], %130 {strides = array<i32>} : memref<196x346xf32, #tpu.memory_space<vmem>>, vector<4x346xf32>,
    %c0_157 = arith.constant 0 : index
    %c116_158 = arith.constant 116 : index
    %132 = vector.load %arg5[%c0_157, %c116_158] : memref<4x484xf32, #tpu.memory_space<vmem>>, vector<4x346xf32>
    %c164 = arith.constant 164 : index
    %c0_159 = arith.constant 0 : index
    %133 = vector.load %arg6[%c164, %c0_159] : memref<196x346xf32, #tpu.memory_space<vmem>>, vector<4x346xf32>
    tpu.vector_store %arg6[%c164, %c0_159], %132 {strides = array<i32>} : memref<196x346xf32, #tpu.memory_space<vmem>>, vector<4x346xf32>,
    %c0_160 = arith.constant 0 : index
    %c132_161 = arith.constant 132 : index
    %134 = vector.load %arg5[%c0_160, %c132_161] : memref<4x484xf32, #tpu.memory_space<vmem>>, vector<4x346xf32>
    %c168 = arith.constant 168 : index
    %c0_162 = arith.constant 0 : index
    %135 = vector.load %arg6[%c168, %c0_162] : memref<196x346xf32, #tpu.memory_space<vmem>>, vector<4x346xf32>
    tpu.vector_store %arg6[%c168, %c0_162], %134 {strides = array<i32>} : memref<196x346xf32, #tpu.memory_space<vmem>>, vector<4x346xf32>,
    %c0_163 = arith.constant 0 : index
    %c133 = arith.constant 133 : index
    %136 = vector.load %arg5[%c0_163, %c133] : memref<4x484xf32, #tpu.memory_space<vmem>>, vector<4x346xf32>
    %c172 = arith.constant 172 : index
    %c0_164 = arith.constant 0 : index
    %137 = vector.load %arg6[%c172, %c0_164] : memref<196x346xf32, #tpu.memory_space<vmem>>, vector<4x346xf32>
    tpu.vector_store %arg6[%c172, %c0_164], %136 {strides = array<i32>} : memref<196x346xf32, #tpu.memory_space<vmem>>, vector<4x346xf32>,
    %c0_165 = arith.constant 0 : index
    %c134 = arith.constant 134 : index
    %138 = vector.load %arg5[%c0_165, %c134] : memref<4x484xf32, #tpu.memory_space<vmem>>, vector<4x346xf32>
    %c176_166 = arith.constant 176 : index
    %c0_167 = arith.constant 0 : index
    %139 = vector.load %arg6[%c176_166, %c0_167] : memref<196x346xf32, #tpu.memory_space<vmem>>, vector<4x346xf32>
    tpu.vector_store %arg6[%c176_166, %c0_167], %138 {strides = array<i32>} : memref<196x346xf32, #tpu.memory_space<vmem>>, vector<4x346xf32>,
    %c0_168 = arith.constant 0 : index
    %c135_169 = arith.constant 135 : index
    %140 = vector.load %arg5[%c0_168, %c135_169] : memref<4x484xf32, #tpu.memory_space<vmem>>, vector<4x346xf32>
    %c180 = arith.constant 180 : index
    %c0_170 = arith.constant 0 : index
    %141 = vector.load %arg6[%c180, %c0_170] : memref<196x346xf32, #tpu.memory_space<vmem>>, vector<4x346xf32>
    tpu.vector_store %arg6[%c180, %c0_170], %140 {strides = array<i32>} : memref<196x346xf32, #tpu.memory_space<vmem>>, vector<4x346xf32>,
    %c0_171 = arith.constant 0 : index
    %c136_172 = arith.constant 136 : index
    %142 = vector.load %arg5[%c0_171, %c136_172] : memref<4x484xf32, #tpu.memory_space<vmem>>, vector<4x346xf32>
    %c184 = arith.constant 184 : index
    %c0_173 = arith.constant 0 : index
    %143 = vector.load %arg6[%c184, %c0_173] : memref<196x346xf32, #tpu.memory_space<vmem>>, vector<4x346xf32>
    tpu.vector_store %arg6[%c184, %c0_173], %142 {strides = array<i32>} : memref<196x346xf32, #tpu.memory_space<vmem>>, vector<4x346xf32>,
    %c0_174 = arith.constant 0 : index
    %c137 = arith.constant 137 : index
    %144 = vector.load %arg5[%c0_174, %c137] : memref<4x484xf32, #tpu.memory_space<vmem>>, vector<4x346xf32>
    %c188 = arith.constant 188 : index
    %c0_175 = arith.constant 0 : index
    %145 = vector.load %arg6[%c188, %c0_175] : memref<196x346xf32, #tpu.memory_space<vmem>>, vector<4x346xf32>
    tpu.vector_store %arg6[%c188, %c0_175], %144 {strides = array<i32>} : memref<196x346xf32, #tpu.memory_space<vmem>>, vector<4x346xf32>,
    %c0_176 = arith.constant 0 : index
    %c138 = arith.constant 138 : index
    %146 = vector.load %arg5[%c0_176, %c138] : memref<4x484xf32, #tpu.memory_space<vmem>>, vector<4x346xf32>
    %c192_177 = arith.constant 192 : index
    %c0_178 = arith.constant 0 : index
    %147 = vector.load %arg6[%c192_177, %c0_178] : memref<196x346xf32, #tpu.memory_space<vmem>>, vector<4x346xf32>
    tpu.vector_store %arg6[%c192_177, %c0_178], %146 {strides = array<i32>} : memref<196x346xf32, #tpu.memory_space<vmem>>, vector<4x346xf32>,
    %c0_179 = arith.constant 0 : index
    %c0_180 = arith.constant 0 : index
    %148 = vector.load %arg2[%c0_179, %c0_180] : memref<4x196xf32, #tpu.memory_space<vmem>>, vector<4x196xf32>
    %c0_181 = arith.constant 0 : index
    %c0_182 = arith.constant 0 : index
    %149 = vector.load %arg6[%c0_181, %c0_182] : memref<196x346xf32, #tpu.memory_space<vmem>>, vector<196x346xf32>
    %cst_183 = arith.constant dense<0.000000e+00> : vector<4x346xf32>
    %150 = tpu.matmul %148, %149, %cst_183 {dimension_numbers = #tpu.dot_dimension_numbers<[1], [0], [0], [1], [0, 0, 1, 1], [], []>} : vector<4x196xf32>, vector<196x346xf32>, vector<4x346xf32> -> vector<4x346xf32>
    %c0_184 = arith.constant 0 : index
    %c0_185 = arith.constant 0 : index
    %151 = vector.load %arg3[%c0_184, %c0_185] : memref<4x1xf32, #tpu.memory_space<vmem>>, vector<4x1xf32>
    %152 = vector.broadcast %151 : vector<4x1xf32> to vector<4x346xf32>
    %153 = arith.addf %150, %152 : vector<4x346xf32>
    %cst_186 = arith.constant dense<0xFF800000> : vector<346xf32>
    %154 = vector.multi_reduction <maximumf>, %153, %cst_186 [0] : vector<4x346xf32> to vector<346xf32>
    %155 = vector.shape_cast %154 : vector<346xf32> to vector<1x346xf32>
    %156 = vector.broadcast %155 : vector<1x346xf32> to vector<4x346xf32>
    %157 = arith.subf %153, %156 : vector<4x346xf32>
    %158 = math.exp %157 : vector<4x346xf32>
    %cst_187 = arith.constant dense<0.000000e+00> : vector<346xf32>
    %159 = vector.multi_reduction <add>, %158, %cst_187 [0] : vector<4x346xf32> to vector<346xf32>
    %160 = vector.shape_cast %159 : vector<346xf32> to vector<1x346xf32>
    %161 = vector.broadcast %160 : vector<1x346xf32> to vector<4x346xf32>
    %162 = arith.divf %158, %161 : vector<4x346xf32>
    %163 = vector.extract_strided_slice %162 {offsets = [0, 0], sizes = [4, 16], strides = [1, 1]} : vector<4x346xf32> to vector<4x16xf32>
    %c0_188 = arith.constant 0 : index
    %c0_189 = arith.constant 0 : index
    %c0_190 = arith.constant 0 : index
    %164 = vector.load %arg4[%c0_188, %c0_189, %c0_190] : memref<2x4x256xf32, #tpu.memory_space<vmem>>, vector<1x4x16xf32>
    %165 = vector.shape_cast %164 : vector<1x4x16xf32> to vector<4x16xf32>
    %166 = vector.shape_cast %163 : vector<4x16xf32> to vector<1x4x16xf32>
    tpu.vector_store %arg4[%c0_188, %c0_189, %c0_190], %166 {strides = array<i32>} : memref<2x4x256xf32, #tpu.memory_space<vmem>>, vector<1x4x16xf32>,
    %167 = vector.extract_strided_slice %162 {offsets = [0, 22], sizes = [4, 16], strides = [1, 1]} : vector<4x346xf32> to vector<4x16xf32>
    %c0_191 = arith.constant 0 : index
    %c0_192 = arith.constant 0 : index
    %c16_193 = arith.constant 16 : index
    %168 = vector.load %arg4[%c0_191, %c0_192, %c16_193] : memref<2x4x256xf32, #tpu.memory_space<vmem>>, vector<1x4x16xf32>
    %169 = vector.shape_cast %168 : vector<1x4x16xf32> to vector<4x16xf32>
    %170 = vector.shape_cast %167 : vector<4x16xf32> to vector<1x4x16xf32>
    tpu.vector_store %arg4[%c0_191, %c0_192, %c16_193], %170 {strides = array<i32>} : memref<2x4x256xf32, #tpu.memory_space<vmem>>, vector<1x4x16xf32>,
    %171 = vector.extract_strided_slice %162 {offsets = [0, 44], sizes = [4, 16], strides = [1, 1]} : vector<4x346xf32> to vector<4x16xf32>
    %c0_194 = arith.constant 0 : index
    %c0_195 = arith.constant 0 : index
    %c32_196 = arith.constant 32 : index
    %172 = vector.load %arg4[%c0_194, %c0_195, %c32_196] : memref<2x4x256xf32, #tpu.memory_space<vmem>>, vector<1x4x16xf32>
    %173 = vector.shape_cast %172 : vector<1x4x16xf32> to vector<4x16xf32>
    %174 = vector.shape_cast %171 : vector<4x16xf32> to vector<1x4x16xf32>
    tpu.vector_store %arg4[%c0_194, %c0_195, %c32_196], %174 {strides = array<i32>} : memref<2x4x256xf32, #tpu.memory_space<vmem>>, vector<1x4x16xf32>,
    %175 = vector.extract_strided_slice %162 {offsets = [0, 66], sizes = [4, 16], strides = [1, 1]} : vector<4x346xf32> to vector<4x16xf32>
    %c0_197 = arith.constant 0 : index
    %c0_198 = arith.constant 0 : index
    %c48_199 = arith.constant 48 : index
    %176 = vector.load %arg4[%c0_197, %c0_198, %c48_199] : memref<2x4x256xf32, #tpu.memory_space<vmem>>, vector<1x4x16xf32>
    %177 = vector.shape_cast %176 : vector<1x4x16xf32> to vector<4x16xf32>
    %178 = vector.shape_cast %175 : vector<4x16xf32> to vector<1x4x16xf32>
    tpu.vector_store %arg4[%c0_197, %c0_198, %c48_199], %178 {strides = array<i32>} : memref<2x4x256xf32, #tpu.memory_space<vmem>>, vector<1x4x16xf32>,
    %179 = vector.extract_strided_slice %162 {offsets = [0, 88], sizes = [4, 16], strides = [1, 1]} : vector<4x346xf32> to vector<4x16xf32>
    %c0_200 = arith.constant 0 : index
    %c0_201 = arith.constant 0 : index
    %c64_202 = arith.constant 64 : index
    %180 = vector.load %arg4[%c0_200, %c0_201, %c64_202] : memref<2x4x256xf32, #tpu.memory_space<vmem>>, vector<1x4x16xf32>
    %181 = vector.shape_cast %180 : vector<1x4x16xf32> to vector<4x16xf32>
    %182 = vector.shape_cast %179 : vector<4x16xf32> to vector<1x4x16xf32>
    tpu.vector_store %arg4[%c0_200, %c0_201, %c64_202], %182 {strides = array<i32>} : memref<2x4x256xf32, #tpu.memory_space<vmem>>, vector<1x4x16xf32>,
    %183 = vector.extract_strided_slice %162 {offsets = [0, 110], sizes = [4, 16], strides = [1, 1]} : vector<4x346xf32> to vector<4x16xf32>
    %c0_203 = arith.constant 0 : index
    %c0_204 = arith.constant 0 : index
    %c80_205 = arith.constant 80 : index
    %184 = vector.load %arg4[%c0_203, %c0_204, %c80_205] : memref<2x4x256xf32, #tpu.memory_space<vmem>>, vector<1x4x16xf32>
    %185 = vector.shape_cast %184 : vector<1x4x16xf32> to vector<4x16xf32>
    %186 = vector.shape_cast %183 : vector<4x16xf32> to vector<1x4x16xf32>
    tpu.vector_store %arg4[%c0_203, %c0_204, %c80_205], %186 {strides = array<i32>} : memref<2x4x256xf32, #tpu.memory_space<vmem>>, vector<1x4x16xf32>,
    %187 = vector.extract_strided_slice %162 {offsets = [0, 132], sizes = [4, 16], strides = [1, 1]} : vector<4x346xf32> to vector<4x16xf32>
    %c0_206 = arith.constant 0 : index
    %c0_207 = arith.constant 0 : index
    %c96_208 = arith.constant 96 : index
    %188 = vector.load %arg4[%c0_206, %c0_207, %c96_208] : memref<2x4x256xf32, #tpu.memory_space<vmem>>, vector<1x4x16xf32>
    %189 = vector.shape_cast %188 : vector<1x4x16xf32> to vector<4x16xf32>
    %190 = vector.shape_cast %187 : vector<4x16xf32> to vector<1x4x16xf32>
    tpu.vector_store %arg4[%c0_206, %c0_207, %c96_208], %190 {strides = array<i32>} : memref<2x4x256xf32, #tpu.memory_space<vmem>>, vector<1x4x16xf32>,
    %191 = vector.extract_strided_slice %162 {offsets = [0, 154], sizes = [4, 16], strides = [1, 1]} : vector<4x346xf32> to vector<4x16xf32>
    %c0_209 = arith.constant 0 : index
    %c0_210 = arith.constant 0 : index
    %c112_211 = arith.constant 112 : index
    %192 = vector.load %arg4[%c0_209, %c0_210, %c112_211] : memref<2x4x256xf32, #tpu.memory_space<vmem>>, vector<1x4x16xf32>
    %193 = vector.shape_cast %192 : vector<1x4x16xf32> to vector<4x16xf32>
    %194 = vector.shape_cast %191 : vector<4x16xf32> to vector<1x4x16xf32>
    tpu.vector_store %arg4[%c0_209, %c0_210, %c112_211], %194 {strides = array<i32>} : memref<2x4x256xf32, #tpu.memory_space<vmem>>, vector<1x4x16xf32>,
    %195 = vector.extract_strided_slice %162 {offsets = [0, 176], sizes = [4, 16], strides = [1, 1]} : vector<4x346xf32> to vector<4x16xf32>
    %c0_212 = arith.constant 0 : index
    %c0_213 = arith.constant 0 : index
    %c128_214 = arith.constant 128 : index
    %196 = vector.load %arg4[%c0_212, %c0_213, %c128_214] : memref<2x4x256xf32, #tpu.memory_space<vmem>>, vector<1x4x16xf32>
    %197 = vector.shape_cast %196 : vector<1x4x16xf32> to vector<4x16xf32>
    %198 = vector.shape_cast %195 : vector<4x16xf32> to vector<1x4x16xf32>
    tpu.vector_store %arg4[%c0_212, %c0_213, %c128_214], %198 {strides = array<i32>} : memref<2x4x256xf32, #tpu.memory_space<vmem>>, vector<1x4x16xf32>,
    %199 = vector.extract_strided_slice %162 {offsets = [0, 198], sizes = [4, 16], strides = [1, 1]} : vector<4x346xf32> to vector<4x16xf32>
    %c0_215 = arith.constant 0 : index
    %c0_216 = arith.constant 0 : index
    %c144_217 = arith.constant 144 : index
    %200 = vector.load %arg4[%c0_215, %c0_216, %c144_217] : memref<2x4x256xf32, #tpu.memory_space<vmem>>, vector<1x4x16xf32>
    %201 = vector.shape_cast %200 : vector<1x4x16xf32> to vector<4x16xf32>
    %202 = vector.shape_cast %199 : vector<4x16xf32> to vector<1x4x16xf32>
    tpu.vector_store %arg4[%c0_215, %c0_216, %c144_217], %202 {strides = array<i32>} : memref<2x4x256xf32, #tpu.memory_space<vmem>>, vector<1x4x16xf32>,
    %203 = vector.extract_strided_slice %162 {offsets = [0, 220], sizes = [4, 16], strides = [1, 1]} : vector<4x346xf32> to vector<4x16xf32>
    %c0_218 = arith.constant 0 : index
    %c0_219 = arith.constant 0 : index
    %c160_220 = arith.constant 160 : index
    %204 = vector.load %arg4[%c0_218, %c0_219, %c160_220] : memref<2x4x256xf32, #tpu.memory_space<vmem>>, vector<1x4x16xf32>
    %205 = vector.shape_cast %204 : vector<1x4x16xf32> to vector<4x16xf32>
    %206 = vector.shape_cast %203 : vector<4x16xf32> to vector<1x4x16xf32>
    tpu.vector_store %arg4[%c0_218, %c0_219, %c160_220], %206 {strides = array<i32>} : memref<2x4x256xf32, #tpu.memory_space<vmem>>, vector<1x4x16xf32>,
    %207 = vector.extract_strided_slice %162 {offsets = [0, 242], sizes = [4, 16], strides = [1, 1]} : vector<4x346xf32> to vector<4x16xf32>
    %c0_221 = arith.constant 0 : index
    %c0_222 = arith.constant 0 : index
    %c176_223 = arith.constant 176 : index
    %208 = vector.load %arg4[%c0_221, %c0_222, %c176_223] : memref<2x4x256xf32, #tpu.memory_space<vmem>>, vector<1x4x16xf32>
    %209 = vector.shape_cast %208 : vector<1x4x16xf32> to vector<4x16xf32>
    %210 = vector.shape_cast %207 : vector<4x16xf32> to vector<1x4x16xf32>
    tpu.vector_store %arg4[%c0_221, %c0_222, %c176_223], %210 {strides = array<i32>} : memref<2x4x256xf32, #tpu.memory_space<vmem>>, vector<1x4x16xf32>,
    %211 = vector.extract_strided_slice %162 {offsets = [0, 264], sizes = [4, 16], strides = [1, 1]} : vector<4x346xf32> to vector<4x16xf32>
    %c0_224 = arith.constant 0 : index
    %c0_225 = arith.constant 0 : index
    %c192_226 = arith.constant 192 : index
    %212 = vector.load %arg4[%c0_224, %c0_225, %c192_226] : memref<2x4x256xf32, #tpu.memory_space<vmem>>, vector<1x4x16xf32>
    %213 = vector.shape_cast %212 : vector<1x4x16xf32> to vector<4x16xf32>
    %214 = vector.shape_cast %211 : vector<4x16xf32> to vector<1x4x16xf32>
    tpu.vector_store %arg4[%c0_224, %c0_225, %c192_226], %214 {strides = array<i32>} : memref<2x4x256xf32, #tpu.memory_space<vmem>>, vector<1x4x16xf32>,
    %215 = vector.extract_strided_slice %162 {offsets = [0, 286], sizes = [4, 16], strides = [1, 1]} : vector<4x346xf32> to vector<4x16xf32>
    %c0_227 = arith.constant 0 : index
    %c0_228 = arith.constant 0 : index
    %c208_229 = arith.constant 208 : index
    %216 = vector.load %arg4[%c0_227, %c0_228, %c208_229] : memref<2x4x256xf32, #tpu.memory_space<vmem>>, vector<1x4x16xf32>
    %217 = vector.shape_cast %216 : vector<1x4x16xf32> to vector<4x16xf32>
    %218 = vector.shape_cast %215 : vector<4x16xf32> to vector<1x4x16xf32>
    tpu.vector_store %arg4[%c0_227, %c0_228, %c208_229], %218 {strides = array<i32>} : memref<2x4x256xf32, #tpu.memory_space<vmem>>, vector<1x4x16xf32>,
    %219 = vector.extract_strided_slice %162 {offsets = [0, 308], sizes = [4, 16], strides = [1, 1]} : vector<4x346xf32> to vector<4x16xf32>
    %c0_230 = arith.constant 0 : index
    %c0_231 = arith.constant 0 : index
    %c224_232 = arith.constant 224 : index
    %220 = vector.load %arg4[%c0_230, %c0_231, %c224_232] : memref<2x4x256xf32, #tpu.memory_space<vmem>>, vector<1x4x16xf32>
    %221 = vector.shape_cast %220 : vector<1x4x16xf32> to vector<4x16xf32>
    %222 = vector.shape_cast %219 : vector<4x16xf32> to vector<1x4x16xf32>
    tpu.vector_store %arg4[%c0_230, %c0_231, %c224_232], %222 {strides = array<i32>} : memref<2x4x256xf32, #tpu.memory_space<vmem>>, vector<1x4x16xf32>,
    %223 = vector.extract_strided_slice %162 {offsets = [0, 330], sizes = [4, 16], strides = [1, 1]} : vector<4x346xf32> to vector<4x16xf32>
    %c0_233 = arith.constant 0 : index
    %c0_234 = arith.constant 0 : index
    %c240_235 = arith.constant 240 : index
    %224 = vector.load %arg4[%c0_233, %c0_234, %c240_235] : memref<2x4x256xf32, #tpu.memory_space<vmem>>, vector<1x4x16xf32>
    %225 = vector.shape_cast %224 : vector<1x4x16xf32> to vector<4x16xf32>
    %226 = vector.shape_cast %223 : vector<4x16xf32> to vector<1x4x16xf32>
    tpu.vector_store %arg4[%c0_233, %c0_234, %c240_235], %226 {strides = array<i32>} : memref<2x4x256xf32, #tpu.memory_space<vmem>>, vector<1x4x16xf32>,
    %c1_236 = arith.constant 1 : index
    %c0_237 = arith.constant 0 : index
    %c0_238 = arith.constant 0 : index
    %227 = vector.load %arg1[%c1_236, %c0_237, %c0_238] : memref<2x4x256xf32, #tpu.memory_space<vmem>>, vector<1x4x16xf32>
    %228 = vector.shape_cast %227 : vector<1x4x16xf32> to vector<4x16xf32>
    %c0_239 = arith.constant 0 : index
    %c69_240 = arith.constant 69 : index
    %229 = vector.load %arg5[%c0_239, %c69_240] : memref<4x484xf32, #tpu.memory_space<vmem>>, vector<4x16xf32>
    tpu.vector_store %arg5[%c0_239, %c69_240], %228 {strides = array<i32>} : memref<4x484xf32, #tpu.memory_space<vmem>>, vector<4x16xf32>,
    %c1_241 = arith.constant 1 : index
    %c0_242 = arith.constant 0 : index
    %c16_243 = arith.constant 16 : index
    %230 = vector.load %arg1[%c1_241, %c0_242, %c16_243] : memref<2x4x256xf32, #tpu.memory_space<vmem>>, vector<1x4x16xf32>
    %231 = vector.shape_cast %230 : vector<1x4x16xf32> to vector<4x16xf32>
    %c0_244 = arith.constant 0 : index
    %c91_245 = arith.constant 91 : index
    %232 = vector.load %arg5[%c0_244, %c91_245] : memref<4x484xf32, #tpu.memory_space<vmem>>, vector<4x16xf32>
    tpu.vector_store %arg5[%c0_244, %c91_245], %231 {strides = array<i32>} : memref<4x484xf32, #tpu.memory_space<vmem>>, vector<4x16xf32>,
    %c1_246 = arith.constant 1 : index
    %c0_247 = arith.constant 0 : index
    %c32_248 = arith.constant 32 : index
    %233 = vector.load %arg1[%c1_246, %c0_247, %c32_248] : memref<2x4x256xf32, #tpu.memory_space<vmem>>, vector<1x4x16xf32>
    %234 = vector.shape_cast %233 : vector<1x4x16xf32> to vector<4x16xf32>
    %c0_249 = arith.constant 0 : index
    %c113_250 = arith.constant 113 : index
    %235 = vector.load %arg5[%c0_249, %c113_250] : memref<4x484xf32, #tpu.memory_space<vmem>>, vector<4x16xf32>
    tpu.vector_store %arg5[%c0_249, %c113_250], %234 {strides = array<i32>} : memref<4x484xf32, #tpu.memory_space<vmem>>, vector<4x16xf32>,
    %c1_251 = arith.constant 1 : index
    %c0_252 = arith.constant 0 : index
    %c48_253 = arith.constant 48 : index
    %236 = vector.load %arg1[%c1_251, %c0_252, %c48_253] : memref<2x4x256xf32, #tpu.memory_space<vmem>>, vector<1x4x16xf32>
    %237 = vector.shape_cast %236 : vector<1x4x16xf32> to vector<4x16xf32>
    %c0_254 = arith.constant 0 : index
    %c135_255 = arith.constant 135 : index
    %238 = vector.load %arg5[%c0_254, %c135_255] : memref<4x484xf32, #tpu.memory_space<vmem>>, vector<4x16xf32>
    tpu.vector_store %arg5[%c0_254, %c135_255], %237 {strides = array<i32>} : memref<4x484xf32, #tpu.memory_space<vmem>>, vector<4x16xf32>,
    %c1_256 = arith.constant 1 : index
    %c0_257 = arith.constant 0 : index
    %c64_258 = arith.constant 64 : index
    %239 = vector.load %arg1[%c1_256, %c0_257, %c64_258] : memref<2x4x256xf32, #tpu.memory_space<vmem>>, vector<1x4x16xf32>
    %240 = vector.shape_cast %239 : vector<1x4x16xf32> to vector<4x16xf32>
    %c0_259 = arith.constant 0 : index
    %c157_260 = arith.constant 157 : index
    %241 = vector.load %arg5[%c0_259, %c157_260] : memref<4x484xf32, #tpu.memory_space<vmem>>, vector<4x16xf32>
    tpu.vector_store %arg5[%c0_259, %c157_260], %240 {strides = array<i32>} : memref<4x484xf32, #tpu.memory_space<vmem>>, vector<4x16xf32>,
    %c1_261 = arith.constant 1 : index
    %c0_262 = arith.constant 0 : index
    %c80_263 = arith.constant 80 : index
    %242 = vector.load %arg1[%c1_261, %c0_262, %c80_263] : memref<2x4x256xf32, #tpu.memory_space<vmem>>, vector<1x4x16xf32>
    %243 = vector.shape_cast %242 : vector<1x4x16xf32> to vector<4x16xf32>
    %c0_264 = arith.constant 0 : index
    %c179_265 = arith.constant 179 : index
    %244 = vector.load %arg5[%c0_264, %c179_265] : memref<4x484xf32, #tpu.memory_space<vmem>>, vector<4x16xf32>
    tpu.vector_store %arg5[%c0_264, %c179_265], %243 {strides = array<i32>} : memref<4x484xf32, #tpu.memory_space<vmem>>, vector<4x16xf32>,
    %c1_266 = arith.constant 1 : index
    %c0_267 = arith.constant 0 : index
    %c96_268 = arith.constant 96 : index
    %245 = vector.load %arg1[%c1_266, %c0_267, %c96_268] : memref<2x4x256xf32, #tpu.memory_space<vmem>>, vector<1x4x16xf32>
    %246 = vector.shape_cast %245 : vector<1x4x16xf32> to vector<4x16xf32>
    %c0_269 = arith.constant 0 : index
    %c201_270 = arith.constant 201 : index
    %247 = vector.load %arg5[%c0_269, %c201_270] : memref<4x484xf32, #tpu.memory_space<vmem>>, vector<4x16xf32>
    tpu.vector_store %arg5[%c0_269, %c201_270], %246 {strides = array<i32>} : memref<4x484xf32, #tpu.memory_space<vmem>>, vector<4x16xf32>,
    %c1_271 = arith.constant 1 : index
    %c0_272 = arith.constant 0 : index
    %c112_273 = arith.constant 112 : index
    %248 = vector.load %arg1[%c1_271, %c0_272, %c112_273] : memref<2x4x256xf32, #tpu.memory_space<vmem>>, vector<1x4x16xf32>
    %249 = vector.shape_cast %248 : vector<1x4x16xf32> to vector<4x16xf32>
    %c0_274 = arith.constant 0 : index
    %c223_275 = arith.constant 223 : index
    %250 = vector.load %arg5[%c0_274, %c223_275] : memref<4x484xf32, #tpu.memory_space<vmem>>, vector<4x16xf32>
    tpu.vector_store %arg5[%c0_274, %c223_275], %249 {strides = array<i32>} : memref<4x484xf32, #tpu.memory_space<vmem>>, vector<4x16xf32>,
    %c1_276 = arith.constant 1 : index
    %c0_277 = arith.constant 0 : index
    %c128_278 = arith.constant 128 : index
    %251 = vector.load %arg1[%c1_276, %c0_277, %c128_278] : memref<2x4x256xf32, #tpu.memory_space<vmem>>, vector<1x4x16xf32>
    %252 = vector.shape_cast %251 : vector<1x4x16xf32> to vector<4x16xf32>
    %c0_279 = arith.constant 0 : index
    %c245_280 = arith.constant 245 : index
    %253 = vector.load %arg5[%c0_279, %c245_280] : memref<4x484xf32, #tpu.memory_space<vmem>>, vector<4x16xf32>
    tpu.vector_store %arg5[%c0_279, %c245_280], %252 {strides = array<i32>} : memref<4x484xf32, #tpu.memory_space<vmem>>, vector<4x16xf32>,
    %c1_281 = arith.constant 1 : index
    %c0_282 = arith.constant 0 : index
    %c144_283 = arith.constant 144 : index
    %254 = vector.load %arg1[%c1_281, %c0_282, %c144_283] : memref<2x4x256xf32, #tpu.memory_space<vmem>>, vector<1x4x16xf32>
    %255 = vector.shape_cast %254 : vector<1x4x16xf32> to vector<4x16xf32>
    %c0_284 = arith.constant 0 : index
    %c267_285 = arith.constant 267 : index
    %256 = vector.load %arg5[%c0_284, %c267_285] : memref<4x484xf32, #tpu.memory_space<vmem>>, vector<4x16xf32>
    tpu.vector_store %arg5[%c0_284, %c267_285], %255 {strides = array<i32>} : memref<4x484xf32, #tpu.memory_space<vmem>>, vector<4x16xf32>,
    %c1_286 = arith.constant 1 : index
    %c0_287 = arith.constant 0 : index
    %c160_288 = arith.constant 160 : index
    %257 = vector.load %arg1[%c1_286, %c0_287, %c160_288] : memref<2x4x256xf32, #tpu.memory_space<vmem>>, vector<1x4x16xf32>
    %258 = vector.shape_cast %257 : vector<1x4x16xf32> to vector<4x16xf32>
    %c0_289 = arith.constant 0 : index
    %c289_290 = arith.constant 289 : index
    %259 = vector.load %arg5[%c0_289, %c289_290] : memref<4x484xf32, #tpu.memory_space<vmem>>, vector<4x16xf32>
    tpu.vector_store %arg5[%c0_289, %c289_290], %258 {strides = array<i32>} : memref<4x484xf32, #tpu.memory_space<vmem>>, vector<4x16xf32>,
    %c1_291 = arith.constant 1 : index
    %c0_292 = arith.constant 0 : index
    %c176_293 = arith.constant 176 : index
    %260 = vector.load %arg1[%c1_291, %c0_292, %c176_293] : memref<2x4x256xf32, #tpu.memory_space<vmem>>, vector<1x4x16xf32>
    %261 = vector.shape_cast %260 : vector<1x4x16xf32> to vector<4x16xf32>
    %c0_294 = arith.constant 0 : index
    %c311_295 = arith.constant 311 : index
    %262 = vector.load %arg5[%c0_294, %c311_295] : memref<4x484xf32, #tpu.memory_space<vmem>>, vector<4x16xf32>
    tpu.vector_store %arg5[%c0_294, %c311_295], %261 {strides = array<i32>} : memref<4x484xf32, #tpu.memory_space<vmem>>, vector<4x16xf32>,
    %c1_296 = arith.constant 1 : index
    %c0_297 = arith.constant 0 : index
    %c192_298 = arith.constant 192 : index
    %263 = vector.load %arg1[%c1_296, %c0_297, %c192_298] : memref<2x4x256xf32, #tpu.memory_space<vmem>>, vector<1x4x16xf32>
    %264 = vector.shape_cast %263 : vector<1x4x16xf32> to vector<4x16xf32>
    %c0_299 = arith.constant 0 : index
    %c333_300 = arith.constant 333 : index
    %265 = vector.load %arg5[%c0_299, %c333_300] : memref<4x484xf32, #tpu.memory_space<vmem>>, vector<4x16xf32>
    tpu.vector_store %arg5[%c0_299, %c333_300], %264 {strides = array<i32>} : memref<4x484xf32, #tpu.memory_space<vmem>>, vector<4x16xf32>,
    %c1_301 = arith.constant 1 : index
    %c0_302 = arith.constant 0 : index
    %c208_303 = arith.constant 208 : index
    %266 = vector.load %arg1[%c1_301, %c0_302, %c208_303] : memref<2x4x256xf32, #tpu.memory_space<vmem>>, vector<1x4x16xf32>
    %267 = vector.shape_cast %266 : vector<1x4x16xf32> to vector<4x16xf32>
    %c0_304 = arith.constant 0 : index
    %c355_305 = arith.constant 355 : index
    %268 = vector.load %arg5[%c0_304, %c355_305] : memref<4x484xf32, #tpu.memory_space<vmem>>, vector<4x16xf32>
    tpu.vector_store %arg5[%c0_304, %c355_305], %267 {strides = array<i32>} : memref<4x484xf32, #tpu.memory_space<vmem>>, vector<4x16xf32>,
    %c1_306 = arith.constant 1 : index
    %c0_307 = arith.constant 0 : index
    %c224_308 = arith.constant 224 : index
    %269 = vector.load %arg1[%c1_306, %c0_307, %c224_308] : memref<2x4x256xf32, #tpu.memory_space<vmem>>, vector<1x4x16xf32>
    %270 = vector.shape_cast %269 : vector<1x4x16xf32> to vector<4x16xf32>
    %c0_309 = arith.constant 0 : index
    %c377_310 = arith.constant 377 : index
    %271 = vector.load %arg5[%c0_309, %c377_310] : memref<4x484xf32, #tpu.memory_space<vmem>>, vector<4x16xf32>
    tpu.vector_store %arg5[%c0_309, %c377_310], %270 {strides = array<i32>} : memref<4x484xf32, #tpu.memory_space<vmem>>, vector<4x16xf32>,
    %c1_311 = arith.constant 1 : index
    %c0_312 = arith.constant 0 : index
    %c240_313 = arith.constant 240 : index
    %272 = vector.load %arg1[%c1_311, %c0_312, %c240_313] : memref<2x4x256xf32, #tpu.memory_space<vmem>>, vector<1x4x16xf32>
    %273 = vector.shape_cast %272 : vector<1x4x16xf32> to vector<4x16xf32>
    %c0_314 = arith.constant 0 : index
    %c399_315 = arith.constant 399 : index
    %274 = vector.load %arg5[%c0_314, %c399_315] : memref<4x484xf32, #tpu.memory_space<vmem>>, vector<4x16xf32>
    tpu.vector_store %arg5[%c0_314, %c399_315], %273 {strides = array<i32>} : memref<4x484xf32, #tpu.memory_space<vmem>>, vector<4x16xf32>,
    %c0_316 = arith.constant 0 : index
    %c0_317 = arith.constant 0 : index
    %275 = vector.load %arg5[%c0_316, %c0_317] : memref<4x484xf32, #tpu.memory_space<vmem>>, vector<4x346xf32>
    %c0_318 = arith.constant 0 : index
    %c0_319 = arith.constant 0 : index
    %276 = vector.load %arg6[%c0_318, %c0_319] : memref<196x346xf32, #tpu.memory_space<vmem>>, vector<4x346xf32>
    tpu.vector_store %arg6[%c0_318, %c0_319], %275 {strides = array<i32>} : memref<196x346xf32, #tpu.memory_space<vmem>>, vector<4x346xf32>,
    %c0_320 = arith.constant 0 : index
    %c1_321 = arith.constant 1 : index
    %277 = vector.load %arg5[%c0_320, %c1_321] : memref<4x484xf32, #tpu.memory_space<vmem>>, vector<4x346xf32>
    %c4_322 = arith.constant 4 : index
    %c0_323 = arith.constant 0 : index
    %278 = vector.load %arg6[%c4_322, %c0_323] : memref<196x346xf32, #tpu.memory_space<vmem>>, vector<4x346xf32>
    tpu.vector_store %arg6[%c4_322, %c0_323], %277 {strides = array<i32>} : memref<196x346xf32, #tpu.memory_space<vmem>>, vector<4x346xf32>,
    %c0_324 = arith.constant 0 : index
    %c2_325 = arith.constant 2 : index
    %279 = vector.load %arg5[%c0_324, %c2_325] : memref<4x484xf32, #tpu.memory_space<vmem>>, vector<4x346xf32>
    %c8_326 = arith.constant 8 : index
    %c0_327 = arith.constant 0 : index
    %280 = vector.load %arg6[%c8_326, %c0_327] : memref<196x346xf32, #tpu.memory_space<vmem>>, vector<4x346xf32>
    tpu.vector_store %arg6[%c8_326, %c0_327], %279 {strides = array<i32>} : memref<196x346xf32, #tpu.memory_space<vmem>>, vector<4x346xf32>,
    %c0_328 = arith.constant 0 : index
    %c3_329 = arith.constant 3 : index
    %281 = vector.load %arg5[%c0_328, %c3_329] : memref<4x484xf32, #tpu.memory_space<vmem>>, vector<4x346xf32>
    %c12_330 = arith.constant 12 : index
    %c0_331 = arith.constant 0 : index
    %282 = vector.load %arg6[%c12_330, %c0_331] : memref<196x346xf32, #tpu.memory_space<vmem>>, vector<4x346xf32>
    tpu.vector_store %arg6[%c12_330, %c0_331], %281 {strides = array<i32>} : memref<196x346xf32, #tpu.memory_space<vmem>>, vector<4x346xf32>,
    %c0_332 = arith.constant 0 : index
    %c4_333 = arith.constant 4 : index
    %283 = vector.load %arg5[%c0_332, %c4_333] : memref<4x484xf32, #tpu.memory_space<vmem>>, vector<4x346xf32>
    %c16_334 = arith.constant 16 : index
    %c0_335 = arith.constant 0 : index
    %284 = vector.load %arg6[%c16_334, %c0_335] : memref<196x346xf32, #tpu.memory_space<vmem>>, vector<4x346xf32>
    tpu.vector_store %arg6[%c16_334, %c0_335], %283 {strides = array<i32>} : memref<196x346xf32, #tpu.memory_space<vmem>>, vector<4x346xf32>,
    %c0_336 = arith.constant 0 : index
    %c5_337 = arith.constant 5 : index
    %285 = vector.load %arg5[%c0_336, %c5_337] : memref<4x484xf32, #tpu.memory_space<vmem>>, vector<4x346xf32>
    %c20_338 = arith.constant 20 : index
    %c0_339 = arith.constant 0 : index
    %286 = vector.load %arg6[%c20_338, %c0_339] : memref<196x346xf32, #tpu.memory_space<vmem>>, vector<4x346xf32>
    tpu.vector_store %arg6[%c20_338, %c0_339], %285 {strides = array<i32>} : memref<196x346xf32, #tpu.memory_space<vmem>>, vector<4x346xf32>,
    %c0_340 = arith.constant 0 : index
    %c6_341 = arith.constant 6 : index
    %287 = vector.load %arg5[%c0_340, %c6_341] : memref<4x484xf32, #tpu.memory_space<vmem>>, vector<4x346xf32>
    %c24_342 = arith.constant 24 : index
    %c0_343 = arith.constant 0 : index
    %288 = vector.load %arg6[%c24_342, %c0_343] : memref<196x346xf32, #tpu.memory_space<vmem>>, vector<4x346xf32>
    tpu.vector_store %arg6[%c24_342, %c0_343], %287 {strides = array<i32>} : memref<196x346xf32, #tpu.memory_space<vmem>>, vector<4x346xf32>,
    %c0_344 = arith.constant 0 : index
    %c22_345 = arith.constant 22 : index
    %289 = vector.load %arg5[%c0_344, %c22_345] : memref<4x484xf32, #tpu.memory_space<vmem>>, vector<4x346xf32>
    %c28_346 = arith.constant 28 : index
    %c0_347 = arith.constant 0 : index
    %290 = vector.load %arg6[%c28_346, %c0_347] : memref<196x346xf32, #tpu.memory_space<vmem>>, vector<4x346xf32>
    tpu.vector_store %arg6[%c28_346, %c0_347], %289 {strides = array<i32>} : memref<196x346xf32, #tpu.memory_space<vmem>>, vector<4x346xf32>,
    %c0_348 = arith.constant 0 : index
    %c23_349 = arith.constant 23 : index
    %291 = vector.load %arg5[%c0_348, %c23_349] : memref<4x484xf32, #tpu.memory_space<vmem>>, vector<4x346xf32>
    %c32_350 = arith.constant 32 : index
    %c0_351 = arith.constant 0 : index
    %292 = vector.load %arg6[%c32_350, %c0_351] : memref<196x346xf32, #tpu.memory_space<vmem>>, vector<4x346xf32>
    tpu.vector_store %arg6[%c32_350, %c0_351], %291 {strides = array<i32>} : memref<196x346xf32, #tpu.memory_space<vmem>>, vector<4x346xf32>,
    %c0_352 = arith.constant 0 : index
    %c24_353 = arith.constant 24 : index
    %293 = vector.load %arg5[%c0_352, %c24_353] : memref<4x484xf32, #tpu.memory_space<vmem>>, vector<4x346xf32>
    %c36_354 = arith.constant 36 : index
    %c0_355 = arith.constant 0 : index
    %294 = vector.load %arg6[%c36_354, %c0_355] : memref<196x346xf32, #tpu.memory_space<vmem>>, vector<4x346xf32>
    tpu.vector_store %arg6[%c36_354, %c0_355], %293 {strides = array<i32>} : memref<196x346xf32, #tpu.memory_space<vmem>>, vector<4x346xf32>,
    %c0_356 = arith.constant 0 : index
    %c25_357 = arith.constant 25 : index
    %295 = vector.load %arg5[%c0_356, %c25_357] : memref<4x484xf32, #tpu.memory_space<vmem>>, vector<4x346xf32>
    %c40_358 = arith.constant 40 : index
    %c0_359 = arith.constant 0 : index
    %296 = vector.load %arg6[%c40_358, %c0_359] : memref<196x346xf32, #tpu.memory_space<vmem>>, vector<4x346xf32>
    tpu.vector_store %arg6[%c40_358, %c0_359], %295 {strides = array<i32>} : memref<196x346xf32, #tpu.memory_space<vmem>>, vector<4x346xf32>,
    %c0_360 = arith.constant 0 : index
    %c26_361 = arith.constant 26 : index
    %297 = vector.load %arg5[%c0_360, %c26_361] : memref<4x484xf32, #tpu.memory_space<vmem>>, vector<4x346xf32>
    %c44_362 = arith.constant 44 : index
    %c0_363 = arith.constant 0 : index
    %298 = vector.load %arg6[%c44_362, %c0_363] : memref<196x346xf32, #tpu.memory_space<vmem>>, vector<4x346xf32>
    tpu.vector_store %arg6[%c44_362, %c0_363], %297 {strides = array<i32>} : memref<196x346xf32, #tpu.memory_space<vmem>>, vector<4x346xf32>,
    %c0_364 = arith.constant 0 : index
    %c27_365 = arith.constant 27 : index
    %299 = vector.load %arg5[%c0_364, %c27_365] : memref<4x484xf32, #tpu.memory_space<vmem>>, vector<4x346xf32>
    %c48_366 = arith.constant 48 : index
    %c0_367 = arith.constant 0 : index
    %300 = vector.load %arg6[%c48_366, %c0_367] : memref<196x346xf32, #tpu.memory_space<vmem>>, vector<4x346xf32>
    tpu.vector_store %arg6[%c48_366, %c0_367], %299 {strides = array<i32>} : memref<196x346xf32, #tpu.memory_space<vmem>>, vector<4x346xf32>,
    %c0_368 = arith.constant 0 : index
    %c28_369 = arith.constant 28 : index
    %301 = vector.load %arg5[%c0_368, %c28_369] : memref<4x484xf32, #tpu.memory_space<vmem>>, vector<4x346xf32>
    %c52_370 = arith.constant 52 : index
    %c0_371 = arith.constant 0 : index
    %302 = vector.load %arg6[%c52_370, %c0_371] : memref<196x346xf32, #tpu.memory_space<vmem>>, vector<4x346xf32>
    tpu.vector_store %arg6[%c52_370, %c0_371], %301 {strides = array<i32>} : memref<196x346xf32, #tpu.memory_space<vmem>>, vector<4x346xf32>,
    %c0_372 = arith.constant 0 : index
    %c44_373 = arith.constant 44 : index
    %303 = vector.load %arg5[%c0_372, %c44_373] : memref<4x484xf32, #tpu.memory_space<vmem>>, vector<4x346xf32>
    %c56_374 = arith.constant 56 : index
    %c0_375 = arith.constant 0 : index
    %304 = vector.load %arg6[%c56_374, %c0_375] : memref<196x346xf32, #tpu.memory_space<vmem>>, vector<4x346xf32>
    tpu.vector_store %arg6[%c56_374, %c0_375], %303 {strides = array<i32>} : memref<196x346xf32, #tpu.memory_space<vmem>>, vector<4x346xf32>,
    %c0_376 = arith.constant 0 : index
    %c45_377 = arith.constant 45 : index
    %305 = vector.load %arg5[%c0_376, %c45_377] : memref<4x484xf32, #tpu.memory_space<vmem>>, vector<4x346xf32>
    %c60_378 = arith.constant 60 : index
    %c0_379 = arith.constant 0 : index
    %306 = vector.load %arg6[%c60_378, %c0_379] : memref<196x346xf32, #tpu.memory_space<vmem>>, vector<4x346xf32>
    tpu.vector_store %arg6[%c60_378, %c0_379], %305 {strides = array<i32>} : memref<196x346xf32, #tpu.memory_space<vmem>>, vector<4x346xf32>,
    %c0_380 = arith.constant 0 : index
    %c46_381 = arith.constant 46 : index
    %307 = vector.load %arg5[%c0_380, %c46_381] : memref<4x484xf32, #tpu.memory_space<vmem>>, vector<4x346xf32>
    %c64_382 = arith.constant 64 : index
    %c0_383 = arith.constant 0 : index
    %308 = vector.load %arg6[%c64_382, %c0_383] : memref<196x346xf32, #tpu.memory_space<vmem>>, vector<4x346xf32>
    tpu.vector_store %arg6[%c64_382, %c0_383], %307 {strides = array<i32>} : memref<196x346xf32, #tpu.memory_space<vmem>>, vector<4x346xf32>,
    %c0_384 = arith.constant 0 : index
    %c47_385 = arith.constant 47 : index
    %309 = vector.load %arg5[%c0_384, %c47_385] : memref<4x484xf32, #tpu.memory_space<vmem>>, vector<4x346xf32>
    %c68_386 = arith.constant 68 : index
    %c0_387 = arith.constant 0 : index
    %310 = vector.load %arg6[%c68_386, %c0_387] : memref<196x346xf32, #tpu.memory_space<vmem>>, vector<4x346xf32>
    tpu.vector_store %arg6[%c68_386, %c0_387], %309 {strides = array<i32>} : memref<196x346xf32, #tpu.memory_space<vmem>>, vector<4x346xf32>,
    %c0_388 = arith.constant 0 : index
    %c48_389 = arith.constant 48 : index
    %311 = vector.load %arg5[%c0_388, %c48_389] : memref<4x484xf32, #tpu.memory_space<vmem>>, vector<4x346xf32>
    %c72_390 = arith.constant 72 : index
    %c0_391 = arith.constant 0 : index
    %312 = vector.load %arg6[%c72_390, %c0_391] : memref<196x346xf32, #tpu.memory_space<vmem>>, vector<4x346xf32>
    tpu.vector_store %arg6[%c72_390, %c0_391], %311 {strides = array<i32>} : memref<196x346xf32, #tpu.memory_space<vmem>>, vector<4x346xf32>,
    %c0_392 = arith.constant 0 : index
    %c49_393 = arith.constant 49 : index
    %313 = vector.load %arg5[%c0_392, %c49_393] : memref<4x484xf32, #tpu.memory_space<vmem>>, vector<4x346xf32>
    %c76_394 = arith.constant 76 : index
    %c0_395 = arith.constant 0 : index
    %314 = vector.load %arg6[%c76_394, %c0_395] : memref<196x346xf32, #tpu.memory_space<vmem>>, vector<4x346xf32>
    tpu.vector_store %arg6[%c76_394, %c0_395], %313 {strides = array<i32>} : memref<196x346xf32, #tpu.memory_space<vmem>>, vector<4x346xf32>,
    %c0_396 = arith.constant 0 : index
    %c50_397 = arith.constant 50 : index
    %315 = vector.load %arg5[%c0_396, %c50_397] : memref<4x484xf32, #tpu.memory_space<vmem>>, vector<4x346xf32>
    %c80_398 = arith.constant 80 : index
    %c0_399 = arith.constant 0 : index
    %316 = vector.load %arg6[%c80_398, %c0_399] : memref<196x346xf32, #tpu.memory_space<vmem>>, vector<4x346xf32>
    tpu.vector_store %arg6[%c80_398, %c0_399], %315 {strides = array<i32>} : memref<196x346xf32, #tpu.memory_space<vmem>>, vector<4x346xf32>,
    %c0_400 = arith.constant 0 : index
    %c66_401 = arith.constant 66 : index
    %317 = vector.load %arg5[%c0_400, %c66_401] : memref<4x484xf32, #tpu.memory_space<vmem>>, vector<4x346xf32>
    %c84_402 = arith.constant 84 : index
    %c0_403 = arith.constant 0 : index
    %318 = vector.load %arg6[%c84_402, %c0_403] : memref<196x346xf32, #tpu.memory_space<vmem>>, vector<4x346xf32>
    tpu.vector_store %arg6[%c84_402, %c0_403], %317 {strides = array<i32>} : memref<196x346xf32, #tpu.memory_space<vmem>>, vector<4x346xf32>,
    %c0_404 = arith.constant 0 : index
    %c67_405 = arith.constant 67 : index
    %319 = vector.load %arg5[%c0_404, %c67_405] : memref<4x484xf32, #tpu.memory_space<vmem>>, vector<4x346xf32>
    %c88_406 = arith.constant 88 : index
    %c0_407 = arith.constant 0 : index
    %320 = vector.load %arg6[%c88_406, %c0_407] : memref<196x346xf32, #tpu.memory_space<vmem>>, vector<4x346xf32>
    tpu.vector_store %arg6[%c88_406, %c0_407], %319 {strides = array<i32>} : memref<196x346xf32, #tpu.memory_space<vmem>>, vector<4x346xf32>,
    %c0_408 = arith.constant 0 : index
    %c68_409 = arith.constant 68 : index
    %321 = vector.load %arg5[%c0_408, %c68_409] : memref<4x484xf32, #tpu.memory_space<vmem>>, vector<4x346xf32>
    %c92_410 = arith.constant 92 : index
    %c0_411 = arith.constant 0 : index
    %322 = vector.load %arg6[%c92_410, %c0_411] : memref<196x346xf32, #tpu.memory_space<vmem>>, vector<4x346xf32>
    tpu.vector_store %arg6[%c92_410, %c0_411], %321 {strides = array<i32>} : memref<196x346xf32, #tpu.memory_space<vmem>>, vector<4x346xf32>,
    %c0_412 = arith.constant 0 : index
    %c69_413 = arith.constant 69 : index
    %323 = vector.load %arg5[%c0_412, %c69_413] : memref<4x484xf32, #tpu.memory_space<vmem>>, vector<4x346xf32>
    %c96_414 = arith.constant 96 : index
    %c0_415 = arith.constant 0 : index
    %324 = vector.load %arg6[%c96_414, %c0_415] : memref<196x346xf32, #tpu.memory_space<vmem>>, vector<4x346xf32>
    tpu.vector_store %arg6[%c96_414, %c0_415], %323 {strides = array<i32>} : memref<196x346xf32, #tpu.memory_space<vmem>>, vector<4x346xf32>,
    %c0_416 = arith.constant 0 : index
    %c70_417 = arith.constant 70 : index
    %325 = vector.load %arg5[%c0_416, %c70_417] : memref<4x484xf32, #tpu.memory_space<vmem>>, vector<4x346xf32>
    %c100_418 = arith.constant 100 : index
    %c0_419 = arith.constant 0 : index
    %326 = vector.load %arg6[%c100_418, %c0_419] : memref<196x346xf32, #tpu.memory_space<vmem>>, vector<4x346xf32>
    tpu.vector_store %arg6[%c100_418, %c0_419], %325 {strides = array<i32>} : memref<196x346xf32, #tpu.memory_space<vmem>>, vector<4x346xf32>,
    %c0_420 = arith.constant 0 : index
    %c71_421 = arith.constant 71 : index
    %327 = vector.load %arg5[%c0_420, %c71_421] : memref<4x484xf32, #tpu.memory_space<vmem>>, vector<4x346xf32>
    %c104_422 = arith.constant 104 : index
    %c0_423 = arith.constant 0 : index
    %328 = vector.load %arg6[%c104_422, %c0_423] : memref<196x346xf32, #tpu.memory_space<vmem>>, vector<4x346xf32>
    tpu.vector_store %arg6[%c104_422, %c0_423], %327 {strides = array<i32>} : memref<196x346xf32, #tpu.memory_space<vmem>>, vector<4x346xf32>,
    %c0_424 = arith.constant 0 : index
    %c72_425 = arith.constant 72 : index
    %329 = vector.load %arg5[%c0_424, %c72_425] : memref<4x484xf32, #tpu.memory_space<vmem>>, vector<4x346xf32>
    %c108_426 = arith.constant 108 : index
    %c0_427 = arith.constant 0 : index
    %330 = vector.load %arg6[%c108_426, %c0_427] : memref<196x346xf32, #tpu.memory_space<vmem>>, vector<4x346xf32>
    tpu.vector_store %arg6[%c108_426, %c0_427], %329 {strides = array<i32>} : memref<196x346xf32, #tpu.memory_space<vmem>>, vector<4x346xf32>,
    %c0_428 = arith.constant 0 : index
    %c88_429 = arith.constant 88 : index
    %331 = vector.load %arg5[%c0_428, %c88_429] : memref<4x484xf32, #tpu.memory_space<vmem>>, vector<4x346xf32>
    %c112_430 = arith.constant 112 : index
    %c0_431 = arith.constant 0 : index
    %332 = vector.load %arg6[%c112_430, %c0_431] : memref<196x346xf32, #tpu.memory_space<vmem>>, vector<4x346xf32>
    tpu.vector_store %arg6[%c112_430, %c0_431], %331 {strides = array<i32>} : memref<196x346xf32, #tpu.memory_space<vmem>>, vector<4x346xf32>,
    %c0_432 = arith.constant 0 : index
    %c89_433 = arith.constant 89 : index
    %333 = vector.load %arg5[%c0_432, %c89_433] : memref<4x484xf32, #tpu.memory_space<vmem>>, vector<4x346xf32>
    %c116_434 = arith.constant 116 : index
    %c0_435 = arith.constant 0 : index
    %334 = vector.load %arg6[%c116_434, %c0_435] : memref<196x346xf32, #tpu.memory_space<vmem>>, vector<4x346xf32>
    tpu.vector_store %arg6[%c116_434, %c0_435], %333 {strides = array<i32>} : memref<196x346xf32, #tpu.memory_space<vmem>>, vector<4x346xf32>,
    %c0_436 = arith.constant 0 : index
    %c90_437 = arith.constant 90 : index
    %335 = vector.load %arg5[%c0_436, %c90_437] : memref<4x484xf32, #tpu.memory_space<vmem>>, vector<4x346xf32>
    %c120_438 = arith.constant 120 : index
    %c0_439 = arith.constant 0 : index
    %336 = vector.load %arg6[%c120_438, %c0_439] : memref<196x346xf32, #tpu.memory_space<vmem>>, vector<4x346xf32>
    tpu.vector_store %arg6[%c120_438, %c0_439], %335 {strides = array<i32>} : memref<196x346xf32, #tpu.memory_space<vmem>>, vector<4x346xf32>,
    %c0_440 = arith.constant 0 : index
    %c91_441 = arith.constant 91 : index
    %337 = vector.load %arg5[%c0_440, %c91_441] : memref<4x484xf32, #tpu.memory_space<vmem>>, vector<4x346xf32>
    %c124_442 = arith.constant 124 : index
    %c0_443 = arith.constant 0 : index
    %338 = vector.load %arg6[%c124_442, %c0_443] : memref<196x346xf32, #tpu.memory_space<vmem>>, vector<4x346xf32>
    tpu.vector_store %arg6[%c124_442, %c0_443], %337 {strides = array<i32>} : memref<196x346xf32, #tpu.memory_space<vmem>>, vector<4x346xf32>,
    %c0_444 = arith.constant 0 : index
    %c92_445 = arith.constant 92 : index
    %339 = vector.load %arg5[%c0_444, %c92_445] : memref<4x484xf32, #tpu.memory_space<vmem>>, vector<4x346xf32>
    %c128_446 = arith.constant 128 : index
    %c0_447 = arith.constant 0 : index
    %340 = vector.load %arg6[%c128_446, %c0_447] : memref<196x346xf32, #tpu.memory_space<vmem>>, vector<4x346xf32>
    tpu.vector_store %arg6[%c128_446, %c0_447], %339 {strides = array<i32>} : memref<196x346xf32, #tpu.memory_space<vmem>>, vector<4x346xf32>,
    %c0_448 = arith.constant 0 : index
    %c93_449 = arith.constant 93 : index
    %341 = vector.load %arg5[%c0_448, %c93_449] : memref<4x484xf32, #tpu.memory_space<vmem>>, vector<4x346xf32>
    %c132_450 = arith.constant 132 : index
    %c0_451 = arith.constant 0 : index
    %342 = vector.load %arg6[%c132_450, %c0_451] : memref<196x346xf32, #tpu.memory_space<vmem>>, vector<4x346xf32>
    tpu.vector_store %arg6[%c132_450, %c0_451], %341 {strides = array<i32>} : memref<196x346xf32, #tpu.memory_space<vmem>>, vector<4x346xf32>,
    %c0_452 = arith.constant 0 : index
    %c94_453 = arith.constant 94 : index
    %343 = vector.load %arg5[%c0_452, %c94_453] : memref<4x484xf32, #tpu.memory_space<vmem>>, vector<4x346xf32>
    %c136_454 = arith.constant 136 : index
    %c0_455 = arith.constant 0 : index
    %344 = vector.load %arg6[%c136_454, %c0_455] : memref<196x346xf32, #tpu.memory_space<vmem>>, vector<4x346xf32>
    tpu.vector_store %arg6[%c136_454, %c0_455], %343 {strides = array<i32>} : memref<196x346xf32, #tpu.memory_space<vmem>>, vector<4x346xf32>,
    %c0_456 = arith.constant 0 : index
    %c110_457 = arith.constant 110 : index
    %345 = vector.load %arg5[%c0_456, %c110_457] : memref<4x484xf32, #tpu.memory_space<vmem>>, vector<4x346xf32>
    %c140_458 = arith.constant 140 : index
    %c0_459 = arith.constant 0 : index
    %346 = vector.load %arg6[%c140_458, %c0_459] : memref<196x346xf32, #tpu.memory_space<vmem>>, vector<4x346xf32>
    tpu.vector_store %arg6[%c140_458, %c0_459], %345 {strides = array<i32>} : memref<196x346xf32, #tpu.memory_space<vmem>>, vector<4x346xf32>,
    %c0_460 = arith.constant 0 : index
    %c111_461 = arith.constant 111 : index
    %347 = vector.load %arg5[%c0_460, %c111_461] : memref<4x484xf32, #tpu.memory_space<vmem>>, vector<4x346xf32>
    %c144_462 = arith.constant 144 : index
    %c0_463 = arith.constant 0 : index
    %348 = vector.load %arg6[%c144_462, %c0_463] : memref<196x346xf32, #tpu.memory_space<vmem>>, vector<4x346xf32>
    tpu.vector_store %arg6[%c144_462, %c0_463], %347 {strides = array<i32>} : memref<196x346xf32, #tpu.memory_space<vmem>>, vector<4x346xf32>,
    %c0_464 = arith.constant 0 : index
    %c112_465 = arith.constant 112 : index
    %349 = vector.load %arg5[%c0_464, %c112_465] : memref<4x484xf32, #tpu.memory_space<vmem>>, vector<4x346xf32>
    %c148_466 = arith.constant 148 : index
    %c0_467 = arith.constant 0 : index
    %350 = vector.load %arg6[%c148_466, %c0_467] : memref<196x346xf32, #tpu.memory_space<vmem>>, vector<4x346xf32>
    tpu.vector_store %arg6[%c148_466, %c0_467], %349 {strides = array<i32>} : memref<196x346xf32, #tpu.memory_space<vmem>>, vector<4x346xf32>,
    %c0_468 = arith.constant 0 : index
    %c113_469 = arith.constant 113 : index
    %351 = vector.load %arg5[%c0_468, %c113_469] : memref<4x484xf32, #tpu.memory_space<vmem>>, vector<4x346xf32>
    %c152_470 = arith.constant 152 : index
    %c0_471 = arith.constant 0 : index
    %352 = vector.load %arg6[%c152_470, %c0_471] : memref<196x346xf32, #tpu.memory_space<vmem>>, vector<4x346xf32>
    tpu.vector_store %arg6[%c152_470, %c0_471], %351 {strides = array<i32>} : memref<196x346xf32, #tpu.memory_space<vmem>>, vector<4x346xf32>,
    %c0_472 = arith.constant 0 : index
    %c114_473 = arith.constant 114 : index
    %353 = vector.load %arg5[%c0_472, %c114_473] : memref<4x484xf32, #tpu.memory_space<vmem>>, vector<4x346xf32>
    %c156_474 = arith.constant 156 : index
    %c0_475 = arith.constant 0 : index
    %354 = vector.load %arg6[%c156_474, %c0_475] : memref<196x346xf32, #tpu.memory_space<vmem>>, vector<4x346xf32>
    tpu.vector_store %arg6[%c156_474, %c0_475], %353 {strides = array<i32>} : memref<196x346xf32, #tpu.memory_space<vmem>>, vector<4x346xf32>,
    %c0_476 = arith.constant 0 : index
    %c115_477 = arith.constant 115 : index
    %355 = vector.load %arg5[%c0_476, %c115_477] : memref<4x484xf32, #tpu.memory_space<vmem>>, vector<4x346xf32>
    %c160_478 = arith.constant 160 : index
    %c0_479 = arith.constant 0 : index
    %356 = vector.load %arg6[%c160_478, %c0_479] : memref<196x346xf32, #tpu.memory_space<vmem>>, vector<4x346xf32>
    tpu.vector_store %arg6[%c160_478, %c0_479], %355 {strides = array<i32>} : memref<196x346xf32, #tpu.memory_space<vmem>>, vector<4x346xf32>,
    %c0_480 = arith.constant 0 : index
    %c116_481 = arith.constant 116 : index
    %357 = vector.load %arg5[%c0_480, %c116_481] : memref<4x484xf32, #tpu.memory_space<vmem>>, vector<4x346xf32>
    %c164_482 = arith.constant 164 : index
    %c0_483 = arith.constant 0 : index
    %358 = vector.load %arg6[%c164_482, %c0_483] : memref<196x346xf32, #tpu.memory_space<vmem>>, vector<4x346xf32>
    tpu.vector_store %arg6[%c164_482, %c0_483], %357 {strides = array<i32>} : memref<196x346xf32, #tpu.memory_space<vmem>>, vector<4x346xf32>,
    %c0_484 = arith.constant 0 : index
    %c132_485 = arith.constant 132 : index
    %359 = vector.load %arg5[%c0_484, %c132_485] : memref<4x484xf32, #tpu.memory_space<vmem>>, vector<4x346xf32>
    %c168_486 = arith.constant 168 : index
    %c0_487 = arith.constant 0 : index
    %360 = vector.load %arg6[%c168_486, %c0_487] : memref<196x346xf32, #tpu.memory_space<vmem>>, vector<4x346xf32>
    tpu.vector_store %arg6[%c168_486, %c0_487], %359 {strides = array<i32>} : memref<196x346xf32, #tpu.memory_space<vmem>>, vector<4x346xf32>,
    %c0_488 = arith.constant 0 : index
    %c133_489 = arith.constant 133 : index
    %361 = vector.load %arg5[%c0_488, %c133_489] : memref<4x484xf32, #tpu.memory_space<vmem>>, vector<4x346xf32>
    %c172_490 = arith.constant 172 : index
    %c0_491 = arith.constant 0 : index
    %362 = vector.load %arg6[%c172_490, %c0_491] : memref<196x346xf32, #tpu.memory_space<vmem>>, vector<4x346xf32>
    tpu.vector_store %arg6[%c172_490, %c0_491], %361 {strides = array<i32>} : memref<196x346xf32, #tpu.memory_space<vmem>>, vector<4x346xf32>,
    %c0_492 = arith.constant 0 : index
    %c134_493 = arith.constant 134 : index
    %363 = vector.load %arg5[%c0_492, %c134_493] : memref<4x484xf32, #tpu.memory_space<vmem>>, vector<4x346xf32>
    %c176_494 = arith.constant 176 : index
    %c0_495 = arith.constant 0 : index
    %364 = vector.load %arg6[%c176_494, %c0_495] : memref<196x346xf32, #tpu.memory_space<vmem>>, vector<4x346xf32>
    tpu.vector_store %arg6[%c176_494, %c0_495], %363 {strides = array<i32>} : memref<196x346xf32, #tpu.memory_space<vmem>>, vector<4x346xf32>,
    %c0_496 = arith.constant 0 : index
    %c135_497 = arith.constant 135 : index
    %365 = vector.load %arg5[%c0_496, %c135_497] : memref<4x484xf32, #tpu.memory_space<vmem>>, vector<4x346xf32>
    %c180_498 = arith.constant 180 : index
    %c0_499 = arith.constant 0 : index
    %366 = vector.load %arg6[%c180_498, %c0_499] : memref<196x346xf32, #tpu.memory_space<vmem>>, vector<4x346xf32>
    tpu.vector_store %arg6[%c180_498, %c0_499], %365 {strides = array<i32>} : memref<196x346xf32, #tpu.memory_space<vmem>>, vector<4x346xf32>,
    %c0_500 = arith.constant 0 : index
    %c136_501 = arith.constant 136 : index
    %367 = vector.load %arg5[%c0_500, %c136_501] : memref<4x484xf32, #tpu.memory_space<vmem>>, vector<4x346xf32>
    %c184_502 = arith.constant 184 : index
    %c0_503 = arith.constant 0 : index
    %368 = vector.load %arg6[%c184_502, %c0_503] : memref<196x346xf32, #tpu.memory_space<vmem>>, vector<4x346xf32>
    tpu.vector_store %arg6[%c184_502, %c0_503], %367 {strides = array<i32>} : memref<196x346xf32, #tpu.memory_space<vmem>>, vector<4x346xf32>,
    %c0_504 = arith.constant 0 : index
    %c137_505 = arith.constant 137 : index
    %369 = vector.load %arg5[%c0_504, %c137_505] : memref<4x484xf32, #tpu.memory_space<vmem>>, vector<4x346xf32>
    %c188_506 = arith.constant 188 : index
    %c0_507 = arith.constant 0 : index
    %370 = vector.load %arg6[%c188_506, %c0_507] : memref<196x346xf32, #tpu.memory_space<vmem>>, vector<4x346xf32>
    tpu.vector_store %arg6[%c188_506, %c0_507], %369 {strides = array<i32>} : memref<196x346xf32, #tpu.memory_space<vmem>>, vector<4x346xf32>,
    %c0_508 = arith.constant 0 : index
    %c138_509 = arith.constant 138 : index
    %371 = vector.load %arg5[%c0_508, %c138_509] : memref<4x484xf32, #tpu.memory_space<vmem>>, vector<4x346xf32>
    %c192_510 = arith.constant 192 : index
    %c0_511 = arith.constant 0 : index
    %372 = vector.load %arg6[%c192_510, %c0_511] : memref<196x346xf32, #tpu.memory_space<vmem>>, vector<4x346xf32>
    tpu.vector_store %arg6[%c192_510, %c0_511], %371 {strides = array<i32>} : memref<196x346xf32, #tpu.memory_space<vmem>>, vector<4x346xf32>,
    %c0_512 = arith.constant 0 : index
    %c0_513 = arith.constant 0 : index
    %373 = vector.load %arg2[%c0_512, %c0_513] : memref<4x196xf32, #tpu.memory_space<vmem>>, vector<4x196xf32>
    %c0_514 = arith.constant 0 : index
    %c0_515 = arith.constant 0 : index
    %374 = vector.load %arg6[%c0_514, %c0_515] : memref<196x346xf32, #tpu.memory_space<vmem>>, vector<196x346xf32>
    %cst_516 = arith.constant dense<0.000000e+00> : vector<4x346xf32>
    %375 = tpu.matmul %373, %374, %cst_516 {dimension_numbers = #tpu.dot_dimension_numbers<[1], [0], [0], [1], [0, 0, 1, 1], [], []>} : vector<4x196xf32>, vector<196x346xf32>, vector<4x346xf32> -> vector<4x346xf32>
    %c0_517 = arith.constant 0 : index
    %c0_518 = arith.constant 0 : index
    %376 = vector.load %arg3[%c0_517, %c0_518] : memref<4x1xf32, #tpu.memory_space<vmem>>, vector<4x1xf32>
    %377 = vector.broadcast %376 : vector<4x1xf32> to vector<4x346xf32>
    %378 = arith.addf %375, %377 : vector<4x346xf32>
    %cst_519 = arith.constant dense<0xFF800000> : vector<346xf32>
    %379 = vector.multi_reduction <maximumf>, %378, %cst_519 [0] : vector<4x346xf32> to vector<346xf32>
    %380 = vector.shape_cast %379 : vector<346xf32> to vector<1x346xf32>
    %381 = vector.broadcast %380 : vector<1x346xf32> to vector<4x346xf32>
    %382 = arith.subf %378, %381 : vector<4x346xf32>
    %383 = math.exp %382 : vector<4x346xf32>
    %cst_520 = arith.constant dense<0.000000e+00> : vector<346xf32>
    %384 = vector.multi_reduction <add>, %383, %cst_520 [0] : vector<4x346xf32> to vector<346xf32>
    %385 = vector.shape_cast %384 : vector<346xf32> to vector<1x346xf32>
    %386 = vector.broadcast %385 : vector<1x346xf32> to vector<4x346xf32>
    %387 = arith.divf %383, %386 : vector<4x346xf32>
    %388 = vector.extract_strided_slice %387 {offsets = [0, 0], sizes = [4, 16], strides = [1, 1]} : vector<4x346xf32> to vector<4x16xf32>
    %c1_521 = arith.constant 1 : index
    %c0_522 = arith.constant 0 : index
    %c0_523 = arith.constant 0 : index
    %389 = vector.load %arg4[%c1_521, %c0_522, %c0_523] : memref<2x4x256xf32, #tpu.memory_space<vmem>>, vector<1x4x16xf32>
    %390 = vector.shape_cast %389 : vector<1x4x16xf32> to vector<4x16xf32>
    %391 = vector.shape_cast %388 : vector<4x16xf32> to vector<1x4x16xf32>
    tpu.vector_store %arg4[%c1_521, %c0_522, %c0_523], %391 {strides = array<i32>} : memref<2x4x256xf32, #tpu.memory_space<vmem>>, vector<1x4x16xf32>,
    %392 = vector.extract_strided_slice %387 {offsets = [0, 22], sizes = [4, 16], strides = [1, 1]} : vector<4x346xf32> to vector<4x16xf32>
    %c1_524 = arith.constant 1 : index
    %c0_525 = arith.constant 0 : index
    %c16_526 = arith.constant 16 : index
    %393 = vector.load %arg4[%c1_524, %c0_525, %c16_526] : memref<2x4x256xf32, #tpu.memory_space<vmem>>, vector<1x4x16xf32>
    %394 = vector.shape_cast %393 : vector<1x4x16xf32> to vector<4x16xf32>
    %395 = vector.shape_cast %392 : vector<4x16xf32> to vector<1x4x16xf32>
    tpu.vector_store %arg4[%c1_524, %c0_525, %c16_526], %395 {strides = array<i32>} : memref<2x4x256xf32, #tpu.memory_space<vmem>>, vector<1x4x16xf32>,
    %396 = vector.extract_strided_slice %387 {offsets = [0, 44], sizes = [4, 16], strides = [1, 1]} : vector<4x346xf32> to vector<4x16xf32>
    %c1_527 = arith.constant 1 : index
    %c0_528 = arith.constant 0 : index
    %c32_529 = arith.constant 32 : index
    %397 = vector.load %arg4[%c1_527, %c0_528, %c32_529] : memref<2x4x256xf32, #tpu.memory_space<vmem>>, vector<1x4x16xf32>
    %398 = vector.shape_cast %397 : vector<1x4x16xf32> to vector<4x16xf32>
    %399 = vector.shape_cast %396 : vector<4x16xf32> to vector<1x4x16xf32>
    tpu.vector_store %arg4[%c1_527, %c0_528, %c32_529], %399 {strides = array<i32>} : memref<2x4x256xf32, #tpu.memory_space<vmem>>, vector<1x4x16xf32>,
    %400 = vector.extract_strided_slice %387 {offsets = [0, 66], sizes = [4, 16], strides = [1, 1]} : vector<4x346xf32> to vector<4x16xf32>
    %c1_530 = arith.constant 1 : index
    %c0_531 = arith.constant 0 : index
    %c48_532 = arith.constant 48 : index
    %401 = vector.load %arg4[%c1_530, %c0_531, %c48_532] : memref<2x4x256xf32, #tpu.memory_space<vmem>>, vector<1x4x16xf32>
    %402 = vector.shape_cast %401 : vector<1x4x16xf32> to vector<4x16xf32>
    %403 = vector.shape_cast %400 : vector<4x16xf32> to vector<1x4x16xf32>
    tpu.vector_store %arg4[%c1_530, %c0_531, %c48_532], %403 {strides = array<i32>} : memref<2x4x256xf32, #tpu.memory_space<vmem>>, vector<1x4x16xf32>,
    %404 = vector.extract_strided_slice %387 {offsets = [0, 88], sizes = [4, 16], strides = [1, 1]} : vector<4x346xf32> to vector<4x16xf32>
    %c1_533 = arith.constant 1 : index
    %c0_534 = arith.constant 0 : index
    %c64_535 = arith.constant 64 : index
    %405 = vector.load %arg4[%c1_533, %c0_534, %c64_535] : memref<2x4x256xf32, #tpu.memory_space<vmem>>, vector<1x4x16xf32>
    %406 = vector.shape_cast %405 : vector<1x4x16xf32> to vector<4x16xf32>
    %407 = vector.shape_cast %404 : vector<4x16xf32> to vector<1x4x16xf32>
    tpu.vector_store %arg4[%c1_533, %c0_534, %c64_535], %407 {strides = array<i32>} : memref<2x4x256xf32, #tpu.memory_space<vmem>>, vector<1x4x16xf32>,
    %408 = vector.extract_strided_slice %387 {offsets = [0, 110], sizes = [4, 16], strides = [1, 1]} : vector<4x346xf32> to vector<4x16xf32>
    %c1_536 = arith.constant 1 : index
    %c0_537 = arith.constant 0 : index
    %c80_538 = arith.constant 80 : index
    %409 = vector.load %arg4[%c1_536, %c0_537, %c80_538] : memref<2x4x256xf32, #tpu.memory_space<vmem>>, vector<1x4x16xf32>
    %410 = vector.shape_cast %409 : vector<1x4x16xf32> to vector<4x16xf32>
    %411 = vector.shape_cast %408 : vector<4x16xf32> to vector<1x4x16xf32>
    tpu.vector_store %arg4[%c1_536, %c0_537, %c80_538], %411 {strides = array<i32>} : memref<2x4x256xf32, #tpu.memory_space<vmem>>, vector<1x4x16xf32>,
    %412 = vector.extract_strided_slice %387 {offsets = [0, 132], sizes = [4, 16], strides = [1, 1]} : vector<4x346xf32> to vector<4x16xf32>
    %c1_539 = arith.constant 1 : index
    %c0_540 = arith.constant 0 : index
    %c96_541 = arith.constant 96 : index
    %413 = vector.load %arg4[%c1_539, %c0_540, %c96_541] : memref<2x4x256xf32, #tpu.memory_space<vmem>>, vector<1x4x16xf32>
    %414 = vector.shape_cast %413 : vector<1x4x16xf32> to vector<4x16xf32>
    %415 = vector.shape_cast %412 : vector<4x16xf32> to vector<1x4x16xf32>
    tpu.vector_store %arg4[%c1_539, %c0_540, %c96_541], %415 {strides = array<i32>} : memref<2x4x256xf32, #tpu.memory_space<vmem>>, vector<1x4x16xf32>,
    %416 = vector.extract_strided_slice %387 {offsets = [0, 154], sizes = [4, 16], strides = [1, 1]} : vector<4x346xf32> to vector<4x16xf32>
    %c1_542 = arith.constant 1 : index
    %c0_543 = arith.constant 0 : index
    %c112_544 = arith.constant 112 : index
    %417 = vector.load %arg4[%c1_542, %c0_543, %c112_544] : memref<2x4x256xf32, #tpu.memory_space<vmem>>, vector<1x4x16xf32>
    %418 = vector.shape_cast %417 : vector<1x4x16xf32> to vector<4x16xf32>
    %419 = vector.shape_cast %416 : vector<4x16xf32> to vector<1x4x16xf32>
    tpu.vector_store %arg4[%c1_542, %c0_543, %c112_544], %419 {strides = array<i32>} : memref<2x4x256xf32, #tpu.memory_space<vmem>>, vector<1x4x16xf32>,
    %420 = vector.extract_strided_slice %387 {offsets = [0, 176], sizes = [4, 16], strides = [1, 1]} : vector<4x346xf32> to vector<4x16xf32>
    %c1_545 = arith.constant 1 : index
    %c0_546 = arith.constant 0 : index
    %c128_547 = arith.constant 128 : index
    %421 = vector.load %arg4[%c1_545, %c0_546, %c128_547] : memref<2x4x256xf32, #tpu.memory_space<vmem>>, vector<1x4x16xf32>
    %422 = vector.shape_cast %421 : vector<1x4x16xf32> to vector<4x16xf32>
    %423 = vector.shape_cast %420 : vector<4x16xf32> to vector<1x4x16xf32>
    tpu.vector_store %arg4[%c1_545, %c0_546, %c128_547], %423 {strides = array<i32>} : memref<2x4x256xf32, #tpu.memory_space<vmem>>, vector<1x4x16xf32>,
    %424 = vector.extract_strided_slice %387 {offsets = [0, 198], sizes = [4, 16], strides = [1, 1]} : vector<4x346xf32> to vector<4x16xf32>
    %c1_548 = arith.constant 1 : index
    %c0_549 = arith.constant 0 : index
    %c144_550 = arith.constant 144 : index
    %425 = vector.load %arg4[%c1_548, %c0_549, %c144_550] : memref<2x4x256xf32, #tpu.memory_space<vmem>>, vector<1x4x16xf32>
    %426 = vector.shape_cast %425 : vector<1x4x16xf32> to vector<4x16xf32>
    %427 = vector.shape_cast %424 : vector<4x16xf32> to vector<1x4x16xf32>
    tpu.vector_store %arg4[%c1_548, %c0_549, %c144_550], %427 {strides = array<i32>} : memref<2x4x256xf32, #tpu.memory_space<vmem>>, vector<1x4x16xf32>,
    %428 = vector.extract_strided_slice %387 {offsets = [0, 220], sizes = [4, 16], strides = [1, 1]} : vector<4x346xf32> to vector<4x16xf32>
    %c1_551 = arith.constant 1 : index
    %c0_552 = arith.constant 0 : index
    %c160_553 = arith.constant 160 : index
    %429 = vector.load %arg4[%c1_551, %c0_552, %c160_553] : memref<2x4x256xf32, #tpu.memory_space<vmem>>, vector<1x4x16xf32>
    %430 = vector.shape_cast %429 : vector<1x4x16xf32> to vector<4x16xf32>
    %431 = vector.shape_cast %428 : vector<4x16xf32> to vector<1x4x16xf32>
    tpu.vector_store %arg4[%c1_551, %c0_552, %c160_553], %431 {strides = array<i32>} : memref<2x4x256xf32, #tpu.memory_space<vmem>>, vector<1x4x16xf32>,
    %432 = vector.extract_strided_slice %387 {offsets = [0, 242], sizes = [4, 16], strides = [1, 1]} : vector<4x346xf32> to vector<4x16xf32>
    %c1_554 = arith.constant 1 : index
    %c0_555 = arith.constant 0 : index
    %c176_556 = arith.constant 176 : index
    %433 = vector.load %arg4[%c1_554, %c0_555, %c176_556] : memref<2x4x256xf32, #tpu.memory_space<vmem>>, vector<1x4x16xf32>
    %434 = vector.shape_cast %433 : vector<1x4x16xf32> to vector<4x16xf32>
    %435 = vector.shape_cast %432 : vector<4x16xf32> to vector<1x4x16xf32>
    tpu.vector_store %arg4[%c1_554, %c0_555, %c176_556], %435 {strides = array<i32>} : memref<2x4x256xf32, #tpu.memory_space<vmem>>, vector<1x4x16xf32>,
    %436 = vector.extract_strided_slice %387 {offsets = [0, 264], sizes = [4, 16], strides = [1, 1]} : vector<4x346xf32> to vector<4x16xf32>
    %c1_557 = arith.constant 1 : index
    %c0_558 = arith.constant 0 : index
    %c192_559 = arith.constant 192 : index
    %437 = vector.load %arg4[%c1_557, %c0_558, %c192_559] : memref<2x4x256xf32, #tpu.memory_space<vmem>>, vector<1x4x16xf32>
    %438 = vector.shape_cast %437 : vector<1x4x16xf32> to vector<4x16xf32>
    %439 = vector.shape_cast %436 : vector<4x16xf32> to vector<1x4x16xf32>
    tpu.vector_store %arg4[%c1_557, %c0_558, %c192_559], %439 {strides = array<i32>} : memref<2x4x256xf32, #tpu.memory_space<vmem>>, vector<1x4x16xf32>,
    %440 = vector.extract_strided_slice %387 {offsets = [0, 286], sizes = [4, 16], strides = [1, 1]} : vector<4x346xf32> to vector<4x16xf32>
    %c1_560 = arith.constant 1 : index
    %c0_561 = arith.constant 0 : index
    %c208_562 = arith.constant 208 : index
    %441 = vector.load %arg4[%c1_560, %c0_561, %c208_562] : memref<2x4x256xf32, #tpu.memory_space<vmem>>, vector<1x4x16xf32>
    %442 = vector.shape_cast %441 : vector<1x4x16xf32> to vector<4x16xf32>
    %443 = vector.shape_cast %440 : vector<4x16xf32> to vector<1x4x16xf32>
    tpu.vector_store %arg4[%c1_560, %c0_561, %c208_562], %443 {strides = array<i32>} : memref<2x4x256xf32, #tpu.memory_space<vmem>>, vector<1x4x16xf32>,
    %444 = vector.extract_strided_slice %387 {offsets = [0, 308], sizes = [4, 16], strides = [1, 1]} : vector<4x346xf32> to vector<4x16xf32>
    %c1_563 = arith.constant 1 : index
    %c0_564 = arith.constant 0 : index
    %c224_565 = arith.constant 224 : index
    %445 = vector.load %arg4[%c1_563, %c0_564, %c224_565] : memref<2x4x256xf32, #tpu.memory_space<vmem>>, vector<1x4x16xf32>
    %446 = vector.shape_cast %445 : vector<1x4x16xf32> to vector<4x16xf32>
    %447 = vector.shape_cast %444 : vector<4x16xf32> to vector<1x4x16xf32>
    tpu.vector_store %arg4[%c1_563, %c0_564, %c224_565], %447 {strides = array<i32>} : memref<2x4x256xf32, #tpu.memory_space<vmem>>, vector<1x4x16xf32>,
    %448 = vector.extract_strided_slice %387 {offsets = [0, 330], sizes = [4, 16], strides = [1, 1]} : vector<4x346xf32> to vector<4x16xf32>
    %c1_566 = arith.constant 1 : index
    %c0_567 = arith.constant 0 : index
    %c240_568 = arith.constant 240 : index
    %449 = vector.load %arg4[%c1_566, %c0_567, %c240_568] : memref<2x4x256xf32, #tpu.memory_space<vmem>>, vector<1x4x16xf32>
    %450 = vector.shape_cast %449 : vector<1x4x16xf32> to vector<4x16xf32>
    %451 = vector.shape_cast %448 : vector<4x16xf32> to vector<1x4x16xf32>
    tpu.vector_store %arg4[%c1_566, %c0_567, %c240_568], %451 {strides = array<i32>} : memref<2x4x256xf32, #tpu.memory_space<vmem>>, vector<1x4x16xf32>,
    return
  }
  func.func @transform_0(%arg0: i32) -> (i32, i32, i32) {
    %c0_i32 = arith.constant 0 : i32
    %c0_i32_0 = arith.constant 0 : i32
    %c0_i32_1 = arith.constant 0 : i32
    %c0_i32_2 = arith.constant 0 : i32
    return %c0_i32, %c0_i32_0, %c0_i32_1 : i32, i32, i32
  }
  func.func @transform_1(%arg0: i32) -> (i32, i32) {
    %c0_i32 = arith.constant 0 : i32
    %c0_i32_0 = arith.constant 0 : i32
    %c0_i32_1 = arith.constant 0 : i32
    return %c0_i32, %c0_i32_0 : i32, i32
  }
  func.func @transform_2(%arg0: i32) -> (i32, i32) {
    %c0_i32 = arith.constant 0 : i32
    %c0_i32_0 = arith.constant 0 : i32
    %c0_i32_1 = arith.constant 0 : i32
    return %c0_i32, %c0_i32_0 : i32, i32
  }
  func.func @transform_3(%arg0: i32) -> (i32, i32, i32) {
    %c0_i32 = arith.constant 0 : i32
    %c0_i32_0 = arith.constant 0 : i32
    %c0_i32_1 = arith.constant 0 : i32
    %c0_i32_2 = arith.constant 0 : i32
    return %c0_i32, %c0_i32_0, %c0_i32_1 : i32, i32, i32
  }
}

</mosaic_0001>

<llo_original>
// kernel: _one_step.1
$region0: #{_one_step.1}
  #allocation0 [shape = 'u32[]', space=smem, size = 0x4, offset = 0x4, fixed_abs, tag = 'smem constant byte address 0x4 - core index']
  #allocation1 [shape = 'u32[144,128]{1,0:T(1,128)}', space=vmem, size = 0x12000, scoped, tag = 'internal scratch']
  #allocation2 [shape = 'f32[4,484]{1,0:T(4,128)}', space=vmem, size = 0x2000, scoped, tag = 'scratch operand']
  #allocation3 [shape = 'f32[196,346]{1,0:T(8,128)}', space=vmem, size = 0x4b000, scoped, tag = 'scratch operand']
  %s0 = inlined_call_operand.vmem [shape: f32[2,4,256], index: 0, kind: input, shape index: {}]
  %s1 = inlined_call_operand.vmem [shape: f32[4,196], index: 1, kind: input, shape index: {}]
  %s2 = inlined_call_operand.vmem [shape: f32[4,1], index: 2, kind: input, shape index: {}]
  %s3 = inlined_call_operand.vmem [shape: f32[2,4,256], index: 3, kind: output, shape index: {}]
  %s4 = sld [smem:[#allocation0]]
  $region22: #{_one_step.1} parent=0
    _
  %s6 = ssub.s32 1, %s4
  %s7 = scalar_select 0, %s6, %s4
  // Predicated region
  $region2: #{_one_step.1} parent=0 // pred_check
    _
  $region3: #{_one_step.1} parent=0 // pred_check_branch
    %9 = sbr.rel (0) target = $region5
  $region4: #{_one_step.1} parent=0 // pred_region
    _
  $region5: #{_one_step.1} parent=0 // pred_fallthru
    _
  // Predicated region
  $region6: #{_one_step.1} parent=0 // pred_check
    _
  $region7: #{_one_step.1} parent=0 // pred_check_branch
    %11 = sbr.rel (0) target = $region9
  $region8: #{_one_step.1} parent=0 // pred_region
    _
  $region9: #{_one_step.1} parent=0 // pred_fallthru
    _
  // Predicated region
  $region10: #{_one_step.1} parent=0 // pred_check
    _
  $region11: #{_one_step.1} parent=0 // pred_check_branch
    %13 = sbr.rel (0) target = $region13
  $region12: #{_one_step.1} parent=0 // pred_region
    _
  $region13: #{_one_step.1} parent=0 // pred_fallthru
    _
  %14 = vst [vmem:[#allocation2] sm:$0xff] 0.0
  %vm15 = vcmask 1043456
  %vm16 = vcmask 818180
  %vm17 = vmor %vm16, %vm15
  %18 = vst.msk [vmem:[#allocation2 + $0x8] sm:$0xff] %vm17, 0.0
  %v19 = vld [vmem:[%s0] sm:$0xf]
  %21 = vrot.lane.b32.xlu0 %v19, 69
  %v22 = vpop.permute.xlu0 %21
  %vm24 = vcmask 691752
  %25 = vst.msk [vmem:[#allocation2] sm:$0xf] %vm24, %v22
  %v26 = vld [vmem:[%s0] sm:$0xf]
  %28 = vrot.lane.b32.xlu0 %v26, 75
  %v29 = vpop.permute.xlu0 %28
  %vm31 = vcmask 872152
  %32 = vst.msk [vmem:[#allocation2] sm:$0xf] %vm31, %v29
  %v33 = vld [vmem:[%s0] sm:$0xf]
  %35 = vrot.lane.b32.xlu0 %v33, 81
  %v36 = vpop.permute.xlu0 %35
  %v37 = vrot.slane %v36, 4
  %vm38 = vcmask 662528
  %v39 = vsel %vm38, %v37, %v36
  %vm41 = vcmask 1044360
  %vm42 = vcmask 7172
  %vm43 = vmor %vm42, %vm41
  %44 = vst.msk [vmem:[#allocation2] sm:$0xff] %vm43, %v39
  %v45 = vld [vmem:[%s0] sm:$0xf]
  %47 = vrot.lane.b32.xlu0 %v45, 87
  %v48 = vpop.permute.xlu0 %47
  %vm50 = vcmask 183352
  %51 = vst.msk [vmem:[#allocation2 + $0x4] sm:$0xf] %vm50, %v48
  %v52 = vld [vmem:[%s0] sm:$0xf]
  %54 = vrot.lane.b32.xlu0 %v52, 93
  %v55 = vpop.permute.xlu0 %54
  %vm57 = vcmask 363752
  %58 = vst.msk [vmem:[#allocation2 + $0x4] sm:$0xf] %vm57, %v55
  %v59 = vld [vmem:[%s0] sm:$0xf]
  %61 = vrot.lane.b32.xlu0 %v59, 99
  %v62 = vpop.permute.xlu0 %61
  %vm64 = vcmask 544152
  %65 = vst.msk [vmem:[#allocation2 + $0x4] sm:$0xf] %vm64, %v62
  %v66 = vld [vmem:[%s0] sm:$0xf]
  %68 = vrot.lane.b32.xlu0 %v66, 105
  %v69 = vpop.permute.xlu0 %68
  %vm71 = vcmask 724552
  %72 = vst.msk [vmem:[#allocation2 + $0x4] sm:$0xf] %vm71, %v69
  %v73 = vld [vmem:[%s0] sm:$0xf]
  %75 = vrot.lane.b32.xlu0 %v73, 111
  %v76 = vpop.permute.xlu0 %75
  %vm78 = vcmask 904952
  %79 = vst.msk [vmem:[#allocation2 + $0x4] sm:$0xf] %vm78, %v76
  %v80 = vld [vmem:[%s0 + $0x4] sm:$0xf]
  %82 = vrot.lane.b32.xlu0 %v80, 117
  %v83 = vpop.permute.xlu0 %82
  %v84 = vrot.slane %v83, 4
  %vm85 = vcmask 957440
  %v86 = vsel %vm85, %v84, %v83
  %vm88 = vcmask 1044392
  %vm89 = vcmask 39940
  %vm90 = vmor %vm89, %vm88
  %91 = vst.msk [vmem:[#allocation2 + $0x4] sm:$0xff] %vm90, %v86
  %v92 = vld [vmem:[%s0 + $0x4] sm:$0xf]
  %94 = vrot.lane.b32.xlu0 %v92, 123
  %v95 = vpop.permute.xlu0 %94
  %vm97 = vcmask 216152
  %98 = vst.msk [vmem:[#allocation2 + $0x8] sm:$0xf] %vm97, %v95
  %v99 = vld [vmem:[%s0 + $0x4] sm:$0xf]
  %101 = vrot.lane.b32.xlu0 %v99, 1
  %v102 = vpop.permute.xlu0 %101
  %vm104 = vcmask 396552
  %105 = vst.msk [vmem:[#allocation2 + $0x8] sm:$0xf] %vm104, %v102
  %v106 = vld [vmem:[%s0 + $0x4] sm:$0xf]
  %108 = vrot.lane.b32.xlu0 %v106, 7
  %v109 = vpop.permute.xlu0 %108
  %vm111 = vcmask 576952
  %112 = vst.msk [vmem:[#allocation2 + $0x8] sm:$0xf] %vm111, %v109
  %v113 = vld [vmem:[%s0 + $0x4] sm:$0xf]
  %115 = vrot.lane.b32.xlu0 %v113, 13
  %v116 = vpop.permute.xlu0 %115
  %vm118 = vcmask 757352
  %119 = vst.msk [vmem:[#allocation2 + $0x8] sm:$0xf] %vm118, %v116
  %v120 = vld [vmem:[%s0 + $0x4] sm:$0xf]
  %122 = vrot.lane.b32.xlu0 %v120, 19
  %v123 = vpop.permute.xlu0 %122
  %vm125 = vcmask 937752
  %126 = vst.msk [vmem:[#allocation2 + $0x8] sm:$0xf] %vm125, %v123
  %v127 = vld [vmem:[%s0 + $0x4] sm:$0xf]
  %129 = vrot.lane.b32.xlu0 %v127, 25
  %v130 = vpop.permute.xlu0 %129
  %v131 = vrot.slane %v130, 4
  %vm132 = vcmask 203776
  %v133 = vsel %vm132, %v131, %v130
  %vm135 = vcmask 1044424
  %vm136 = vcmask 72708
  %vm137 = vmor %vm136, %vm135
  %138 = vst.msk [vmem:[#allocation2 + $0x8] sm:$0xff] %vm137, %v133
  %v139 = vld [vmem:[%s0 + $0x4] sm:$0xf]
  %141 = vrot.lane.b32.xlu0 %v139, 31
  %v142 = vpop.permute.xlu0 %141
  %vm144 = vcmask 248952
  %145 = vst.msk [vmem:[#allocation2 + $0xc] sm:$0xf] %vm144, %v142
  %v146 = vld [vmem:[#allocation2] sm:$0xff]
  %v147 = vld [vmem:[#allocation2 + $0x8] sm:$0xf]
  %v149 = vcombine.high %v146, %v146
  %151 = vst [vmem:[#allocation3] sm:$0xf] %v146
  %152 = vst [vmem:[#allocation3 + $0x8] sm:$0xf] %v149
  %vm153 = vcmask 732160
  %154 = vst.msk [vmem:[#allocation3 + $0x10] sm:$0xf] %vm153, %v147
  %v155 = vld [vmem:[#allocation2] sm:$0xff]
  %v156 = vld [vmem:[#allocation2 + $0x8] sm:$0xf]
  %v159 = vcombine.low %v155, %v155
  %v160 = vcombine.low %v156, %v156
  %161 = vrot.lane.b32.xlu0 %v159, 127
  %v162 = vpop.permute.xlu0 %161
  %163 = vrot.lane.b32.xlu0 %v155, 127
  %v164 = vpop.permute.xlu0 %163
  %165 = vrot.lane.b32.xlu0 %v160, 127
  %v166 = vpop.permute.xlu0 %165
  %vm167 = vcmask 1039360
  %v168 = vsel %vm167, %v162, %v164
  %v169 = vsel %vm167, %v164, %v166
  %173 = vst [vmem:[#allocation3] sm:$0xf0] %v168
  %174 = vst [vmem:[#allocation3 + $0x8] sm:$0xf0] %v169
  %vm175 = vcmask 736260
  %176 = vst.msk [vmem:[#allocation3 + $0x10] sm:$0xf0] %vm175, %v166
  %v177 = vld [vmem:[#allocation2] sm:$0xff]
  %v178 = vld [vmem:[#allocation2 + $0x8] sm:$0xf]
  %v181 = vcombine.high %v177, %v177
  %182 = vrot.lane.b32.xlu0 %v177, 126
  %v183 = vpop.permute.xlu0 %182
  %184 = vrot.lane.b32.xlu0 %v181, 126
  %v185 = vpop.permute.xlu0 %184
  %186 = vrot.lane.b32.xlu0 %v178, 126
  %v187 = vpop.permute.xlu0 %186
  %vm188 = vcmask 1031168
  %v189 = vsel %vm188, %v183, %v185
  %v190 = vsel %vm188, %v185, %v187
  %194 = vst [vmem:[#allocation3 + $0x18] sm:$0xf] %v189
  %195 = vst [vmem:[#allocation3 + $0x20] sm:$0xf] %v190
  %196 = vst.msk [vmem:[#allocation3 + $0x28] sm:$0xf] %vm153, %v187
  %v197 = vld [vmem:[#allocation2] sm:$0xff]
  %v198 = vld [vmem:[#allocation2 + $0x8] sm:$0xf]
  %v201 = vcombine.low %v197, %v197
  %v202 = vcombine.low %v198, %v198
  %203 = vrot.lane.b32.xlu0 %v201, 125
  %v204 = vpop.permute.xlu0 %203
  %205 = vrot.lane.b32.xlu0 %v197, 125
  %v206 = vpop.permute.xlu0 %205
  %207 = vrot.lane.b32.xlu0 %v202, 125
  %v208 = vpop.permute.xlu0 %207
  %vm209 = vcmask 1022976
  %v210 = vsel %vm209, %v204, %v206
  %v211 = vsel %vm209, %v206, %v208
  %215 = vst [vmem:[#allocation3 + $0x18] sm:$0xf0] %v210
  %216 = vst [vmem:[#allocation3 + $0x20] sm:$0xf0] %v211
  %217 = vst.msk [vmem:[#allocation3 + $0x28] sm:$0xf0] %vm175, %v208
  %v218 = vld [vmem:[#allocation2] sm:$0xff]
  %v219 = vld [vmem:[#allocation2 + $0x8] sm:$0xf]
  %v222 = vcombine.high %v218, %v218
  %223 = vrot.lane.b32.xlu0 %v218, 124
  %v224 = vpop.permute.xlu0 %223
  %225 = vrot.lane.b32.xlu0 %v222, 124
  %v226 = vpop.permute.xlu0 %225
  %227 = vrot.lane.b32.xlu0 %v219, 124
  %v228 = vpop.permute.xlu0 %227
  %vm229 = vcmask 1014784
  %v230 = vsel %vm229, %v224, %v226
  %v231 = vsel %vm229, %v226, %v228
  %235 = vst [vmem:[#allocation3 + $0x30] sm:$0xf] %v230
  %236 = vst [vmem:[#allocation3 + $0x38] sm:$0xf] %v231
  %237 = vst.msk [vmem:[#allocation3 + $0x40] sm:$0xf] %vm153, %v228
  %v238 = vld [vmem:[#allocation2] sm:$0xff]
  %v239 = vld [vmem:[#allocation2 + $0x8] sm:$0xf]
  %v242 = vcombine.low %v238, %v238
  %v243 = vcombine.low %v239, %v239
  %244 = vrot.lane.b32.xlu0 %v242, 123
  %v245 = vpop.permute.xlu0 %244
  %246 = vrot.lane.b32.xlu0 %v238, 123
  %v247 = vpop.permute.xlu0 %246
  %248 = vrot.lane.b32.xlu0 %v243, 123
  %v249 = vpop.permute.xlu0 %248
  %vm250 = vcmask 1006592
  %v251 = vsel %vm250, %v245, %v247
  %v252 = vsel %vm250, %v247, %v249
  %256 = vst [vmem:[#allocation3 + $0x30] sm:$0xf0] %v251
  %257 = vst [vmem:[#allocation3 + $0x38] sm:$0xf0] %v252
  %258 = vst.msk [vmem:[#allocation3 + $0x40] sm:$0xf0] %vm175, %v249
  %v259 = vld [vmem:[#allocation2] sm:$0xff]
  %v260 = vld [vmem:[#allocation2 + $0x8] sm:$0xf]
  %v263 = vcombine.high %v259, %v259
  %264 = vrot.lane.b32.xlu0 %v259, 122
  %v265 = vpop.permute.xlu0 %264
  %266 = vrot.lane.b32.xlu0 %v263, 122
  %v267 = vpop.permute.xlu0 %266
  %268 = vrot.lane.b32.xlu0 %v260, 122
  %v269 = vpop.permute.xlu0 %268
  %vm270 = vcmask 998400
  %v271 = vsel %vm270, %v265, %v267
  %v272 = vsel %vm270, %v267, %v269
  %276 = vst [vmem:[#allocation3 + $0x48] sm:$0xf] %v271
  %277 = vst [vmem:[#allocation3 + $0x50] sm:$0xf] %v272
  %278 = vst.msk [vmem:[#allocation3 + $0x58] sm:$0xf] %vm153, %v269
  %v279 = vld [vmem:[#allocation2] sm:$0xff]
  %v280 = vld [vmem:[#allocation2 + $0x8] sm:$0xf]
  %v283 = vcombine.low %v279, %v279
  %v284 = vcombine.low %v280, %v280
  %285 = vrot.lane.b32.xlu0 %v283, 106
  %v286 = vpop.permute.xlu0 %285
  %287 = vrot.lane.b32.xlu0 %v279, 106
  %v288 = vpop.permute.xlu0 %287
  %289 = vrot.lane.b32.xlu0 %v284, 106
  %v290 = vpop.permute.xlu0 %289
  %vm291 = vcmask 867328
  %v292 = vsel %vm291, %v286, %v288
  %v293 = vsel %vm291, %v288, %v290
  %297 = vst [vmem:[#allocation3 + $0x48] sm:$0xf0] %v292
  %298 = vst [vmem:[#allocation3 + $0x50] sm:$0xf0] %v293
  %299 = vst.msk [vmem:[#allocation3 + $0x58] sm:$0xf0] %vm175, %v290
  %v300 = vld [vmem:[#allocation2] sm:$0xff]
  %v301 = vld [vmem:[#allocation2 + $0x8] sm:$0xf]
  %v304 = vcombine.high %v300, %v300
  %305 = vrot.lane.b32.xlu0 %v300, 105
  %v306 = vpop.permute.xlu0 %305
  %307 = vrot.lane.b32.xlu0 %v304, 105
  %v308 = vpop.permute.xlu0 %307
  %309 = vrot.lane.b32.xlu0 %v301, 105
  %v310 = vpop.permute.xlu0 %309
  %vm311 = vcmask 859136
  %v312 = vsel %vm311, %v306, %v308
  %v313 = vsel %vm311, %v308, %v310
  %317 = vst [vmem:[#allocation3 + $0x60] sm:$0xf] %v312
  %318 = vst [vmem:[#allocation3 + $0x68] sm:$0xf] %v313
  %319 = vst.msk [vmem:[#allocation3 + $0x70] sm:$0xf] %vm153, %v310
  %v320 = vld [vmem:[#allocation2] sm:$0xff]
  %v321 = vld [vmem:[#allocation2 + $0x8] sm:$0xf]
  %v324 = vcombine.low %v320, %v320
  %v325 = vcombine.low %v321, %v321
  %326 = vrot.lane.b32.xlu0 %v324, 104
  %v327 = vpop.permute.xlu0 %326
  %328 = vrot.lane.b32.xlu0 %v320, 104
  %v329 = vpop.permute.xlu0 %328
  %330 = vrot.lane.b32.xlu0 %v325, 104
  %v331 = vpop.permute.xlu0 %330
  %vm332 = vcmask 850944
  %v333 = vsel %vm332, %v327, %v329
  %v334 = vsel %vm332, %v329, %v331
  %338 = vst [vmem:[#allocation3 + $0x60] sm:$0xf0] %v333
  %339 = vst [vmem:[#allocation3 + $0x68] sm:$0xf0] %v334
  %340 = vst.msk [vmem:[#allocation3 + $0x70] sm:$0xf0] %vm175, %v331
  %v341 = vld [vmem:[#allocation2] sm:$0xff]
  %v342 = vld [vmem:[#allocation2 + $0x8] sm:$0xf]
  %v345 = vcombine.high %v341, %v341
  %346 = vrot.lane.b32.xlu0 %v341, 103
  %v347 = vpop.permute.xlu0 %346
  %348 = vrot.lane.b32.xlu0 %v345, 103
  %v349 = vpop.permute.xlu0 %348
  %350 = vrot.lane.b32.xlu0 %v342, 103
  %v351 = vpop.permute.xlu0 %350
  %vm352 = vcmask 842752
  %v353 = vsel %vm352, %v347, %v349
  %v354 = vsel %vm352, %v349, %v351
  %358 = vst [vmem:[#allocation3 + $0x78] sm:$0xf] %v353
  %359 = vst [vmem:[#allocation3 + $0x80] sm:$0xf] %v354
  %360 = vst.msk [vmem:[#allocation3 + $0x88] sm:$0xf] %vm153, %v351
  %v361 = vld [vmem:[#allocation2] sm:$0xff]
  %v362 = vld [vmem:[#allocation2 + $0x8] sm:$0xf]
  %v365 = vcombine.low %v361, %v361
  %v366 = vcombine.low %v362, %v362
  %367 = vrot.lane.b32.xlu0 %v365, 102
  %v368 = vpop.permute.xlu0 %367
  %369 = vrot.lane.b32.xlu0 %v361, 102
  %v370 = vpop.permute.xlu0 %369
  %371 = vrot.lane.b32.xlu0 %v366, 102
  %v372 = vpop.permute.xlu0 %371
  %vm373 = vcmask 834560
  %v374 = vsel %vm373, %v368, %v370
  %v375 = vsel %vm373, %v370, %v372
  %379 = vst [vmem:[#allocation3 + $0x78] sm:$0xf0] %v374
  %380 = vst [vmem:[#allocation3 + $0x80] sm:$0xf0] %v375
  %381 = vst.msk [vmem:[#allocation3 + $0x88] sm:$0xf0] %vm175, %v372
  %v382 = vld [vmem:[#allocation2] sm:$0xff]
  %v383 = vld [vmem:[#allocation2 + $0x8] sm:$0xf]
  %v386 = vcombine.high %v382, %v382
  %387 = vrot.lane.b32.xlu0 %v382, 101
  %v388 = vpop.permute.xlu0 %387
  %389 = vrot.lane.b32.xlu0 %v386, 101
  %v390 = vpop.permute.xlu0 %389
  %391 = vrot.lane.b32.xlu0 %v383, 101
  %v392 = vpop.permute.xlu0 %391
  %vm393 = vcmask 826368
  %v394 = vsel %vm393, %v388, %v390
  %v395 = vsel %vm393, %v390, %v392
  %399 = vst [vmem:[#allocation3 + $0x90] sm:$0xf] %v394
  %400 = vst [vmem:[#allocation3 + $0x98] sm:$0xf] %v395
  %401 = vst.msk [vmem:[#allocation3 + $0xa0] sm:$0xf] %vm153, %v392
  %v402 = vld [vmem:[#allocation2] sm:$0xff]
  %v403 = vld [vmem:[#allocation2 + $0x8] sm:$0xf]
  %v406 = vcombine.low %v402, %v402
  %v407 = vcombine.low %v403, %v403
  %408 = vrot.lane.b32.xlu0 %v406, 100
  %v409 = vpop.permute.xlu0 %408
  %410 = vrot.lane.b32.xlu0 %v402, 100
  %v411 = vpop.permute.xlu0 %410
  %412 = vrot.lane.b32.xlu0 %v407, 100
  %v413 = vpop.permute.xlu0 %412
  %vm414 = vcmask 818176
  %v415 = vsel %vm414, %v409, %v411
  %v416 = vsel %vm414, %v411, %v413
  %420 = vst [vmem:[#allocation3 + $0x90] sm:$0xf0] %v415
  %421 = vst [vmem:[#allocation3 + $0x98] sm:$0xf0] %v416
  %422 = vst.msk [vmem:[#allocation3 + $0xa0] sm:$0xf0] %vm175, %v413
  %v423 = vld [vmem:[#allocation2] sm:$0xff]
  %v424 = vld [vmem:[#allocation2 + $0x8] sm:$0xff]
  %v427 = vcombine.high %v423, %v423
  %v428 = vcombine.high %v424, %v424
  %429 = vrot.lane.b32.xlu0 %v423, 84
  %v430 = vpop.permute.xlu0 %429
  %431 = vrot.lane.b32.xlu0 %v427, 84
  %v432 = vpop.permute.xlu0 %431
  %433 = vrot.lane.b32.xlu0 %v424, 84
  %v434 = vpop.permute.xlu0 %433
  %435 = vrot.lane.b32.xlu0 %v428, 84
  %v436 = vpop.permute.xlu0 %435
  %vm437 = vcmask 687104
  %v438 = vsel %vm437, %v430, %v432
  %v439 = vsel %vm437, %v432, %v434
  %v440 = vsel %vm437, %v434, %v436
  %444 = vst [vmem:[#allocation3 + $0xa8] sm:$0xf] %v438
  %445 = vst [vmem:[#allocation3 + $0xb0] sm:$0xf] %v439
  %446 = vst.msk [vmem:[#allocation3 + $0xb8] sm:$0xf] %vm153, %v440
  %v447 = vld [vmem:[#allocation2] sm:$0xff]
  %v448 = vld [vmem:[#allocation2 + $0x8] sm:$0xff]
  %v451 = vcombine.low %v447, %v447
  %v452 = vcombine.low %v448, %v448
  %453 = vrot.lane.b32.xlu0 %v451, 83
  %v454 = vpop.permute.xlu0 %453
  %455 = vrot.lane.b32.xlu0 %v447, 83
  %v456 = vpop.permute.xlu0 %455
  %457 = vrot.lane.b32.xlu0 %v452, 83
  %v458 = vpop.permute.xlu0 %457
  %459 = vrot.lane.b32.xlu0 %v448, 83
  %v460 = vpop.permute.xlu0 %459
  %vm461 = vcmask 678912
  %v462 = vsel %vm461, %v454, %v456
  %v463 = vsel %vm461, %v456, %v458
  %v464 = vsel %vm461, %v458, %v460
  %468 = vst [vmem:[#allocation3 + $0xa8] sm:$0xf0] %v462
  %469 = vst [vmem:[#allocation3 + $0xb0] sm:$0xf0] %v463
  %470 = vst.msk [vmem:[#allocation3 + $0xb8] sm:$0xf0] %vm175, %v464
  %v471 = vld [vmem:[#allocation2] sm:$0xff]
  %v472 = vld [vmem:[#allocation2 + $0x8] sm:$0xff]
  %v475 = vcombine.high %v471, %v471
  %v476 = vcombine.high %v472, %v472
  %477 = vrot.lane.b32.xlu0 %v471, 82
  %v478 = vpop.permute.xlu0 %477
  %479 = vrot.lane.b32.xlu0 %v475, 82
  %v480 = vpop.permute.xlu0 %479
  %481 = vrot.lane.b32.xlu0 %v472, 82
  %v482 = vpop.permute.xlu0 %481
  %483 = vrot.lane.b32.xlu0 %v476, 82
  %v484 = vpop.permute.xlu0 %483
  %vm485 = vcmask 670720
  %v486 = vsel %vm485, %v478, %v480
  %v487 = vsel %vm485, %v480, %v482
  %v488 = vsel %vm485, %v482, %v484
  %492 = vst [vmem:[#allocation3 + $0xc0] sm:$0xf] %v486
  %493 = vst [vmem:[#allocation3 + $0xc8] sm:$0xf] %v487
  %494 = vst.msk [vmem:[#allocation3 + $0xd0] sm:$0xf] %vm153, %v488
  %v495 = vld [vmem:[#allocation2] sm:$0xff]
  %v496 = vld [vmem:[#allocation2 + $0x8] sm:$0xff]
  %v499 = vcombine.low %v495, %v495
  %v500 = vcombine.low %v496, %v496
  %501 = vrot.lane.b32.xlu0 %v499, 81
  %v502 = vpop.permute.xlu0 %501
  %503 = vrot.lane.b32.xlu0 %v495, 81
  %v504 = vpop.permute.xlu0 %503
  %505 = vrot.lane.b32.xlu0 %v500, 81
  %v506 = vpop.permute.xlu0 %505
  %507 = vrot.lane.b32.xlu0 %v496, 81
  %v508 = vpop.permute.xlu0 %507
  %v509 = vsel %vm38, %v502, %v504
  %v510 = vsel %vm38, %v504, %v506
  %v511 = vsel %vm38, %v506, %v508
  %515 = vst [vmem:[#allocation3 + $0xc0] sm:$0xf0] %v509
  %516 = vst [vmem:[#allocation3 + $0xc8] sm:$0xf0] %v510
  %517 = vst.msk [vmem:[#allocation3 + $0xd0] sm:$0xf0] %vm175, %v511
  %v518 = vld [vmem:[#allocation2] sm:$0xff]
  %v519 = vld [vmem:[#allocation2 + $0x8] sm:$0xff]
  %v522 = vcombine.high %v518, %v518
  %v523 = vcombine.high %v519, %v519
  %524 = vrot.lane.b32.xlu0 %v518, 80
  %v525 = vpop.permute.xlu0 %524
  %526 = vrot.lane.b32.xlu0 %v522, 80
  %v527 = vpop.permute.xlu0 %526
  %528 = vrot.lane.b32.xlu0 %v519, 80
  %v529 = vpop.permute.xlu0 %528
  %530 = vrot.lane.b32.xlu0 %v523, 80
  %v531 = vpop.permute.xlu0 %530
  %vm532 = vcmask 654336
  %v533 = vsel %vm532, %v525, %v527
  %v534 = vsel %vm532, %v527, %v529
  %v535 = vsel %vm532, %v529, %v531
  %539 = vst [vmem:[#allocation3 + $0xd8] sm:$0xf] %v533
  %540 = vst [vmem:[#allocation3 + $0xe0] sm:$0xf] %v534
  %541 = vst.msk [vmem:[#allocation3 + $0xe8] sm:$0xf] %vm153, %v535
  %v542 = vld [vmem:[#allocation2] sm:$0xff]
  %v543 = vld [vmem:[#allocation2 + $0x8] sm:$0xff]
  %v546 = vcombine.low %v542, %v542
  %v547 = vcombine.low %v543, %v543
  %548 = vrot.lane.b32.xlu0 %v546, 79
  %v549 = vpop.permute.xlu0 %548
  %550 = vrot.lane.b32.xlu0 %v542, 79
  %v551 = vpop.permute.xlu0 %550
  %552 = vrot.lane.b32.xlu0 %v547, 79
  %v553 = vpop.permute.xlu0 %552
  %554 = vrot.lane.b32.xlu0 %v543, 79
  %v555 = vpop.permute.xlu0 %554
  %vm556 = vcmask 646144
  %v557 = vsel %vm556, %v549, %v551
  %v558 = vsel %vm556, %v551, %v553
  %v559 = vsel %vm556, %v553, %v555
  %563 = vst [vmem:[#allocation3 + $0xd8] sm:$0xf0] %v557
  %564 = vst [vmem:[#allocation3 + $0xe0] sm:$0xf0] %v558
  %565 = vst.msk [vmem:[#allocation3 + $0xe8] sm:$0xf0] %vm175, %v559
  %v566 = vld [vmem:[#allocation2] sm:$0xff]
  %v567 = vld [vmem:[#allocation2 + $0x8] sm:$0xff]
  %v570 = vcombine.high %v566, %v566
  %v571 = vcombine.high %v567, %v567
  %572 = vrot.lane.b32.xlu0 %v566, 78
  %v573 = vpop.permute.xlu0 %572
  %574 = vrot.lane.b32.xlu0 %v570, 78
  %v575 = vpop.permute.xlu0 %574
  %576 = vrot.lane.b32.xlu0 %v567, 78
  %v577 = vpop.permute.xlu0 %576
  %578 = vrot.lane.b32.xlu0 %v571, 78
  %v579 = vpop.permute.xlu0 %578
  %vm580 = vcmask 637952
  %v581 = vsel %vm580, %v573, %v575
  %v582 = vsel %vm580, %v575, %v577
  %v583 = vsel %vm580, %v577, %v579
  %587 = vst [vmem:[#allocation3 + $0xf0] sm:$0xf] %v581
  %588 = vst [vmem:[#allocation3 + $0xf8] sm:$0xf] %v582
  %589 = vst.msk [vmem:[#allocation3 + $0x100] sm:$0xf] %vm153, %v583
  %v590 = vld [vmem:[#allocation2] sm:$0xff]
  %v591 = vld [vmem:[#allocation2 + $0x8] sm:$0xff]
  %v594 = vcombine.low %v590, %v590
  %v595 = vcombine.low %v591, %v591
  %596 = vrot.lane.b32.xlu0 %v594, 62
  %v597 = vpop.permute.xlu0 %596
  %598 = vrot.lane.b32.xlu0 %v590, 62
  %v599 = vpop.permute.xlu0 %598
  %600 = vrot.lane.b32.xlu0 %v595, 62
  %v601 = vpop.permute.xlu0 %600
  %602 = vrot.lane.b32.xlu0 %v591, 62
  %v603 = vpop.permute.xlu0 %602
  %vm604 = vcmask 506880
  %v605 = vsel %vm604, %v597, %v599
  %v606 = vsel %vm604, %v599, %v601
  %v607 = vsel %vm604, %v601, %v603
  %611 = vst [vmem:[#allocation3 + $0xf0] sm:$0xf0] %v605
  %612 = vst [vmem:[#allocation3 + $0xf8] sm:$0xf0] %v606
  %613 = vst.msk [vmem:[#allocation3 + $0x100] sm:$0xf0] %vm175, %v607
  %v614 = vld [vmem:[#allocation2] sm:$0xff]
  %v615 = vld [vmem:[#allocation2 + $0x8] sm:$0xff]
  %v618 = vcombine.high %v614, %v614
  %v619 = vcombine.high %v615, %v615
  %620 = vrot.lane.b32.xlu0 %v614, 61
  %v621 = vpop.permute.xlu0 %620
  %622 = vrot.lane.b32.xlu0 %v618, 61
  %v623 = vpop.permute.xlu0 %622
  %624 = vrot.lane.b32.xlu0 %v615, 61
  %v625 = vpop.permute.xlu0 %624
  %626 = vrot.lane.b32.xlu0 %v619, 61
  %v627 = vpop.permute.xlu0 %626
  %vm628 = vcmask 498688
  %v629 = vsel %vm628, %v621, %v623
  %v630 = vsel %vm628, %v623, %v625
  %v631 = vsel %vm628, %v625, %v627
  %635 = vst [vmem:[#allocation3 + $0x108] sm:$0xf] %v629
  %636 = vst [vmem:[#allocation3 + $0x110] sm:$0xf] %v630
  %637 = vst.msk [vmem:[#allocation3 + $0x118] sm:$0xf] %vm153, %v631
  %v638 = vld [vmem:[#allocation2] sm:$0xff]
  %v639 = vld [vmem:[#allocation2 + $0x8] sm:$0xff]
  %v642 = vcombine.low %v638, %v638
  %v643 = vcombine.low %v639, %v639
  %644 = vrot.lane.b32.xlu0 %v642, 60
  %v645 = vpop.permute.xlu0 %644
  %646 = vrot.lane.b32.xlu0 %v638, 60
  %v647 = vpop.permute.xlu0 %646
  %648 = vrot.lane.b32.xlu0 %v643, 60
  %v649 = vpop.permute.xlu0 %648
  %650 = vrot.lane.b32.xlu0 %v639, 60
  %v651 = vpop.permute.xlu0 %650
  %vm652 = vcmask 490496
  %v653 = vsel %vm652, %v645, %v647
  %v654 = vsel %vm652, %v647, %v649
  %v655 = vsel %vm652, %v649, %v651
  %659 = vst [vmem:[#allocation3 + $0x108] sm:$0xf0] %v653
  %660 = vst [vmem:[#allocation3 + $0x110] sm:$0xf0] %v654
  %661 = vst.msk [vmem:[#allocation3 + $0x118] sm:$0xf0] %vm175, %v655
  %v662 = vld [vmem:[#allocation2] sm:$0xff]
  %v663 = vld [vmem:[#allocation2 + $0x8] sm:$0xff]
  %v666 = vcombine.high %v662, %v662
  %v667 = vcombine.high %v663, %v663
  %668 = vrot.lane.b32.xlu0 %v662, 59
  %v669 = vpop.permute.xlu0 %668
  %670 = vrot.lane.b32.xlu0 %v666, 59
  %v671 = vpop.permute.xlu0 %670
  %672 = vrot.lane.b32.xlu0 %v663, 59
  %v673 = vpop.permute.xlu0 %672
  %674 = vrot.lane.b32.xlu0 %v667, 59
  %v675 = vpop.permute.xlu0 %674
  %vm676 = vcmask 482304
  %v677 = vsel %vm676, %v669, %v671
  %v678 = vsel %vm676, %v671, %v673
  %v679 = vsel %vm676, %v673, %v675
  %683 = vst [vmem:[#allocation3 + $0x120] sm:$0xf] %v677
  %684 = vst [vmem:[#allocation3 + $0x128] sm:$0xf] %v678
  %685 = vst.msk [vmem:[#allocation3 + $0x130] sm:$0xf] %vm153, %v679
  %v686 = vld [vmem:[#allocation2] sm:$0xff]
  %v687 = vld [vmem:[#allocation2 + $0x8] sm:$0xff]
  %v690 = vcombine.low %v686, %v686
  %v691 = vcombine.low %v687, %v687
  %692 = vrot.lane.b32.xlu0 %v690, 58
  %v693 = vpop.permute.xlu0 %692
  %694 = vrot.lane.b32.xlu0 %v686, 58
  %v695 = vpop.permute.xlu0 %694
  %696 = vrot.lane.b32.xlu0 %v691, 58
  %v697 = vpop.permute.xlu0 %696
  %698 = vrot.lane.b32.xlu0 %v687, 58
  %v699 = vpop.permute.xlu0 %698
  %vm700 = vcmask 474112
  %v701 = vsel %vm700, %v693, %v695
  %v702 = vsel %vm700, %v695, %v697
  %v703 = vsel %vm700, %v697, %v699
  %707 = vst [vmem:[#allocation3 + $0x120] sm:$0xf0] %v701
  %708 = vst [vmem:[#allocation3 + $0x128] sm:$0xf0] %v702
  %709 = vst.msk [vmem:[#allocation3 + $0x130] sm:$0xf0] %vm175, %v703
  %v710 = vld [vmem:[#allocation2] sm:$0xff]
  %v711 = vld [vmem:[#allocation2 + $0x8] sm:$0xff]
  %v714 = vcombine.high %v710, %v710
  %v715 = vcombine.high %v711, %v711
  %716 = vrot.lane.b32.xlu0 %v710, 57
  %v717 = vpop.permute.xlu0 %716
  %718 = vrot.lane.b32.xlu0 %v714, 57
  %v719 = vpop.permute.xlu0 %718
  %720 = vrot.lane.b32.xlu0 %v711, 57
  %v721 = vpop.permute.xlu0 %720
  %722 = vrot.lane.b32.xlu0 %v715, 57
  %v723 = vpop.permute.xlu0 %722
  %vm724 = vcmask 465920
  %v725 = vsel %vm724, %v717, %v719
  %v726 = vsel %vm724, %v719, %v721
  %v727 = vsel %vm724, %v721, %v723
  %731 = vst [vmem:[#allocation3 + $0x138] sm:$0xf] %v725
  %732 = vst [vmem:[#allocation3 + $0x140] sm:$0xf] %v726
  %733 = vst.msk [vmem:[#allocation3 + $0x148] sm:$0xf] %vm153, %v727
  %v734 = vld [vmem:[#allocation2] sm:$0xff]
  %v735 = vld [vmem:[#allocation2 + $0x8] sm:$0xff]
  %v738 = vcombine.low %v734, %v734
  %v739 = vcombine.low %v735, %v735
  %740 = vrot.lane.b32.xlu0 %v738, 56
  %v741 = vpop.permute.xlu0 %740
  %742 = vrot.lane.b32.xlu0 %v734, 56
  %v743 = vpop.permute.xlu0 %742
  %744 = vrot.lane.b32.xlu0 %v739, 56
  %v745 = vpop.permute.xlu0 %744
  %746 = vrot.lane.b32.xlu0 %v735, 56
  %v747 = vpop.permute.xlu0 %746
  %vm748 = vcmask 457728
  %v749 = vsel %vm748, %v741, %v743
  %v750 = vsel %vm748, %v743, %v745
  %v751 = vsel %vm748, %v745, %v747
  %755 = vst [vmem:[#allocation3 + $0x138] sm:$0xf0] %v749
  %756 = vst [vmem:[#allocation3 + $0x140] sm:$0xf0] %v750
  %757 = vst.msk [vmem:[#allocation3 + $0x148] sm:$0xf0] %vm175, %v751
  %v758 = vld [vmem:[#allocation2] sm:$0xff]
  %v759 = vld [vmem:[#allocation2 + $0x8] sm:$0xff]
  %v762 = vcombine.high %v758, %v758
  %v763 = vcombine.high %v759, %v759
  %764 = vrot.lane.b32.xlu0 %v758, 40
  %v765 = vpop.permute.xlu0 %764
  %766 = vrot.lane.b32.xlu0 %v762, 40
  %v767 = vpop.permute.xlu0 %766
  %768 = vrot.lane.b32.xlu0 %v759, 40
  %v769 = vpop.permute.xlu0 %768
  %770 = vrot.lane.b32.xlu0 %v763, 40
  %v771 = vpop.permute.xlu0 %770
  %vm772 = vcmask 326656
  %v773 = vsel %vm772, %v765, %v767
  %v774 = vsel %vm772, %v767, %v769
  %v775 = vsel %vm772, %v769, %v771
  %779 = vst [vmem:[#allocation3 + $0x150] sm:$0xf] %v773
  %780 = vst [vmem:[#allocation3 + $0x158] sm:$0xf] %v774
  %781 = vst.msk [vmem:[#allocation3 + $0x160] sm:$0xf] %vm153, %v775
  %v782 = vld [vmem:[#allocation2] sm:$0xff]
  %v783 = vld [vmem:[#allocation2 + $0x8] sm:$0xff]
  %v786 = vcombine.low %v782, %v782
  %v787 = vcombine.low %v783, %v783
  %788 = vrot.lane.b32.xlu0 %v786, 39
  %v789 = vpop.permute.xlu0 %788
  %790 = vrot.lane.b32.xlu0 %v782, 39
  %v791 = vpop.permute.xlu0 %790
  %792 = vrot.lane.b32.xlu0 %v787, 39
  %v793 = vpop.permute.xlu0 %792
  %794 = vrot.lane.b32.xlu0 %v783, 39
  %v795 = vpop.permute.xlu0 %794
  %vm796 = vcmask 318464
  %v797 = vsel %vm796, %v789, %v791
  %v798 = vsel %vm796, %v791, %v793
  %v799 = vsel %vm796, %v793, %v795
  %803 = vst [vmem:[#allocation3 + $0x150] sm:$0xf0] %v797
  %804 = vst [vmem:[#allocation3 + $0x158] sm:$0xf0] %v798
  %805 = vst.msk [vmem:[#allocation3 + $0x160] sm:$0xf0] %vm175, %v799
  %v806 = vld [vmem:[#allocation2] sm:$0xff]
  %v807 = vld [vmem:[#allocation2 + $0x8] sm:$0xff]
  %v810 = vcombine.high %v806, %v806
  %v811 = vcombine.high %v807, %v807
  %812 = vrot.lane.b32.xlu0 %v806, 38
  %v813 = vpop.permute.xlu0 %812
  %814 = vrot.lane.b32.xlu0 %v810, 38
  %v815 = vpop.permute.xlu0 %814
  %816 = vrot.lane.b32.xlu0 %v807, 38
  %v817 = vpop.permute.xlu0 %816
  %818 = vrot.lane.b32.xlu0 %v811, 38
  %v819 = vpop.permute.xlu0 %818
  %vm820 = vcmask 310272
  %v821 = vsel %vm820, %v813, %v815
  %v822 = vsel %vm820, %v815, %v817
  %v823 = vsel %vm820, %v817, %v819
  %827 = vst [vmem:[#allocation3 + $0x168] sm:$0xf] %v821
  %828 = vst [vmem:[#allocation3 + $0x170] sm:$0xf] %v822
  %829 = vst.msk [vmem:[#allocation3 + $0x178] sm:$0xf] %vm153, %v823
  %v830 = vld [vmem:[#allocation2] sm:$0xff]
  %v831 = vld [vmem:[#allocation2 + $0x8] sm:$0xff]
  %v834 = vcombine.low %v830, %v830
  %v835 = vcombine.low %v831, %v831
  %836 = vrot.lane.b32.xlu0 %v834, 37
  %v837 = vpop.permute.xlu0 %836
  %838 = vrot.lane.b32.xlu0 %v830, 37
  %v839 = vpop.permute.xlu0 %838
  %840 = vrot.lane.b32.xlu0 %v835, 37
  %v841 = vpop.permute.xlu0 %840
  %842 = vrot.lane.b32.xlu0 %v831, 37
  %v843 = vpop.permute.xlu0 %842
  %vm844 = vcmask 302080
  %v845 = vsel %vm844, %v837, %v839
  %v846 = vsel %vm844, %v839, %v841
  %v847 = vsel %vm844, %v841, %v843
  %851 = vst [vmem:[#allocation3 + $0x168] sm:$0xf0] %v845
  %852 = vst [vmem:[#allocation3 + $0x170] sm:$0xf0] %v846
  %853 = vst.msk [vmem:[#allocation3 + $0x178] sm:$0xf0] %vm175, %v847
  %v854 = vld [vmem:[#allocation2] sm:$0xff]
  %v855 = vld [vmem:[#allocation2 + $0x8] sm:$0xff]
  %v858 = vcombine.high %v854, %v854
  %v859 = vcombine.high %v855, %v855
  %860 = vrot.lane.b32.xlu0 %v854, 36
  %v861 = vpop.permute.xlu0 %860
  %862 = vrot.lane.b32.xlu0 %v858, 36
  %v863 = vpop.permute.xlu0 %862
  %864 = vrot.lane.b32.xlu0 %v855, 36
  %v865 = vpop.permute.xlu0 %864
  %866 = vrot.lane.b32.xlu0 %v859, 36
  %v867 = vpop.permute.xlu0 %866
  %vm868 = vcmask 293888
  %v869 = vsel %vm868, %v861, %v863
  %v870 = vsel %vm868, %v863, %v865
  %v871 = vsel %vm868, %v865, %v867
  %875 = vst [vmem:[#allocation3 + $0x180] sm:$0xf] %v869
  %876 = vst [vmem:[#allocation3 + $0x188] sm:$0xf] %v870
  %877 = vst.msk [vmem:[#allocation3 + $0x190] sm:$0xf] %vm153, %v871
  %v878 = vld [vmem:[#allocation2] sm:$0xff]
  %v879 = vld [vmem:[#allocation2 + $0x8] sm:$0xff]
  %v882 = vcombine.low %v878, %v878
  %v883 = vcombine.low %v879, %v879
  %884 = vrot.lane.b32.xlu0 %v882, 35
  %v885 = vpop.permute.xlu0 %884
  %886 = vrot.lane.b32.xlu0 %v878, 35
  %v887 = vpop.permute.xlu0 %886
  %888 = vrot.lane.b32.xlu0 %v883, 35
  %v889 = vpop.permute.xlu0 %888
  %890 = vrot.lane.b32.xlu0 %v879, 35
  %v891 = vpop.permute.xlu0 %890
  %vm892 = vcmask 285696
  %v893 = vsel %vm892, %v885, %v887
  %v894 = vsel %vm892, %v887, %v889
  %v895 = vsel %vm892, %v889, %v891
  %899 = vst [vmem:[#allocation3 + $0x180] sm:$0xf0] %v893
  %900 = vst [vmem:[#allocation3 + $0x188] sm:$0xf0] %v894
  %901 = vst.msk [vmem:[#allocation3 + $0x190] sm:$0xf0] %vm175, %v895
  %v902 = vld [vmem:[#allocation2] sm:$0xff]
  %v903 = vld [vmem:[#allocation2 + $0x8] sm:$0xff]
  %v906 = vcombine.high %v902, %v902
  %v907 = vcombine.high %v903, %v903
  %908 = vrot.lane.b32.xlu0 %v902, 34
  %v909 = vpop.permute.xlu0 %908
  %910 = vrot.lane.b32.xlu0 %v906, 34
  %v911 = vpop.permute.xlu0 %910
  %912 = vrot.lane.b32.xlu0 %v903, 34
  %v913 = vpop.permute.xlu0 %912
  %914 = vrot.lane.b32.xlu0 %v907, 34
  %v915 = vpop.permute.xlu0 %914
  %vm916 = vcmask 277504
  %v917 = vsel %vm916, %v909, %v911
  %v918 = vsel %vm916, %v911, %v913
  %v919 = vsel %vm916, %v913, %v915
  %923 = vst [vmem:[#allocation3 + $0x198] sm:$0xf] %v917
  %924 = vst [vmem:[#allocation3 + $0x1a0] sm:$0xf] %v918
  %925 = vst.msk [vmem:[#allocation3 + $0x1a8] sm:$0xf] %vm153, %v919
  %v926 = vld [vmem:[#allocation2] sm:$0xff]
  %v927 = vld [vmem:[#allocation2 + $0x8] sm:$0xff]
  %v930 = vcombine.low %v926, %v926
  %v931 = vcombine.low %v927, %v927
  %932 = vrot.lane.b32.xlu0 %v930, 18
  %v933 = vpop.permute.xlu0 %932
  %934 = vrot.lane.b32.xlu0 %v926, 18
  %v935 = vpop.permute.xlu0 %934
  %936 = vrot.lane.b32.xlu0 %v931, 18
  %v937 = vpop.permute.xlu0 %936
  %938 = vrot.lane.b32.xlu0 %v927, 18
  %v939 = vpop.permute.xlu0 %938
  %vm940 = vcmask 146432
  %v941 = vsel %vm940, %v933, %v935
  %v942 = vsel %vm940, %v935, %v937
  %v943 = vsel %vm940, %v937, %v939
  %947 = vst [vmem:[#allocation3 + $0x198] sm:$0xf0] %v941
  %948 = vst [vmem:[#allocation3 + $0x1a0] sm:$0xf0] %v942
  %949 = vst.msk [vmem:[#allocation3 + $0x1a8] sm:$0xf0] %vm175, %v943
  %v950 = vld [vmem:[#allocation2] sm:$0xff]
  %v951 = vld [vmem:[#allocation2 + $0x8] sm:$0xff]
  %v954 = vcombine.high %v950, %v950
  %v955 = vcombine.high %v951, %v951
  %956 = vrot.lane.b32.xlu0 %v950, 17
  %v957 = vpop.permute.xlu0 %956
  %958 = vrot.lane.b32.xlu0 %v954, 17
  %v959 = vpop.permute.xlu0 %958
  %960 = vrot.lane.b32.xlu0 %v951, 17
  %v961 = vpop.permute.xlu0 %960
  %962 = vrot.lane.b32.xlu0 %v955, 17
  %v963 = vpop.permute.xlu0 %962
  %vm964 = vcmask 138240
  %v965 = vsel %vm964, %v957, %v959
  %v966 = vsel %vm964, %v959, %v961
  %v967 = vsel %vm964, %v961, %v963
  %971 = vst [vmem:[#allocation3 + $0x1b0] sm:$0xf] %v965
  %972 = vst [vmem:[#allocation3 + $0x1b8] sm:$0xf] %v966
  %973 = vst.msk [vmem:[#allocation3 + $0x1c0] sm:$0xf] %vm153, %v967
  %v974 = vld [vmem:[#allocation2] sm:$0xff]
  %v975 = vld [vmem:[#allocation2 + $0x8] sm:$0xff]
  %v978 = vcombine.low %v974, %v974
  %v979 = vcombine.low %v975, %v975
  %980 = vrot.lane.b32.xlu0 %v978, 16
  %v981 = vpop.permute.xlu0 %980
  %982 = vrot.lane.b32.xlu0 %v974, 16
  %v983 = vpop.permute.xlu0 %982
  %984 = vrot.lane.b32.xlu0 %v979, 16
  %v985 = vpop.permute.xlu0 %984
  %986 = vrot.lane.b32.xlu0 %v975, 16
  %v987 = vpop.permute.xlu0 %986
  %vm988 = vcmask 130048
  %v989 = vsel %vm988, %v981, %v983
  %v990 = vsel %vm988, %v983, %v985
  %v991 = vsel %vm988, %v985, %v987
  %995 = vst [vmem:[#allocation3 + $0x1b0] sm:$0xf0] %v989
  %996 = vst [vmem:[#allocation3 + $0x1b8] sm:$0xf0] %v990
  %997 = vst.msk [vmem:[#allocation3 + $0x1c0] sm:$0xf0] %vm175, %v991
  %v998 = vld [vmem:[#allocation2] sm:$0xff]
  %v999 = vld [vmem:[#allocation2 + $0x8] sm:$0xff]
  %v1002 = vcombine.high %v998, %v998
  %v1003 = vcombine.high %v999, %v999
  %1004 = vrot.lane.b32.xlu0 %v998, 15
  %v1005 = vpop.permute.xlu0 %1004
  %1006 = vrot.lane.b32.xlu0 %v1002, 15
  %v1007 = vpop.permute.xlu0 %1006
  %1008 = vrot.lane.b32.xlu0 %v999, 15
  %v1009 = vpop.permute.xlu0 %1008
  %1010 = vrot.lane.b32.xlu0 %v1003, 15
  %v1011 = vpop.permute.xlu0 %1010
  %vm1012 = vcmask 121856
  %v1013 = vsel %vm1012, %v1005, %v1007
  %v1014 = vsel %vm1012, %v1007, %v1009
  %v1015 = vsel %vm1012, %v1009, %v1011
  %1019 = vst [vmem:[#allocation3 + $0x1c8] sm:$0xf] %v1013
  %1020 = vst [vmem:[#allocation3 + $0x1d0] sm:$0xf] %v1014
  %1021 = vst.msk [vmem:[#allocation3 + $0x1d8] sm:$0xf] %vm153, %v1015
  %v1022 = vld [vmem:[#allocation2] sm:$0xff]
  %v1023 = vld [vmem:[#allocation2 + $0x8] sm:$0xff]
  %v1026 = vcombine.low %v1022, %v1022
  %v1027 = vcombine.low %v1023, %v1023
  %1028 = vrot.lane.b32.xlu0 %v1026, 14
  %v1029 = vpop.permute.xlu0 %1028
  %1030 = vrot.lane.b32.xlu0 %v1022, 14
  %v1031 = vpop.permute.xlu0 %1030
  %1032 = vrot.lane.b32.xlu0 %v1027, 14
  %v1033 = vpop.permute.xlu0 %1032
  %1034 = vrot.lane.b32.xlu0 %v1023, 14
  %v1035 = vpop.permute.xlu0 %1034
  %vm1036 = vcmask 113664
  %v1037 = vsel %vm1036, %v1029, %v1031
  %v1038 = vsel %vm1036, %v1031, %v1033
  %v1039 = vsel %vm1036, %v1033, %v1035
  %1043 = vst [vmem:[#allocation3 + $0x1c8] sm:$0xf0] %v1037
  %1044 = vst [vmem:[#allocation3 + $0x1d0] sm:$0xf0] %v1038
  %1045 = vst.msk [vmem:[#allocation3 + $0x1d8] sm:$0xf0] %vm175, %v1039
  %v1046 = vld [vmem:[#allocation2] sm:$0xff]
  %v1047 = vld [vmem:[#allocation2 + $0x8] sm:$0xff]
  %v1050 = vcombine.high %v1046, %v1046
  %v1051 = vcombine.high %v1047, %v1047
  %1052 = vrot.lane.b32.xlu0 %v1046, 13
  %v1053 = vpop.permute.xlu0 %1052
  %1054 = vrot.lane.b32.xlu0 %v1050, 13
  %v1055 = vpop.permute.xlu0 %1054
  %1056 = vrot.lane.b32.xlu0 %v1047, 13
  %v1057 = vpop.permute.xlu0 %1056
  %1058 = vrot.lane.b32.xlu0 %v1051, 13
  %v1059 = vpop.permute.xlu0 %1058
  %vm1060 = vcmask 105472
  %v1061 = vsel %vm1060, %v1053, %v1055
  %v1062 = vsel %vm1060, %v1055, %v1057
  %v1063 = vsel %vm1060, %v1057, %v1059
  %1067 = vst [vmem:[#allocation3 + $0x1e0] sm:$0xf] %v1061
  %1068 = vst [vmem:[#allocation3 + $0x1e8] sm:$0xf] %v1062
  %1069 = vst.msk [vmem:[#allocation3 + $0x1f0] sm:$0xf] %vm153, %v1063
  %v1070 = vld [vmem:[#allocation2] sm:$0xff]
  %v1071 = vld [vmem:[#allocation2 + $0x8] sm:$0xff]
  %v1074 = vcombine.low %v1070, %v1070
  %v1075 = vcombine.low %v1071, %v1071
  %1076 = vrot.lane.b32.xlu0 %v1074, 12
  %v1077 = vpop.permute.xlu0 %1076
  %1078 = vrot.lane.b32.xlu0 %v1070, 12
  %v1079 = vpop.permute.xlu0 %1078
  %1080 = vrot.lane.b32.xlu0 %v1075, 12
  %v1081 = vpop.permute.xlu0 %1080
  %1082 = vrot.lane.b32.xlu0 %v1071, 12
  %v1083 = vpop.permute.xlu0 %1082
  %vm1084 = vcmask 97280
  %v1085 = vsel %vm1084, %v1077, %v1079
  %v1086 = vsel %vm1084, %v1079, %v1081
  %v1087 = vsel %vm1084, %v1081, %v1083
  %1091 = vst [vmem:[#allocation3 + $0x1e0] sm:$0xf0] %v1085
  %1092 = vst [vmem:[#allocation3 + $0x1e8] sm:$0xf0] %v1086
  %1093 = vst.msk [vmem:[#allocation3 + $0x1f0] sm:$0xf0] %vm175, %v1087
  %v1094 = vld [vmem:[#allocation2 + $0x4] sm:$0xff]
  %v1095 = vld [vmem:[#allocation2 + $0xc] sm:$0xf]
  %v1098 = vcombine.high %v1094, %v1094
  %1099 = vrot.lane.b32.xlu0 %v1094, 124
  %v1100 = vpop.permute.xlu0 %1099
  %1101 = vrot.lane.b32.xlu0 %v1098, 124
  %v1102 = vpop.permute.xlu0 %1101
  %1103 = vrot.lane.b32.xlu0 %v1095, 124
  %v1104 = vpop.permute.xlu0 %1103
  %v1105 = vsel %vm229, %v1100, %v1102
  %v1106 = vsel %vm229, %v1102, %v1104
  %1110 = vst [vmem:[#allocation3 + $0x1f8] sm:$0xf] %v1105
  %1111 = vst [vmem:[#allocation3 + $0x200] sm:$0xf] %v1106
  %1112 = vst.msk [vmem:[#allocation3 + $0x208] sm:$0xf] %vm153, %v1104
  %v1113 = vld [vmem:[#allocation2 + $0x4] sm:$0xff]
  %v1114 = vld [vmem:[#allocation2 + $0xc] sm:$0xf]
  %v1117 = vcombine.low %v1113, %v1113
  %v1118 = vcombine.low %v1114, %v1114
  %1119 = vrot.lane.b32.xlu0 %v1117, 123
  %v1120 = vpop.permute.xlu0 %1119
  %1121 = vrot.lane.b32.xlu0 %v1113, 123
  %v1122 = vpop.permute.xlu0 %1121
  %1123 = vrot.lane.b32.xlu0 %v1118, 123
  %v1124 = vpop.permute.xlu0 %1123
  %v1125 = vsel %vm250, %v1120, %v1122
  %v1126 = vsel %vm250, %v1122, %v1124
  %1130 = vst [vmem:[#allocation3 + $0x1f8] sm:$0xf0] %v1125
  %1131 = vst [vmem:[#allocation3 + $0x200] sm:$0xf0] %v1126
  %1132 = vst.msk [vmem:[#allocation3 + $0x208] sm:$0xf0] %vm175, %v1124
  %v1133 = vld [vmem:[#allocation2 + $0x4] sm:$0xff]
  %v1134 = vld [vmem:[#allocation2 + $0xc] sm:$0xf]
  %v1137 = vcombine.high %v1133, %v1133
  %1138 = vrot.lane.b32.xlu0 %v1133, 122
  %v1139 = vpop.permute.xlu0 %1138
  %1140 = vrot.lane.b32.xlu0 %v1137, 122
  %v1141 = vpop.permute.xlu0 %1140
  %1142 = vrot.lane.b32.xlu0 %v1134, 122
  %v1143 = vpop.permute.xlu0 %1142
  %v1144 = vsel %vm270, %v1139, %v1141
  %v1145 = vsel %vm270, %v1141, %v1143
  %1149 = vst [vmem:[#allocation3 + $0x210] sm:$0xf] %v1144
  %1150 = vst [vmem:[#allocation3 + $0x218] sm:$0xf] %v1145
  %1151 = vst.msk [vmem:[#allocation3 + $0x220] sm:$0xf] %vm153, %v1143
  %v1152 = vld [vmem:[#allocation2 + $0x4] sm:$0xff]
  %v1153 = vld [vmem:[#allocation2 + $0xc] sm:$0xf]
  %v1156 = vcombine.low %v1152, %v1152
  %v1157 = vcombine.low %v1153, %v1153
  %1158 = vrot.lane.b32.xlu0 %v1156, 121
  %v1159 = vpop.permute.xlu0 %1158
  %1160 = vrot.lane.b32.xlu0 %v1152, 121
  %v1161 = vpop.permute.xlu0 %1160
  %1162 = vrot.lane.b32.xlu0 %v1157, 121
  %v1163 = vpop.permute.xlu0 %1162
  %vm1164 = vcmask 990208
  %v1165 = vsel %vm1164, %v1159, %v1161
  %v1166 = vsel %vm1164, %v1161, %v1163
  %1170 = vst [vmem:[#allocation3 + $0x210] sm:$0xf0] %v1165
  %1171 = vst [vmem:[#allocation3 + $0x218] sm:$0xf0] %v1166
  %1172 = vst.msk [vmem:[#allocation3 + $0x220] sm:$0xf0] %vm175, %v1163
  %v1173 = vld [vmem:[#allocation2 + $0x4] sm:$0xff]
  %v1174 = vld [vmem:[#allocation2 + $0xc] sm:$0xf]
  %v1177 = vcombine.high %v1173, %v1173
  %1178 = vrot.lane.b32.xlu0 %v1173, 120
  %v1179 = vpop.permute.xlu0 %1178
  %1180 = vrot.lane.b32.xlu0 %v1177, 120
  %v1181 = vpop.permute.xlu0 %1180
  %1182 = vrot.lane.b32.xlu0 %v1174, 120
  %v1183 = vpop.permute.xlu0 %1182
  %vm1184 = vcmask 982016
  %v1185 = vsel %vm1184, %v1179, %v1181
  %v1186 = vsel %vm1184, %v1181, %v1183
  %1190 = vst [vmem:[#allocation3 + $0x228] sm:$0xf] %v1185
  %1191 = vst [vmem:[#allocation3 + $0x230] sm:$0xf] %v1186
  %1192 = vst.msk [vmem:[#allocation3 + $0x238] sm:$0xf] %vm153, %v1183
  %v1193 = vld [vmem:[#allocation2 + $0x4] sm:$0xff]
  %v1194 = vld [vmem:[#allocation2 + $0xc] sm:$0xf]
  %v1197 = vcombine.low %v1193, %v1193
  %v1198 = vcombine.low %v1194, %v1194
  %1199 = vrot.lane.b32.xlu0 %v1197, 119
  %v1200 = vpop.permute.xlu0 %1199
  %1201 = vrot.lane.b32.xlu0 %v1193, 119
  %v1202 = vpop.permute.xlu0 %1201
  %1203 = vrot.lane.b32.xlu0 %v1198, 119
  %v1204 = vpop.permute.xlu0 %1203
  %vm1205 = vcmask 973824
  %v1206 = vsel %vm1205, %v1200, %v1202
  %v1207 = vsel %vm1205, %v1202, %v1204
  %1211 = vst [vmem:[#allocation3 + $0x228] sm:$0xf0] %v1206
  %1212 = vst [vmem:[#allocation3 + $0x230] sm:$0xf0] %v1207
  %1213 = vst.msk [vmem:[#allocation3 + $0x238] sm:$0xf0] %vm175, %v1204
  %v1214 = vld [vmem:[#allocation2 + $0x4] sm:$0xff]
  %v1215 = vld [vmem:[#allocation2 + $0xc] sm:$0xf]
  %v1218 = vcombine.high %v1214, %v1214
  %1219 = vrot.lane.b32.xlu0 %v1214, 118
  %v1220 = vpop.permute.xlu0 %1219
  %1221 = vrot.lane.b32.xlu0 %v1218, 118
  %v1222 = vpop.permute.xlu0 %1221
  %1223 = vrot.lane.b32.xlu0 %v1215, 118
  %v1224 = vpop.permute.xlu0 %1223
  %vm1225 = vcmask 965632
  %v1226 = vsel %vm1225, %v1220, %v1222
  %v1227 = vsel %vm1225, %v1222, %v1224
  %1231 = vst [vmem:[#allocation3 + $0x240] sm:$0xf] %v1226
  %1232 = vst [vmem:[#allocation3 + $0x248] sm:$0xf] %v1227
  %1233 = vst.msk [vmem:[#allocation3 + $0x250] sm:$0xf] %vm153, %v1224
  %v1234 = vld [vmem:[%s1] sm:$0xff]
  %v1235 = vld [vmem:[#allocation3] sm:$0xff]
  %v1236 = vld [vmem:[#allocation3 + $0x8] sm:$0xff]
  %v1237 = vld [vmem:[#allocation3 + $0x10] sm:$0xff]
  %v1238 = vld [vmem:[#allocation3 + $0x18] sm:$0xff]
  %v1239 = vld [vmem:[#allocation3 + $0x20] sm:$0xff]
  %v1240 = vld [vmem:[#allocation3 + $0x28] sm:$0xff]
  %v1241 = vld [vmem:[#allocation3 + $0x30] sm:$0xff]
  %v1242 = vld [vmem:[#allocation3 + $0x38] sm:$0xff]
  %v1243 = vld [vmem:[#allocation3 + $0x40] sm:$0xff]
  %v1244 = vld [vmem:[#allocation3 + $0x48] sm:$0xff]
  %v1245 = vld [vmem:[#allocation3 + $0x50] sm:$0xff]
  %v1246 = vld [vmem:[#allocation3 + $0x58] sm:$0xff]
  %v1247 = vld [vmem:[#allocation3 + $0x60] sm:$0xff]
  %v1248 = vld [vmem:[#allocation3 + $0x68] sm:$0xff]
  %v1249 = vld [vmem:[#allocation3 + $0x70] sm:$0xff]
  %v1250 = vld [vmem:[#allocation3 + $0x78] sm:$0xff]
  %v1251 = vld [vmem:[#allocation3 + $0x80] sm:$0xff]
  %v1252 = vld [vmem:[#allocation3 + $0x88] sm:$0xff]
  %v1253 = vld [vmem:[#allocation3 + $0x90] sm:$0xff]
  %v1254 = vld [vmem:[#allocation3 + $0x98] sm:$0xff]
  %v1255 = vld [vmem:[#allocation3 + $0xa0] sm:$0xff]
  %v1256 = vld [vmem:[#allocation3 + $0xa8] sm:$0xff]
  %v1257 = vld [vmem:[#allocation3 + $0xb0] sm:$0xff]
  %v1258 = vld [vmem:[#allocation3 + $0xb8] sm:$0xff]
  %v1259 = vld [vmem:[#allocation3 + $0xc0] sm:$0xff]
  %v1260 = vld [vmem:[#allocation3 + $0xc8] sm:$0xff]
  %v1261 = vld [vmem:[#allocation3 + $0xd0] sm:$0xff]
  %v1262 = vld [vmem:[#allocation3 + $0xd8] sm:$0xff]
  %v1263 = vld [vmem:[#allocation3 + $0xe0] sm:$0xff]
  %v1264 = vld [vmem:[#allocation3 + $0xe8] sm:$0xff]
  %v1265 = vld [vmem:[#allocation3 + $0xf0] sm:$0xff]
  %v1266 = vld [vmem:[#allocation3 + $0xf8] sm:$0xff]
  %v1267 = vld [vmem:[#allocation3 + $0x100] sm:$0xff]
  %v1268 = vld [vmem:[#allocation3 + $0x108] sm:$0xff]
  %v1269 = vld [vmem:[#allocation3 + $0x110] sm:$0xff]
  %v1270 = vld [vmem:[#allocation3 + $0x118] sm:$0xff]
  %v1271 = vld [vmem:[#allocation3 + $0x120] sm:$0xff]
  %v1272 = vld [vmem:[#allocation3 + $0x128] sm:$0xff]
  %v1273 = vld [vmem:[#allocation3 + $0x130] sm:$0xff]
  %v1274 = vld [vmem:[#allocation3 + $0x138] sm:$0xff]
  %v1275 = vld [vmem:[#allocation3 + $0x140] sm:$0xff]
  %v1276 = vld [vmem:[#allocation3 + $0x148] sm:$0xff]
  %v1277 = vld [vmem:[#allocation3 + $0x150] sm:$0xff]
  %v1278 = vld [vmem:[#allocation3 + $0x158] sm:$0xff]
  %v1279 = vld [vmem:[#allocation3 + $0x160] sm:$0xff]
  %v1280 = vld [vmem:[#allocation3 + $0x168] sm:$0xff]
  %v1281 = vld [vmem:[#allocation3 + $0x170] sm:$0xff]
  %v1282 = vld [vmem:[#allocation3 + $0x178] sm:$0xff]
  %v1283 = vld [vmem:[#allocation3 + $0x180] sm:$0xff]
  %v1284 = vld [vmem:[#allocation3 + $0x188] sm:$0xff]
  %v1285 = vld [vmem:[#allocation3 + $0x190] sm:$0xff]
  %v1286 = vld [vmem:[#allocation3 + $0x198] sm:$0xff]
  %v1287 = vld [vmem:[#allocation3 + $0x1a0] sm:$0xff]
  %v1288 = vld [vmem:[#allocation3 + $0x1a8] sm:$0xff]
  %v1289 = vld [vmem:[#allocation3 + $0x1b0] sm:$0xff]
  %v1290 = vld [vmem:[#allocation3 + $0x1b8] sm:$0xff]
  %v1291 = vld [vmem:[#allocation3 + $0x1c0] sm:$0xff]
  %v1292 = vld [vmem:[#allocation3 + $0x1c8] sm:$0xff]
  %v1293 = vld [vmem:[#allocation3 + $0x1d0] sm:$0xff]
  %v1294 = vld [vmem:[#allocation3 + $0x1d8] sm:$0xff]
  %v1295 = vld [vmem:[#allocation3 + $0x1e0] sm:$0xff]
  %v1296 = vld [vmem:[#allocation3 + $0x1e8] sm:$0xff]
  %v1297 = vld [vmem:[#allocation3 + $0x1f0] sm:$0xff]
  %v1298 = vld [vmem:[#allocation3 + $0x1f8] sm:$0xff]
  %v1299 = vld [vmem:[#allocation3 + $0x200] sm:$0xff]
  %v1300 = vld [vmem:[#allocation3 + $0x208] sm:$0xff]
  %v1301 = vld [vmem:[#allocation3 + $0x210] sm:$0xff]
  %v1302 = vld [vmem:[#allocation3 + $0x218] sm:$0xff]
  %v1303 = vld [vmem:[#allocation3 + $0x220] sm:$0xff]
  %v1304 = vld [vmem:[#allocation3 + $0x228] sm:$0xff]
  %v1305 = vld [vmem:[#allocation3 + $0x230] sm:$0xff]
  %v1306 = vld [vmem:[#allocation3 + $0x238] sm:$0xff]
  %v1307 = vld [vmem:[#allocation3 + $0x240] sm:$0xf]
  %v1308 = vld [vmem:[#allocation3 + $0x248] sm:$0xf]
  %v1309 = vld [vmem:[#allocation3 + $0x250] sm:$0xf]
  %v1310 = vld [vmem:[%s2] sm:$0xf]
  %1312 = vset.pattern.permute.xlu0 0
  %1313 = vperm.xlu0 %1312, %v1310
  %v1314 = vpop.permute.xlu0 %1313
  %v1317 = vcombine.high %v1234, %v1234
  %vm1318 = vcmask 556032
  %v1319 = vsel %vm1318, %v1317, 0
  %v1322 = vsel %vm15, %v1307, 0
  %v1325 = vsel %vm15, %v1308, 0
  %v1328 = vsel %vm15, %v1309, 0
  %1330 = vmatprep.subr.mxu0 %v1236
  %1331 = vmatpush1.msra.mxu0 %v1235
  %1332 = vmatprep.subr.mxu0 %v1239
  %1333 = vmatpush1.msra.mxu0 %v1238
  %1334 = vmatprep.subr.mxu0 %v1242
  %1335 = vmatpush1.msra.mxu0 %v1241
  %1336 = vmatprep.subr.mxu0 %v1245
  %1337 = vmatpush1.msra.mxu0 %v1244
  %1338 = vmatprep.subr.mxu0 %v1248
  %1339 = vmatpush1.msra.mxu0 %v1247
  %1340 = vmatprep.subr.mxu0 %v1251
  %1341 = vmatpush1.msra.mxu0 %v1250
  %1342 = vmatprep.subr.mxu0 %v1254
  %1343 = vmatpush1.msra.mxu0 %v1253
  %1344 = vmatprep.subr.mxu0 %v1257
  %1345 = vmatpush1.msra.mxu0 %v1256
  %1346 = vmatprep.subr.mxu0 %v1260
  %1347 = vmatpush1.msra.mxu0 %v1259
  %1348 = vmatprep.subr.mxu0 %v1263
  %1349 = vmatpush1.msra.mxu0 %v1262
  %1350 = vmatprep.subr.mxu0 %v1266
  %1351 = vmatpush1.msra.mxu0 %v1265
  %1352 = vmatprep.subr.mxu0 %v1269
  %1353 = vmatpush1.msra.mxu0 %v1268
  %1354 = vmatprep.subr.mxu0 %v1272
  %1355 = vmatpush1.msra.mxu0 %v1271
  %1356 = vmatprep.subr.mxu0 %v1275
  %1357 = vmatpush1.msra.mxu0 %v1274
  %1358 = vmatprep.subr.mxu0 %v1278
  %1359 = vmatpush1.msra.mxu0 %v1277
  %1360 = vmatprep.subr.mxu0 %v1281
  %1361 = vmatpush1.msra.mxu0 %v1280
  %1362 = vmatprep.subr.mxu0 %v1284
  %1363 = vmatpush1.msra.mxu0 %v1283
  %1364 = vmatprep.subr.mxu0 %v1287
  %1365 = vmatpush1.msra.mxu0 %v1286
  %1366 = vmatprep.subr.mxu0 %v1290
  %1367 = vmatpush1.msra.mxu0 %v1289
  %1368 = vmatprep.subr.mxu0 %v1293
  %1369 = vmatpush1.msra.mxu0 %v1292
  %1370 = vmatprep.subr.mxu0 %v1296
  %1371 = vmatpush1.msra.mxu0 %v1295
  %1372 = vmatprep.subr.mxu0 %v1299
  %1373 = vmatpush1.msra.mxu0 %v1298
  %1374 = vmatprep.subr.mxu0 %v1302
  %1375 = vmatpush1.msra.mxu0 %v1301
  %1376 = vmatprep.subr.mxu0 %v1305
  %1377 = vmatpush1.msra.mxu0 %v1304
  %1378 = vmatprep.subr.mxu0 %v1325
  %1379 = vmatpush1.msra.mxu0 %v1322
  %1380 = vmatprep.subr.mxu0 0.0
  %1381 = vmatpush1.msra.mxu0 0.0
  %1382 = vmatprep.subr.mxu0 0.0
  %1383 = vmatpush1.msra.mxu0 0.0
  %1384 = vmatprep.subr.mxu0 0.0
  %1385 = vmatpush1.msra.mxu0 0.0
  %1386 = vmatprep.subr.mxu0 0.0
  %1387 = vmatpush1.msra.mxu0 0.0
  %1388 = vmatprep.subr.mxu0 0.0
  %1389 = vmatpush1.msra.mxu0 0.0
  %1390 = vmatprep.subr.mxu0 0.0
  %1391 = vmatpush1.msra.mxu0 0.0
  %1392 = vmatprep.subr.mxu0 0.0
  %1393 = vmatpush1.msra.mxu0 0.0
  %1394 = vmatprep.mubr.f32.mxu0 %v1319
  %1395 = vmatmul.mubr.f32.gmra.mrb[0].mxu0 %v1234
  %v1396 = vpop.f32.mrb[0].mxu0
  %v1397 = vadd.f32 %v1314, %v1396
  %v1398 = vpop.f32.mrb[0].mxu0
  %v1399 = vadd.f32 %v1314, %v1398
  %1400 = vdwg.mxu0
  %1401 = vmatprep.subr.mxu0 0.0
  %1402 = vmatpush1.msra.mxu0 %v1237
  %1403 = vmatprep.subr.mxu0 0.0
  %1404 = vmatpush1.msra.mxu0 %v1240
  %1405 = vmatprep.subr.mxu0 0.0
  %1406 = vmatpush1.msra.mxu0 %v1243
  %1407 = vmatprep.subr.mxu0 0.0
  %1408 = vmatpush1.msra.mxu0 %v1246
  %1409 = vmatprep.subr.mxu0 0.0
  %1410 = vmatpush1.msra.mxu0 %v1249
  %1411 = vmatprep.subr.mxu0 0.0
  %1412 = vmatpush1.msra.mxu0 %v1252
  %1413 = vmatprep.subr.mxu0 0.0
  %1414 = vmatpush1.msra.mxu0 %v1255
  %1415 = vmatprep.subr.mxu0 0.0
  %1416 = vmatpush1.msra.mxu0 %v1258
  %1417 = vmatprep.subr.mxu0 0.0
  %1418 = vmatpush1.msra.mxu0 %v1261
  %1419 = vmatprep.subr.mxu0 0.0
  %1420 = vmatpush1.msra.mxu0 %v1264
  %1421 = vmatprep.subr.mxu0 0.0
  %1422 = vmatpush1.msra.mxu0 %v1267
  %1423 = vmatprep.subr.mxu0 0.0
  %1424 = vmatpush1.msra.mxu0 %v1270
  %1425 = vmatprep.subr.mxu0 0.0
  %1426 = vmatpush1.msra.mxu0 %v1273
  %1427 = vmatprep.subr.mxu0 0.0
  %1428 = vmatpush1.msra.mxu0 %v1276
  %1429 = vmatprep.subr.mxu0 0.0
  %1430 = vmatpush1.msra.mxu0 %v1279
  %1431 = vmatprep.subr.mxu0 0.0
  %1432 = vmatpush1.msra.mxu0 %v1282
  %1433 = vmatprep.subr.mxu0 0.0
  %1434 = vmatpush1.msra.mxu0 %v1285
  %1435 = vmatprep.subr.mxu0 0.0
  %1436 = vmatpush1.msra.mxu0 %v1288
  %1437 = vmatprep.subr.mxu0 0.0
  %1438 = vmatpush1.msra.mxu0 %v1291
  %1439 = vmatprep.subr.mxu0 0.0
  %1440 = vmatpush1.msra.mxu0 %v1294
  %1441 = vmatprep.subr.mxu0 0.0
  %1442 = vmatpush1.msra.mxu0 %v1297
  %1443 = vmatprep.subr.mxu0 0.0
  %1444 = vmatpush1.msra.mxu0 %v1300
  %1445 = vmatprep.subr.mxu0 0.0
  %1446 = vmatpush1.msra.mxu0 %v1303
  %1447 = vmatprep.subr.mxu0 0.0
  %1448 = vmatpush1.msra.mxu0 %v1306
  %1449 = vmatprep.subr.mxu0 0.0
  %1450 = vmatpush1.msra.mxu0 %v1328
  %1451 = vmatprep.subr.mxu0 0.0
  %1452 = vmatpush1.msra.mxu0 0.0
  %1453 = vmatprep.subr.mxu0 0.0
  %1454 = vmatpush1.msra.mxu0 0.0
  %1455 = vmatprep.subr.mxu0 0.0
  %1456 = vmatpush1.msra.mxu0 0.0
  %1457 = vmatprep.subr.mxu0 0.0
  %1458 = vmatpush1.msra.mxu0 0.0
  %1459 = vmatprep.subr.mxu0 0.0
  %1460 = vmatpush1.msra.mxu0 0.0
  %1461 = vmatprep.subr.mxu0 0.0
  %1462 = vmatpush1.msra.mxu0 0.0
  %1463 = vmatprep.subr.mxu0 0.0
  %1464 = vmatpush1.msra.mxu0 0.0
  %1465 = vmatprep.mubr.f32.mxu0 %v1319
  %1466 = vmatmul.mubr.f32.gmra.mrb[0].mxu0 %v1234
  %v1467 = vpop.f32.mrb[0].mxu0
  %v1468 = vadd.f32 %v1314, %v1467
  %v1469 = vpop.f32.mrb[0].mxu0
  %1470 = vdwg.mxu0
  %v1471 = vsel %vm15, %v1397, -inf
  %v1472 = vrot.slane %v1471, 4
  %v1473 = vmax.f32 %v1471, %v1472
  %v1474 = vrot.slane %v1473, 2
  %v1475 = vmax.f32 %v1473, %v1474
  %v1476 = vrot.slane %v1475, 1
  %v1477 = vmax.f32 %v1475, %v1476
  %v1478 = vsel %vm15, %v1399, -inf
  %v1479 = vrot.slane %v1478, 4
  %v1480 = vmax.f32 %v1478, %v1479
  %v1481 = vrot.slane %v1480, 2
  %v1482 = vmax.f32 %v1480, %v1481
  %v1483 = vrot.slane %v1482, 1
  %v1484 = vmax.f32 %v1482, %v1483
  %v1485 = vsel %vm153, %v1468, -inf
  %v1486 = vrot.slane %v1485, 4
  %v1487 = vmax.f32 %v1485, %v1486
  %v1488 = vrot.slane %v1487, 2
  %v1489 = vmax.f32 %v1487, %v1488
  %v1490 = vrot.slane %v1489, 1
  %v1491 = vmax.f32 %v1489, %v1490
  %v1492 = vsub.f32 %v1397, %v1477
  %v1493 = vsub.f32 %v1399, %v1484
  %v1494 = vsub.f32 %v1468, %v1491
  %v1495 = vmul.f32 %v1492, 1.442695
  %v1496 = vpow.pop %v1495
  %v1497 = vmul.f32 %v1493, 1.442695
  %v1498 = vpow.pop %v1497
  %v1499 = vmul.f32 %v1494, 1.442695
  %v1500 = vpow.pop %v1499
  %v1501 = vsel %vm15, %v1496, 0.0
  %v1502 = vrot.slane %v1501, 4
  %v1503 = vadd.f32 %v1501, %v1502
  %v1504 = vrot.slane %v1503, 2
  %v1505 = vadd.f32 %v1503, %v1504
  %v1506 = vrot.slane %v1505, 1
  %v1507 = vadd.f32 %v1505, %v1506
  %v1508 = vsel %vm15, %v1498, 0.0
  %v1509 = vrot.slane %v1508, 4
  %v1510 = vadd.f32 %v1508, %v1509
  %v1511 = vrot.slane %v1510, 2
  %v1512 = vadd.f32 %v1510, %v1511
  %v1513 = vrot.slane %v1512, 1
  %v1514 = vadd.f32 %v1512, %v1513
  %v1515 = vsel %vm153, %v1500, 0.0
  %v1516 = vrot.slane %v1515, 4
  %v1517 = vadd.f32 %v1515, %v1516
  %v1518 = vrot.slane %v1517, 2
  %v1519 = vadd.f32 %v1517, %v1518
  %v1520 = vrot.slane %v1519, 1
  %v1521 = vadd.f32 %v1519, %v1520
  %v1522 = vrcp.pop %v1507
  %v1523 = vmul.f32 %v1496, %v1522
  %v1524 = vrcp.pop %v1514
  %v1525 = vmul.f32 %v1498, %v1524
  %v1526 = vrcp.pop %v1521
  %v1527 = vmul.f32 %v1500, %v1526
  %vm1528 = vcmask 125952
  %1529 = vst.msk [vmem:[%s3] sm:$0xf] %vm1528, %v1523
  %1531 = vrot.lane.b32.xlu0 %v1523, 122
  %v1532 = vpop.permute.xlu0 %1531
  %vm1534 = vcmask 257152
  %1535 = vst.msk [vmem:[%s3] sm:$0xf] %vm1534, %v1532
  %1536 = vrot.lane.b32.xlu0 %v1523, 116
  %v1537 = vpop.permute.xlu0 %1536
  %vm1539 = vcmask 388352
  %1540 = vst.msk [vmem:[%s3] sm:$0xf] %vm1539, %v1537
  %1541 = vrot.lane.b32.xlu0 %v1523, 110
  %v1542 = vpop.permute.xlu0 %1541
  %vm1544 = vcmask 519552
  %1545 = vst.msk [vmem:[%s3] sm:$0xf] %vm1544, %v1542
  %1546 = vrot.lane.b32.xlu0 %v1523, 104
  %v1547 = vpop.permute.xlu0 %1546
  %vm1549 = vcmask 650752
  %1550 = vst.msk [vmem:[%s3] sm:$0xf] %vm1549, %v1547
  %1551 = vrot.lane.b32.xlu0 %v1523, 98
  %v1552 = vpop.permute.xlu0 %1551
  %vm1554 = vcmask 781952
  %1555 = vst.msk [vmem:[%s3] sm:$0xf] %vm1554, %v1552
  %1557 = vrot.lane.b32.xlu0 %v1525, 92
  %v1558 = vpop.permute.xlu0 %1557
  %vm1560 = vcmask 913152
  %1561 = vst.msk [vmem:[%s3] sm:$0xf] %vm1560, %v1558
  %1562 = vrot.lane.b32.xlu0 %v1525, 86
  %v1563 = vpop.permute.xlu0 %1562
  %vm1565 = vcmask 1044352
  %1566 = vst.msk [vmem:[%s3] sm:$0xf] %vm1565, %v1563
  %1567 = vrot.lane.b32.xlu0 %v1525, 80
  %v1568 = vpop.permute.xlu0 %1567
  %1570 = vst.msk [vmem:[%s3 + $0x4] sm:$0xf] %vm1528, %v1568
  %1571 = vrot.lane.b32.xlu0 %v1525, 74
  %v1572 = vpop.permute.xlu0 %1571
  %1574 = vst.msk [vmem:[%s3 + $0x4] sm:$0xf] %vm1534, %v1572
  %1575 = vrot.lane.b32.xlu0 %v1525, 68
  %v1576 = vpop.permute.xlu0 %1575
  %1578 = vst.msk [vmem:[%s3 + $0x4] sm:$0xf] %vm1539, %v1576
  %v1580 = vcombine.low %v1525, %v1527
  %1581 = vrot.lane.b32.xlu0 %v1580, 62
  %v1582 = vpop.permute.xlu0 %1581
  %v1583 = vrot.slane %v1582, 4
  %v1584 = vsel %vm604, %v1582, %v1583
  %1586 = vst.msk [vmem:[%s3 + $0x4] sm:$0xf] %vm1544, %v1584
  %1587 = vrot.lane.b32.xlu0 %v1527, 56
  %v1588 = vpop.permute.xlu0 %1587
  %1590 = vst.msk [vmem:[%s3 + $0x4] sm:$0xf] %vm1549, %v1588
  %1591 = vrot.lane.b32.xlu0 %v1527, 50
  %v1592 = vpop.permute.xlu0 %1591
  %1594 = vst.msk [vmem:[%s3 + $0x4] sm:$0xf] %vm1554, %v1592
  %1595 = vrot.lane.b32.xlu0 %v1527, 44
  %v1596 = vpop.permute.xlu0 %1595
  %1598 = vst.msk [vmem:[%s3 + $0x4] sm:$0xf] %vm1560, %v1596
  %1599 = vrot.lane.b32.xlu0 %v1527, 38
  %v1600 = vpop.permute.xlu0 %1599
  %1602 = vst.msk [vmem:[%s3 + $0x4] sm:$0xf] %vm1565, %v1600
  %s1603 = scalar_lea.vmem %s0, 8
  %v1604 = vld [vmem:[%s1603] sm:$0xf]
  %1606 = vrot.lane.b32.xlu0 %v1604, 69
  %v1607 = vpop.permute.xlu0 %1606
  %1609 = vst.msk [vmem:[#allocation2] sm:$0xf] %vm24, %v1607
  %v1610 = vld [vmem:[%s1603] sm:$0xf]
  %1612 = vrot.lane.b32.xlu0 %v1610, 75
  %v1613 = vpop.permute.xlu0 %1612
  %1615 = vst.msk [vmem:[#allocation2] sm:$0xf] %vm31, %v1613
  %v1616 = vld [vmem:[%s1603] sm:$0xf]
  %1618 = vrot.lane.b32.xlu0 %v1616, 81
  %v1619 = vpop.permute.xlu0 %1618
  %v1620 = vrot.slane %v1619, 4
  %v1621 = vsel %vm38, %v1620, %v1619
  %1623 = vst.msk [vmem:[#allocation2] sm:$0xff] %vm43, %v1621
  %v1624 = vld [vmem:[%s1603] sm:$0xf]
  %1626 = vrot.lane.b32.xlu0 %v1624, 87
  %v1627 = vpop.permute.xlu0 %1626
  %1629 = vst.msk [vmem:[#allocation2 + $0x4] sm:$0xf] %vm50, %v1627
  %v1630 = vld [vmem:[%s1603] sm:$0xf]
  %1632 = vrot.lane.b32.xlu0 %v1630, 93
  %v1633 = vpop.permute.xlu0 %1632
  %1635 = vst.msk [vmem:[#allocation2 + $0x4] sm:$0xf] %vm57, %v1633
  %v1636 = vld [vmem:[%s1603] sm:$0xf]
  %1638 = vrot.lane.b32.xlu0 %v1636, 99
  %v1639 = vpop.permute.xlu0 %1638
  %1641 = vst.msk [vmem:[#allocation2 + $0x4] sm:$0xf] %vm64, %v1639
  %v1642 = vld [vmem:[%s1603] sm:$0xf]
  %1644 = vrot.lane.b32.xlu0 %v1642, 105
  %v1645 = vpop.permute.xlu0 %1644
  %1647 = vst.msk [vmem:[#allocation2 + $0x4] sm:$0xf] %vm71, %v1645
  %v1648 = vld [vmem:[%s1603] sm:$0xf]
  %1650 = vrot.lane.b32.xlu0 %v1648, 111
  %v1651 = vpop.permute.xlu0 %1650
  %1653 = vst.msk [vmem:[#allocation2 + $0x4] sm:$0xf] %vm78, %v1651
  %v1654 = vld [vmem:[%s1603 + $0x4] sm:$0xf]
  %1656 = vrot.lane.b32.xlu0 %v1654, 117
  %v1657 = vpop.permute.xlu0 %1656
  %v1658 = vrot.slane %v1657, 4
  %v1659 = vsel %vm85, %v1658, %v1657
  %1661 = vst.msk [vmem:[#allocation2 + $0x4] sm:$0xff] %vm90, %v1659
  %v1662 = vld [vmem:[%s1603 + $0x4] sm:$0xf]
  %1664 = vrot.lane.b32.xlu0 %v1662, 123
  %v1665 = vpop.permute.xlu0 %1664
  %1667 = vst.msk [vmem:[#allocation2 + $0x8] sm:$0xf] %vm97, %v1665
  %v1668 = vld [vmem:[%s1603 + $0x4] sm:$0xf]
  %1670 = vrot.lane.b32.xlu0 %v1668, 1
  %v1671 = vpop.permute.xlu0 %1670
  %1673 = vst.msk [vmem:[#allocation2 + $0x8] sm:$0xf] %vm104, %v1671
  %v1674 = vld [vmem:[%s1603 + $0x4] sm:$0xf]
  %1676 = vrot.lane.b32.xlu0 %v1674, 7
  %v1677 = vpop.permute.xlu0 %1676
  %1679 = vst.msk [vmem:[#allocation2 + $0x8] sm:$0xf] %vm111, %v1677
  %v1680 = vld [vmem:[%s1603 + $0x4] sm:$0xf]
  %1682 = vrot.lane.b32.xlu0 %v1680, 13
  %v1683 = vpop.permute.xlu0 %1682
  %1685 = vst.msk [vmem:[#allocation2 + $0x8] sm:$0xf] %vm118, %v1683
  %v1686 = vld [vmem:[%s1603 + $0x4] sm:$0xf]
  %1688 = vrot.lane.b32.xlu0 %v1686, 19
  %v1689 = vpop.permute.xlu0 %1688
  %1691 = vst.msk [vmem:[#allocation2 + $0x8] sm:$0xf] %vm125, %v1689
  %v1692 = vld [vmem:[%s1603 + $0x4] sm:$0xf]
  %1694 = vrot.lane.b32.xlu0 %v1692, 25
  %v1695 = vpop.permute.xlu0 %1694
  %v1696 = vrot.slane %v1695, 4
  %v1697 = vsel %vm132, %v1696, %v1695
  %1699 = vst.msk [vmem:[#allocation2 + $0x8] sm:$0xff] %vm137, %v1697
  %v1700 = vld [vmem:[%s1603 + $0x4] sm:$0xf]
  %1702 = vrot.lane.b32.xlu0 %v1700, 31
  %v1703 = vpop.permute.xlu0 %1702
  %1705 = vst.msk [vmem:[#allocation2 + $0xc] sm:$0xf] %vm144, %v1703
  %v1706 = vld [vmem:[#allocation2] sm:$0xff]
  %v1707 = vld [vmem:[#allocation2 + $0x8] sm:$0xf]
  %v1709 = vcombine.high %v1706, %v1706
  %1711 = vst [vmem:[#allocation3] sm:$0xf] %v1706
  %1712 = vst [vmem:[#allocation3 + $0x8] sm:$0xf] %v1709
  %1713 = vst.msk [vmem:[#allocation3 + $0x10] sm:$0xf] %vm153, %v1707
  %v1714 = vld [vmem:[#allocation2] sm:$0xff]
  %v1715 = vld [vmem:[#allocation2 + $0x8] sm:$0xf]
  %v1718 = vcombine.low %v1714, %v1714
  %v1719 = vcombine.low %v1715, %v1715
  %1720 = vrot.lane.b32.xlu0 %v1718, 127
  %v1721 = vpop.permute.xlu0 %1720
  %1722 = vrot.lane.b32.xlu0 %v1714, 127
  %v1723 = vpop.permute.xlu0 %1722
  %1724 = vrot.lane.b32.xlu0 %v1719, 127
  %v1725 = vpop.permute.xlu0 %1724
  %v1726 = vsel %vm167, %v1721, %v1723
  %v1727 = vsel %vm167, %v1723, %v1725
  %1731 = vst [vmem:[#allocation3] sm:$0xf0] %v1726
  %1732 = vst [vmem:[#allocation3 + $0x8] sm:$0xf0] %v1727
  %1733 = vst.msk [vmem:[#allocation3 + $0x10] sm:$0xf0] %vm175, %v1725
  %v1734 = vld [vmem:[#allocation2] sm:$0xff]
  %v1735 = vld [vmem:[#allocation2 + $0x8] sm:$0xf]
  %v1738 = vcombine.high %v1734, %v1734
  %1739 = vrot.lane.b32.xlu0 %v1734, 126
  %v1740 = vpop.permute.xlu0 %1739
  %1741 = vrot.lane.b32.xlu0 %v1738, 126
  %v1742 = vpop.permute.xlu0 %1741
  %1743 = vrot.lane.b32.xlu0 %v1735, 126
  %v1744 = vpop.permute.xlu0 %1743
  %v1745 = vsel %vm188, %v1740, %v1742
  %v1746 = vsel %vm188, %v1742, %v1744
  %1750 = vst [vmem:[#allocation3 + $0x18] sm:$0xf] %v1745
  %1751 = vst [vmem:[#allocation3 + $0x20] sm:$0xf] %v1746
  %1752 = vst.msk [vmem:[#allocation3 + $0x28] sm:$0xf] %vm153, %v1744
  %v1753 = vld [vmem:[#allocation2] sm:$0xff]
  %v1754 = vld [vmem:[#allocation2 + $0x8] sm:$0xf]
  %v1757 = vcombine.low %v1753, %v1753
  %v1758 = vcombine.low %v1754, %v1754
  %1759 = vrot.lane.b32.xlu0 %v1757, 125
  %v1760 = vpop.permute.xlu0 %1759
  %1761 = vrot.lane.b32.xlu0 %v1753, 125
  %v1762 = vpop.permute.xlu0 %1761
  %1763 = vrot.lane.b32.xlu0 %v1758, 125
  %v1764 = vpop.permute.xlu0 %1763
  %v1765 = vsel %vm209, %v1760, %v1762
  %v1766 = vsel %vm209, %v1762, %v1764
  %1770 = vst [vmem:[#allocation3 + $0x18] sm:$0xf0] %v1765
  %1771 = vst [vmem:[#allocation3 + $0x20] sm:$0xf0] %v1766
  %1772 = vst.msk [vmem:[#allocation3 + $0x28] sm:$0xf0] %vm175, %v1764
  %v1773 = vld [vmem:[#allocation2] sm:$0xff]
  %v1774 = vld [vmem:[#allocation2 + $0x8] sm:$0xf]
  %v1777 = vcombine.high %v1773, %v1773
  %1778 = vrot.lane.b32.xlu0 %v1773, 124
  %v1779 = vpop.permute.xlu0 %1778
  %1780 = vrot.lane.b32.xlu0 %v1777, 124
  %v1781 = vpop.permute.xlu0 %1780
  %1782 = vrot.lane.b32.xlu0 %v1774, 124
  %v1783 = vpop.permute.xlu0 %1782
  %v1784 = vsel %vm229, %v1779, %v1781
  %v1785 = vsel %vm229, %v1781, %v1783
  %1789 = vst [vmem:[#allocation3 + $0x30] sm:$0xf] %v1784
  %1790 = vst [vmem:[#allocation3 + $0x38] sm:$0xf] %v1785
  %1791 = vst.msk [vmem:[#allocation3 + $0x40] sm:$0xf] %vm153, %v1783
  %v1792 = vld [vmem:[#allocation2] sm:$0xff]
  %v1793 = vld [vmem:[#allocation2 + $0x8] sm:$0xf]
  %v1796 = vcombine.low %v1792, %v1792
  %v1797 = vcombine.low %v1793, %v1793
  %1798 = vrot.lane.b32.xlu0 %v1796, 123
  %v1799 = vpop.permute.xlu0 %1798
  %1800 = vrot.lane.b32.xlu0 %v1792, 123
  %v1801 = vpop.permute.xlu0 %1800
  %1802 = vrot.lane.b32.xlu0 %v1797, 123
  %v1803 = vpop.permute.xlu0 %1802
  %v1804 = vsel %vm250, %v1799, %v1801
  %v1805 = vsel %vm250, %v1801, %v1803
  %1809 = vst [vmem:[#allocation3 + $0x30] sm:$0xf0] %v1804
  %1810 = vst [vmem:[#allocation3 + $0x38] sm:$0xf0] %v1805
  %1811 = vst.msk [vmem:[#allocation3 + $0x40] sm:$0xf0] %vm175, %v1803
  %v1812 = vld [vmem:[#allocation2] sm:$0xff]
  %v1813 = vld [vmem:[#allocation2 + $0x8] sm:$0xf]
  %v1816 = vcombine.high %v1812, %v1812
  %1817 = vrot.lane.b32.xlu0 %v1812, 122
  %v1818 = vpop.permute.xlu0 %1817
  %1819 = vrot.lane.b32.xlu0 %v1816, 122
  %v1820 = vpop.permute.xlu0 %1819
  %1821 = vrot.lane.b32.xlu0 %v1813, 122
  %v1822 = vpop.permute.xlu0 %1821
  %v1823 = vsel %vm270, %v1818, %v1820
  %v1824 = vsel %vm270, %v1820, %v1822
  %1828 = vst [vmem:[#allocation3 + $0x48] sm:$0xf] %v1823
  %1829 = vst [vmem:[#allocation3 + $0x50] sm:$0xf] %v1824
  %1830 = vst.msk [vmem:[#allocation3 + $0x58] sm:$0xf] %vm153, %v1822
  %v1831 = vld [vmem:[#allocation2] sm:$0xff]
  %v1832 = vld [vmem:[#allocation2 + $0x8] sm:$0xf]
  %v1835 = vcombine.low %v1831, %v1831
  %v1836 = vcombine.low %v1832, %v1832
  %1837 = vrot.lane.b32.xlu0 %v1835, 106
  %v1838 = vpop.permute.xlu0 %1837
  %1839 = vrot.lane.b32.xlu0 %v1831, 106
  %v1840 = vpop.permute.xlu0 %1839
  %1841 = vrot.lane.b32.xlu0 %v1836, 106
  %v1842 = vpop.permute.xlu0 %1841
  %v1843 = vsel %vm291, %v1838, %v1840
  %v1844 = vsel %vm291, %v1840, %v1842
  %1848 = vst [vmem:[#allocation3 + $0x48] sm:$0xf0] %v1843
  %1849 = vst [vmem:[#allocation3 + $0x50] sm:$0xf0] %v1844
  %1850 = vst.msk [vmem:[#allocation3 + $0x58] sm:$0xf0] %vm175, %v1842
  %v1851 = vld [vmem:[#allocation2] sm:$0xff]
  %v1852 = vld [vmem:[#allocation2 + $0x8] sm:$0xf]
  %v1855 = vcombine.high %v1851, %v1851
  %1856 = vrot.lane.b32.xlu0 %v1851, 105
  %v1857 = vpop.permute.xlu0 %1856
  %1858 = vrot.lane.b32.xlu0 %v1855, 105
  %v1859 = vpop.permute.xlu0 %1858
  %1860 = vrot.lane.b32.xlu0 %v1852, 105
  %v1861 = vpop.permute.xlu0 %1860
  %v1862 = vsel %vm311, %v1857, %v1859
  %v1863 = vsel %vm311, %v1859, %v1861
  %1867 = vst [vmem:[#allocation3 + $0x60] sm:$0xf] %v1862
  %1868 = vst [vmem:[#allocation3 + $0x68] sm:$0xf] %v1863
  %1869 = vst.msk [vmem:[#allocation3 + $0x70] sm:$0xf] %vm153, %v1861
  %v1870 = vld [vmem:[#allocation2] sm:$0xff]
  %v1871 = vld [vmem:[#allocation2 + $0x8] sm:$0xf]
  %v1874 = vcombine.low %v1870, %v1870
  %v1875 = vcombine.low %v1871, %v1871
  %1876 = vrot.lane.b32.xlu0 %v1874, 104
  %v1877 = vpop.permute.xlu0 %1876
  %1878 = vrot.lane.b32.xlu0 %v1870, 104
  %v1879 = vpop.permute.xlu0 %1878
  %1880 = vrot.lane.b32.xlu0 %v1875, 104
  %v1881 = vpop.permute.xlu0 %1880
  %v1882 = vsel %vm332, %v1877, %v1879
  %v1883 = vsel %vm332, %v1879, %v1881
  %1887 = vst [vmem:[#allocation3 + $0x60] sm:$0xf0] %v1882
  %1888 = vst [vmem:[#allocation3 + $0x68] sm:$0xf0] %v1883
  %1889 = vst.msk [vmem:[#allocation3 + $0x70] sm:$0xf0] %vm175, %v1881
  %v1890 = vld [vmem:[#allocation2] sm:$0xff]
  %v1891 = vld [vmem:[#allocation2 + $0x8] sm:$0xf]
  %v1894 = vcombine.high %v1890, %v1890
  %1895 = vrot.lane.b32.xlu0 %v1890, 103
  %v1896 = vpop.permute.xlu0 %1895
  %1897 = vrot.lane.b32.xlu0 %v1894, 103
  %v1898 = vpop.permute.xlu0 %1897
  %1899 = vrot.lane.b32.xlu0 %v1891, 103
  %v1900 = vpop.permute.xlu0 %1899
  %v1901 = vsel %vm352, %v1896, %v1898
  %v1902 = vsel %vm352, %v1898, %v1900
  %1906 = vst [vmem:[#allocation3 + $0x78] sm:$0xf] %v1901
  %1907 = vst [vmem:[#allocation3 + $0x80] sm:$0xf] %v1902
  %1908 = vst.msk [vmem:[#allocation3 + $0x88] sm:$0xf] %vm153, %v1900
  %v1909 = vld [vmem:[#allocation2] sm:$0xff]
  %v1910 = vld [vmem:[#allocation2 + $0x8] sm:$0xf]
  %v1913 = vcombine.low %v1909, %v1909
  %v1914 = vcombine.low %v1910, %v1910
  %1915 = vrot.lane.b32.xlu0 %v1913, 102
  %v1916 = vpop.permute.xlu0 %1915
  %1917 = vrot.lane.b32.xlu0 %v1909, 102
  %v1918 = vpop.permute.xlu0 %1917
  %1919 = vrot.lane.b32.xlu0 %v1914, 102
  %v1920 = vpop.permute.xlu0 %1919
  %v1921 = vsel %vm373, %v1916, %v1918
  %v1922 = vsel %vm373, %v1918, %v1920
  %1926 = vst [vmem:[#allocation3 + $0x78] sm:$0xf0] %v1921
  %1927 = vst [vmem:[#allocation3 + $0x80] sm:$0xf0] %v1922
  %1928 = vst.msk [vmem:[#allocation3 + $0x88] sm:$0xf0] %vm175, %v1920
  %v1929 = vld [vmem:[#allocation2] sm:$0xff]
  %v1930 = vld [vmem:[#allocation2 + $0x8] sm:$0xf]
  %v1933 = vcombine.high %v1929, %v1929
  %1934 = vrot.lane.b32.xlu0 %v1929, 101
  %v1935 = vpop.permute.xlu0 %1934
  %1936 = vrot.lane.b32.xlu0 %v1933, 101
  %v1937 = vpop.permute.xlu0 %1936
  %1938 = vrot.lane.b32.xlu0 %v1930, 101
  %v1939 = vpop.permute.xlu0 %1938
  %v1940 = vsel %vm393, %v1935, %v1937
  %v1941 = vsel %vm393, %v1937, %v1939
  %1945 = vst [vmem:[#allocation3 + $0x90] sm:$0xf] %v1940
  %1946 = vst [vmem:[#allocation3 + $0x98] sm:$0xf] %v1941
  %1947 = vst.msk [vmem:[#allocation3 + $0xa0] sm:$0xf] %vm153, %v1939
  %v1948 = vld [vmem:[#allocation2] sm:$0xff]
  %v1949 = vld [vmem:[#allocation2 + $0x8] sm:$0xf]
  %v1952 = vcombine.low %v1948, %v1948
  %v1953 = vcombine.low %v1949, %v1949
  %1954 = vrot.lane.b32.xlu0 %v1952, 100
  %v1955 = vpop.permute.xlu0 %1954
  %1956 = vrot.lane.b32.xlu0 %v1948, 100
  %v1957 = vpop.permute.xlu0 %1956
  %1958 = vrot.lane.b32.xlu0 %v1953, 100
  %v1959 = vpop.permute.xlu0 %1958
  %v1960 = vsel %vm414, %v1955, %v1957
  %v1961 = vsel %vm414, %v1957, %v1959
  %1965 = vst [vmem:[#allocation3 + $0x90] sm:$0xf0] %v1960
  %1966 = vst [vmem:[#allocation3 + $0x98] sm:$0xf0] %v1961
  %1967 = vst.msk [vmem:[#allocation3 + $0xa0] sm:$0xf0] %vm175, %v1959
  %v1968 = vld [vmem:[#allocation2] sm:$0xff]
  %v1969 = vld [vmem:[#allocation2 + $0x8] sm:$0xff]
  %v1972 = vcombine.high %v1968, %v1968
  %v1973 = vcombine.high %v1969, %v1969
  %1974 = vrot.lane.b32.xlu0 %v1968, 84
  %v1975 = vpop.permute.xlu0 %1974
  %1976 = vrot.lane.b32.xlu0 %v1972, 84
  %v1977 = vpop.permute.xlu0 %1976
  %1978 = vrot.lane.b32.xlu0 %v1969, 84
  %v1979 = vpop.permute.xlu0 %1978
  %1980 = vrot.lane.b32.xlu0 %v1973, 84
  %v1981 = vpop.permute.xlu0 %1980
  %v1982 = vsel %vm437, %v1975, %v1977
  %v1983 = vsel %vm437, %v1977, %v1979
  %v1984 = vsel %vm437, %v1979, %v1981
  %1988 = vst [vmem:[#allocation3 + $0xa8] sm:$0xf] %v1982
  %1989 = vst [vmem:[#allocation3 + $0xb0] sm:$0xf] %v1983
  %1990 = vst.msk [vmem:[#allocation3 + $0xb8] sm:$0xf] %vm153, %v1984
  %v1991 = vld [vmem:[#allocation2] sm:$0xff]
  %v1992 = vld [vmem:[#allocation2 + $0x8] sm:$0xff]
  %v1995 = vcombine.low %v1991, %v1991
  %v1996 = vcombine.low %v1992, %v1992
  %1997 = vrot.lane.b32.xlu0 %v1995, 83
  %v1998 = vpop.permute.xlu0 %1997
  %1999 = vrot.lane.b32.xlu0 %v1991, 83
  %v2000 = vpop.permute.xlu0 %1999
  %2001 = vrot.lane.b32.xlu0 %v1996, 83
  %v2002 = vpop.permute.xlu0 %2001
  %2003 = vrot.lane.b32.xlu0 %v1992, 83
  %v2004 = vpop.permute.xlu0 %2003
  %v2005 = vsel %vm461, %v1998, %v2000
  %v2006 = vsel %vm461, %v2000, %v2002
  %v2007 = vsel %vm461, %v2002, %v2004
  %2011 = vst [vmem:[#allocation3 + $0xa8] sm:$0xf0] %v2005
  %2012 = vst [vmem:[#allocation3 + $0xb0] sm:$0xf0] %v2006
  %2013 = vst.msk [vmem:[#allocation3 + $0xb8] sm:$0xf0] %vm175, %v2007
  %v2014 = vld [vmem:[#allocation2] sm:$0xff]
  %v2015 = vld [vmem:[#allocation2 + $0x8] sm:$0xff]
  %v2018 = vcombine.high %v2014, %v2014
  %v2019 = vcombine.high %v2015, %v2015
  %2020 = vrot.lane.b32.xlu0 %v2014, 82
  %v2021 = vpop.permute.xlu0 %2020
  %2022 = vrot.lane.b32.xlu0 %v2018, 82
  %v2023 = vpop.permute.xlu0 %2022
  %2024 = vrot.lane.b32.xlu0 %v2015, 82
  %v2025 = vpop.permute.xlu0 %2024
  %2026 = vrot.lane.b32.xlu0 %v2019, 82
  %v2027 = vpop.permute.xlu0 %2026
  %v2028 = vsel %vm485, %v2021, %v2023
  %v2029 = vsel %vm485, %v2023, %v2025
  %v2030 = vsel %vm485, %v2025, %v2027
  %2034 = vst [vmem:[#allocation3 + $0xc0] sm:$0xf] %v2028
  %2035 = vst [vmem:[#allocation3 + $0xc8] sm:$0xf] %v2029
  %2036 = vst.msk [vmem:[#allocation3 + $0xd0] sm:$0xf] %vm153, %v2030
  %v2037 = vld [vmem:[#allocation2] sm:$0xff]
  %v2038 = vld [vmem:[#allocation2 + $0x8] sm:$0xff]
  %v2041 = vcombine.low %v2037, %v2037
  %v2042 = vcombine.low %v2038, %v2038
  %2043 = vrot.lane.b32.xlu0 %v2041, 81
  %v2044 = vpop.permute.xlu0 %2043
  %2045 = vrot.lane.b32.xlu0 %v2037, 81
  %v2046 = vpop.permute.xlu0 %2045
  %2047 = vrot.lane.b32.xlu0 %v2042, 81
  %v2048 = vpop.permute.xlu0 %2047
  %2049 = vrot.lane.b32.xlu0 %v2038, 81
  %v2050 = vpop.permute.xlu0 %2049
  %v2051 = vsel %vm38, %v2044, %v2046
  %v2052 = vsel %vm38, %v2046, %v2048
  %v2053 = vsel %vm38, %v2048, %v2050
  %2057 = vst [vmem:[#allocation3 + $0xc0] sm:$0xf0] %v2051
  %2058 = vst [vmem:[#allocation3 + $0xc8] sm:$0xf0] %v2052
  %2059 = vst.msk [vmem:[#allocation3 + $0xd0] sm:$0xf0] %vm175, %v2053
  %v2060 = vld [vmem:[#allocation2] sm:$0xff]
  %v2061 = vld [vmem:[#allocation2 + $0x8] sm:$0xff]
  %v2064 = vcombine.high %v2060, %v2060
  %v2065 = vcombine.high %v2061, %v2061
  %2066 = vrot.lane.b32.xlu0 %v2060, 80
  %v2067 = vpop.permute.xlu0 %2066
  %2068 = vrot.lane.b32.xlu0 %v2064, 80
  %v2069 = vpop.permute.xlu0 %2068
  %2070 = vrot.lane.b32.xlu0 %v2061, 80
  %v2071 = vpop.permute.xlu0 %2070
  %2072 = vrot.lane.b32.xlu0 %v2065, 80
  %v2073 = vpop.permute.xlu0 %2072
  %v2074 = vsel %vm532, %v2067, %v2069
  %v2075 = vsel %vm532, %v2069, %v2071
  %v2076 = vsel %vm532, %v2071, %v2073
  %2080 = vst [vmem:[#allocation3 + $0xd8] sm:$0xf] %v2074
  %2081 = vst [vmem:[#allocation3 + $0xe0] sm:$0xf] %v2075
  %2082 = vst.msk [vmem:[#allocation3 + $0xe8] sm:$0xf] %vm153, %v2076
  %v2083 = vld [vmem:[#allocation2] sm:$0xff]
  %v2084 = vld [vmem:[#allocation2 + $0x8] sm:$0xff]
  %v2087 = vcombine.low %v2083, %v2083
  %v2088 = vcombine.low %v2084, %v2084
  %2089 = vrot.lane.b32.xlu0 %v2087, 79
  %v2090 = vpop.permute.xlu0 %2089
  %2091 = vrot.lane.b32.xlu0 %v2083, 79
  %v2092 = vpop.permute.xlu0 %2091
  %2093 = vrot.lane.b32.xlu0 %v2088, 79
  %v2094 = vpop.permute.xlu0 %2093
  %2095 = vrot.lane.b32.xlu0 %v2084, 79
  %v2096 = vpop.permute.xlu0 %2095
  %v2097 = vsel %vm556, %v2090, %v2092
  %v2098 = vsel %vm556, %v2092, %v2094
  %v2099 = vsel %vm556, %v2094, %v2096
  %2103 = vst [vmem:[#allocation3 + $0xd8] sm:$0xf0] %v2097
  %2104 = vst [vmem:[#allocation3 + $0xe0] sm:$0xf0] %v2098
  %2105 = vst.msk [vmem:[#allocation3 + $0xe8] sm:$0xf0] %vm175, %v2099
  %v2106 = vld [vmem:[#allocation2] sm:$0xff]
  %v2107 = vld [vmem:[#allocation2 + $0x8] sm:$0xff]
  %v2110 = vcombine.high %v2106, %v2106
  %v2111 = vcombine.high %v2107, %v2107
  %2112 = vrot.lane.b32.xlu0 %v2106, 78
  %v2113 = vpop.permute.xlu0 %2112
  %2114 = vrot.lane.b32.xlu0 %v2110, 78
  %v2115 = vpop.permute.xlu0 %2114
  %2116 = vrot.lane.b32.xlu0 %v2107, 78
  %v2117 = vpop.permute.xlu0 %2116
  %2118 = vrot.lane.b32.xlu0 %v2111, 78
  %v2119 = vpop.permute.xlu0 %2118
  %v2120 = vsel %vm580, %v2113, %v2115
  %v2121 = vsel %vm580, %v2115, %v2117
  %v2122 = vsel %vm580, %v2117, %v2119
  %2126 = vst [vmem:[#allocation3 + $0xf0] sm:$0xf] %v2120
  %2127 = vst [vmem:[#allocation3 + $0xf8] sm:$0xf] %v2121
  %2128 = vst.msk [vmem:[#allocation3 + $0x100] sm:$0xf] %vm153, %v2122
  %v2129 = vld [vmem:[#allocation2] sm:$0xff]
  %v2130 = vld [vmem:[#allocation2 + $0x8] sm:$0xff]
  %v2133 = vcombine.low %v2129, %v2129
  %v2134 = vcombine.low %v2130, %v2130
  %2135 = vrot.lane.b32.xlu0 %v2133, 62
  %v2136 = vpop.permute.xlu0 %2135
  %2137 = vrot.lane.b32.xlu0 %v2129, 62
  %v2138 = vpop.permute.xlu0 %2137
  %2139 = vrot.lane.b32.xlu0 %v2134, 62
  %v2140 = vpop.permute.xlu0 %2139
  %2141 = vrot.lane.b32.xlu0 %v2130, 62
  %v2142 = vpop.permute.xlu0 %2141
  %v2143 = vsel %vm604, %v2136, %v2138
  %v2144 = vsel %vm604, %v2138, %v2140
  %v2145 = vsel %vm604, %v2140, %v2142
  %2149 = vst [vmem:[#allocation3 + $0xf0] sm:$0xf0] %v2143
  %2150 = vst [vmem:[#allocation3 + $0xf8] sm:$0xf0] %v2144
  %2151 = vst.msk [vmem:[#allocation3 + $0x100] sm:$0xf0] %vm175, %v2145
  %v2152 = vld [vmem:[#allocation2] sm:$0xff]
  %v2153 = vld [vmem:[#allocation2 + $0x8] sm:$0xff]
  %v2156 = vcombine.high %v2152, %v2152
  %v2157 = vcombine.high %v2153, %v2153
  %2158 = vrot.lane.b32.xlu0 %v2152, 61
  %v2159 = vpop.permute.xlu0 %2158
  %2160 = vrot.lane.b32.xlu0 %v2156, 61
  %v2161 = vpop.permute.xlu0 %2160
  %2162 = vrot.lane.b32.xlu0 %v2153, 61
  %v2163 = vpop.permute.xlu0 %2162
  %2164 = vrot.lane.b32.xlu0 %v2157, 61
  %v2165 = vpop.permute.xlu0 %2164
  %v2166 = vsel %vm628, %v2159, %v2161
  %v2167 = vsel %vm628, %v2161, %v2163
  %v2168 = vsel %vm628, %v2163, %v2165
  %2172 = vst [vmem:[#allocation3 + $0x108] sm:$0xf] %v2166
  %2173 = vst [vmem:[#allocation3 + $0x110] sm:$0xf] %v2167
  %2174 = vst.msk [vmem:[#allocation3 + $0x118] sm:$0xf] %vm153, %v2168
  %v2175 = vld [vmem:[#allocation2] sm:$0xff]
  %v2176 = vld [vmem:[#allocation2 + $0x8] sm:$0xff]
  %v2179 = vcombine.low %v2175, %v2175
  %v2180 = vcombine.low %v2176, %v2176
  %2181 = vrot.lane.b32.xlu0 %v2179, 60
  %v2182 = vpop.permute.xlu0 %2181
  %2183 = vrot.lane.b32.xlu0 %v2175, 60
  %v2184 = vpop.permute.xlu0 %2183
  %2185 = vrot.lane.b32.xlu0 %v2180, 60
  %v2186 = vpop.permute.xlu0 %2185
  %2187 = vrot.lane.b32.xlu0 %v2176, 60
  %v2188 = vpop.permute.xlu0 %2187
  %v2189 = vsel %vm652, %v2182, %v2184
  %v2190 = vsel %vm652, %v2184, %v2186
  %v2191 = vsel %vm652, %v2186, %v2188
  %2195 = vst [vmem:[#allocation3 + $0x108] sm:$0xf0] %v2189
  %2196 = vst [vmem:[#allocation3 + $0x110] sm:$0xf0] %v2190
  %2197 = vst.msk [vmem:[#allocation3 + $0x118] sm:$0xf0] %vm175, %v2191
  %v2198 = vld [vmem:[#allocation2] sm:$0xff]
  %v2199 = vld [vmem:[#allocation2 + $0x8] sm:$0xff]
  %v2202 = vcombine.high %v2198, %v2198
  %v2203 = vcombine.high %v2199, %v2199
  %2204 = vrot.lane.b32.xlu0 %v2198, 59
  %v2205 = vpop.permute.xlu0 %2204
  %2206 = vrot.lane.b32.xlu0 %v2202, 59
  %v2207 = vpop.permute.xlu0 %2206
  %2208 = vrot.lane.b32.xlu0 %v2199, 59
  %v2209 = vpop.permute.xlu0 %2208
  %2210 = vrot.lane.b32.xlu0 %v2203, 59
  %v2211 = vpop.permute.xlu0 %2210
  %v2212 = vsel %vm676, %v2205, %v2207
  %v2213 = vsel %vm676, %v2207, %v2209
  %v2214 = vsel %vm676, %v2209, %v2211
  %2218 = vst [vmem:[#allocation3 + $0x120] sm:$0xf] %v2212
  %2219 = vst [vmem:[#allocation3 + $0x128] sm:$0xf] %v2213
  %2220 = vst.msk [vmem:[#allocation3 + $0x130] sm:$0xf] %vm153, %v2214
  %v2221 = vld [vmem:[#allocation2] sm:$0xff]
  %v2222 = vld [vmem:[#allocation2 + $0x8] sm:$0xff]
  %v2225 = vcombine.low %v2221, %v2221
  %v2226 = vcombine.low %v2222, %v2222
  %2227 = vrot.lane.b32.xlu0 %v2225, 58
  %v2228 = vpop.permute.xlu0 %2227
  %2229 = vrot.lane.b32.xlu0 %v2221, 58
  %v2230 = vpop.permute.xlu0 %2229
  %2231 = vrot.lane.b32.xlu0 %v2226, 58
  %v2232 = vpop.permute.xlu0 %2231
  %2233 = vrot.lane.b32.xlu0 %v2222, 58
  %v2234 = vpop.permute.xlu0 %2233
  %v2235 = vsel %vm700, %v2228, %v2230
  %v2236 = vsel %vm700, %v2230, %v2232
  %v2237 = vsel %vm700, %v2232, %v2234
  %2241 = vst [vmem:[#allocation3 + $0x120] sm:$0xf0] %v2235
  %2242 = vst [vmem:[#allocation3 + $0x128] sm:$0xf0] %v2236
  %2243 = vst.msk [vmem:[#allocation3 + $0x130] sm:$0xf0] %vm175, %v2237
  %v2244 = vld [vmem:[#allocation2] sm:$0xff]
  %v2245 = vld [vmem:[#allocation2 + $0x8] sm:$0xff]
  %v2248 = vcombine.high %v2244, %v2244
  %v2249 = vcombine.high %v2245, %v2245
  %2250 = vrot.lane.b32.xlu0 %v2244, 57
  %v2251 = vpop.permute.xlu0 %2250
  %2252 = vrot.lane.b32.xlu0 %v2248, 57
  %v2253 = vpop.permute.xlu0 %2252
  %2254 = vrot.lane.b32.xlu0 %v2245, 57
  %v2255 = vpop.permute.xlu0 %2254
  %2256 = vrot.lane.b32.xlu0 %v2249, 57
  %v2257 = vpop.permute.xlu0 %2256
  %v2258 = vsel %vm724, %v2251, %v2253
  %v2259 = vsel %vm724, %v2253, %v2255
  %v2260 = vsel %vm724, %v2255, %v2257
  %2264 = vst [vmem:[#allocation3 + $0x138] sm:$0xf] %v2258
  %2265 = vst [vmem:[#allocation3 + $0x140] sm:$0xf] %v2259
  %2266 = vst.msk [vmem:[#allocation3 + $0x148] sm:$0xf] %vm153, %v2260
  %v2267 = vld [vmem:[#allocation2] sm:$0xff]
  %v2268 = vld [vmem:[#allocation2 + $0x8] sm:$0xff]
  %v2271 = vcombine.low %v2267, %v2267
  %v2272 = vcombine.low %v2268, %v2268
  %2273 = vrot.lane.b32.xlu0 %v2271, 56
  %v2274 = vpop.permute.xlu0 %2273
  %2275 = vrot.lane.b32.xlu0 %v2267, 56
  %v2276 = vpop.permute.xlu0 %2275
  %2277 = vrot.lane.b32.xlu0 %v2272, 56
  %v2278 = vpop.permute.xlu0 %2277
  %2279 = vrot.lane.b32.xlu0 %v2268, 56
  %v2280 = vpop.permute.xlu0 %2279
  %v2281 = vsel %vm748, %v2274, %v2276
  %v2282 = vsel %vm748, %v2276, %v2278
  %v2283 = vsel %vm748, %v2278, %v2280
  %2287 = vst [vmem:[#allocation3 + $0x138] sm:$0xf0] %v2281
  %2288 = vst [vmem:[#allocation3 + $0x140] sm:$0xf0] %v2282
  %2289 = vst.msk [vmem:[#allocation3 + $0x148] sm:$0xf0] %vm175, %v2283
  %v2290 = vld [vmem:[#allocation2] sm:$0xff]
  %v2291 = vld [vmem:[#allocation2 + $0x8] sm:$0xff]
  %v2294 = vcombine.high %v2290, %v2290
  %v2295 = vcombine.high %v2291, %v2291
  %2296 = vrot.lane.b32.xlu0 %v2290, 40
  %v2297 = vpop.permute.xlu0 %2296
  %2298 = vrot.lane.b32.xlu0 %v2294, 40
  %v2299 = vpop.permute.xlu0 %2298
  %2300 = vrot.lane.b32.xlu0 %v2291, 40
  %v2301 = vpop.permute.xlu0 %2300
  %2302 = vrot.lane.b32.xlu0 %v2295, 40
  %v2303 = vpop.permute.xlu0 %2302
  %v2304 = vsel %vm772, %v2297, %v2299
  %v2305 = vsel %vm772, %v2299, %v2301
  %v2306 = vsel %vm772, %v2301, %v2303
  %2310 = vst [vmem:[#allocation3 + $0x150] sm:$0xf] %v2304
  %2311 = vst [vmem:[#allocation3 + $0x158] sm:$0xf] %v2305
  %2312 = vst.msk [vmem:[#allocation3 + $0x160] sm:$0xf] %vm153, %v2306
  %v2313 = vld [vmem:[#allocation2] sm:$0xff]
  %v2314 = vld [vmem:[#allocation2 + $0x8] sm:$0xff]
  %v2317 = vcombine.low %v2313, %v2313
  %v2318 = vcombine.low %v2314, %v2314
  %2319 = vrot.lane.b32.xlu0 %v2317, 39
  %v2320 = vpop.permute.xlu0 %2319
  %2321 = vrot.lane.b32.xlu0 %v2313, 39
  %v2322 = vpop.permute.xlu0 %2321
  %2323 = vrot.lane.b32.xlu0 %v2318, 39
  %v2324 = vpop.permute.xlu0 %2323
  %2325 = vrot.lane.b32.xlu0 %v2314, 39
  %v2326 = vpop.permute.xlu0 %2325
  %v2327 = vsel %vm796, %v2320, %v2322
  %v2328 = vsel %vm796, %v2322, %v2324
  %v2329 = vsel %vm796, %v2324, %v2326
  %2333 = vst [vmem:[#allocation3 + $0x150] sm:$0xf0] %v2327
  %2334 = vst [vmem:[#allocation3 + $0x158] sm:$0xf0] %v2328
  %2335 = vst.msk [vmem:[#allocation3 + $0x160] sm:$0xf0] %vm175, %v2329
  %v2336 = vld [vmem:[#allocation2] sm:$0xff]
  %v2337 = vld [vmem:[#allocation2 + $0x8] sm:$0xff]
  %v2340 = vcombine.high %v2336, %v2336
  %v2341 = vcombine.high %v2337, %v2337
  %2342 = vrot.lane.b32.xlu0 %v2336, 38
  %v2343 = vpop.permute.xlu0 %2342
  %2344 = vrot.lane.b32.xlu0 %v2340, 38
  %v2345 = vpop.permute.xlu0 %2344
  %2346 = vrot.lane.b32.xlu0 %v2337, 38
  %v2347 = vpop.permute.xlu0 %2346
  %2348 = vrot.lane.b32.xlu0 %v2341, 38
  %v2349 = vpop.permute.xlu0 %2348
  %v2350 = vsel %vm820, %v2343, %v2345
  %v2351 = vsel %vm820, %v2345, %v2347
  %v2352 = vsel %vm820, %v2347, %v2349
  %2356 = vst [vmem:[#allocation3 + $0x168] sm:$0xf] %v2350
  %2357 = vst [vmem:[#allocation3 + $0x170] sm:$0xf] %v2351
  %2358 = vst.msk [vmem:[#allocation3 + $0x178] sm:$0xf] %vm153, %v2352
  %v2359 = vld [vmem:[#allocation2] sm:$0xff]
  %v2360 = vld [vmem:[#allocation2 + $0x8] sm:$0xff]
  %v2363 = vcombine.low %v2359, %v2359
  %v2364 = vcombine.low %v2360, %v2360
  %2365 = vrot.lane.b32.xlu0 %v2363, 37
  %v2366 = vpop.permute.xlu0 %2365
  %2367 = vrot.lane.b32.xlu0 %v2359, 37
  %v2368 = vpop.permute.xlu0 %2367
  %2369 = vrot.lane.b32.xlu0 %v2364, 37
  %v2370 = vpop.permute.xlu0 %2369
  %2371 = vrot.lane.b32.xlu0 %v2360, 37
  %v2372 = vpop.permute.xlu0 %2371
  %v2373 = vsel %vm844, %v2366, %v2368
  %v2374 = vsel %vm844, %v2368, %v2370
  %v2375 = vsel %vm844, %v2370, %v2372
  %2379 = vst [vmem:[#allocation3 + $0x168] sm:$0xf0] %v2373
  %2380 = vst [vmem:[#allocation3 + $0x170] sm:$0xf0] %v2374
  %2381 = vst.msk [vmem:[#allocation3 + $0x178] sm:$0xf0] %vm175, %v2375
  %v2382 = vld [vmem:[#allocation2] sm:$0xff]
  %v2383 = vld [vmem:[#allocation2 + $0x8] sm:$0xff]
  %v2386 = vcombine.high %v2382, %v2382
  %v2387 = vcombine.high %v2383, %v2383
  %2388 = vrot.lane.b32.xlu0 %v2382, 36
  %v2389 = vpop.permute.xlu0 %2388
  %2390 = vrot.lane.b32.xlu0 %v2386, 36
  %v2391 = vpop.permute.xlu0 %2390
  %2392 = vrot.lane.b32.xlu0 %v2383, 36
  %v2393 = vpop.permute.xlu0 %2392
  %2394 = vrot.lane.b32.xlu0 %v2387, 36
  %v2395 = vpop.permute.xlu0 %2394
  %v2396 = vsel %vm868, %v2389, %v2391
  %v2397 = vsel %vm868, %v2391, %v2393
  %v2398 = vsel %vm868, %v2393, %v2395
  %2402 = vst [vmem:[#allocation3 + $0x180] sm:$0xf] %v2396
  %2403 = vst [vmem:[#allocation3 + $0x188] sm:$0xf] %v2397
  %2404 = vst.msk [vmem:[#allocation3 + $0x190] sm:$0xf] %vm153, %v2398
  %v2405 = vld [vmem:[#allocation2] sm:$0xff]
  %v2406 = vld [vmem:[#allocation2 + $0x8] sm:$0xff]
  %v2409 = vcombine.low %v2405, %v2405
  %v2410 = vcombine.low %v2406, %v2406
  %2411 = vrot.lane.b32.xlu0 %v2409, 35
  %v2412 = vpop.permute.xlu0 %2411
  %2413 = vrot.lane.b32.xlu0 %v2405, 35
  %v2414 = vpop.permute.xlu0 %2413
  %2415 = vrot.lane.b32.xlu0 %v2410, 35
  %v2416 = vpop.permute.xlu0 %2415
  %2417 = vrot.lane.b32.xlu0 %v2406, 35
  %v2418 = vpop.permute.xlu0 %2417
  %v2419 = vsel %vm892, %v2412, %v2414
  %v2420 = vsel %vm892, %v2414, %v2416
  %v2421 = vsel %vm892, %v2416, %v2418
  %2425 = vst [vmem:[#allocation3 + $0x180] sm:$0xf0] %v2419
  %2426 = vst [vmem:[#allocation3 + $0x188] sm:$0xf0] %v2420
  %2427 = vst.msk [vmem:[#allocation3 + $0x190] sm:$0xf0] %vm175, %v2421
  %v2428 = vld [vmem:[#allocation2] sm:$0xff]
  %v2429 = vld [vmem:[#allocation2 + $0x8] sm:$0xff]
  %v2432 = vcombine.high %v2428, %v2428
  %v2433 = vcombine.high %v2429, %v2429
  %2434 = vrot.lane.b32.xlu0 %v2428, 34
  %v2435 = vpop.permute.xlu0 %2434
  %2436 = vrot.lane.b32.xlu0 %v2432, 34
  %v2437 = vpop.permute.xlu0 %2436
  %2438 = vrot.lane.b32.xlu0 %v2429, 34
  %v2439 = vpop.permute.xlu0 %2438
  %2440 = vrot.lane.b32.xlu0 %v2433, 34
  %v2441 = vpop.permute.xlu0 %2440
  %v2442 = vsel %vm916, %v2435, %v2437
  %v2443 = vsel %vm916, %v2437, %v2439
  %v2444 = vsel %vm916, %v2439, %v2441
  %2448 = vst [vmem:[#allocation3 + $0x198] sm:$0xf] %v2442
  %2449 = vst [vmem:[#allocation3 + $0x1a0] sm:$0xf] %v2443
  %2450 = vst.msk [vmem:[#allocation3 + $0x1a8] sm:$0xf] %vm153, %v2444
  %v2451 = vld [vmem:[#allocation2] sm:$0xff]
  %v2452 = vld [vmem:[#allocation2 + $0x8] sm:$0xff]
  %v2455 = vcombine.low %v2451, %v2451
  %v2456 = vcombine.low %v2452, %v2452
  %2457 = vrot.lane.b32.xlu0 %v2455, 18
  %v2458 = vpop.permute.xlu0 %2457
  %2459 = vrot.lane.b32.xlu0 %v2451, 18
  %v2460 = vpop.permute.xlu0 %2459
  %2461 = vrot.lane.b32.xlu0 %v2456, 18
  %v2462 = vpop.permute.xlu0 %2461
  %2463 = vrot.lane.b32.xlu0 %v2452, 18
  %v2464 = vpop.permute.xlu0 %2463
  %v2465 = vsel %vm940, %v2458, %v2460
  %v2466 = vsel %vm940, %v2460, %v2462
  %v2467 = vsel %vm940, %v2462, %v2464
  %2471 = vst [vmem:[#allocation3 + $0x198] sm:$0xf0] %v2465
  %2472 = vst [vmem:[#allocation3 + $0x1a0] sm:$0xf0] %v2466
  %2473 = vst.msk [vmem:[#allocation3 + $0x1a8] sm:$0xf0] %vm175, %v2467
  %v2474 = vld [vmem:[#allocation2] sm:$0xff]
  %v2475 = vld [vmem:[#allocation2 + $0x8] sm:$0xff]
  %v2478 = vcombine.high %v2474, %v2474
  %v2479 = vcombine.high %v2475, %v2475
  %2480 = vrot.lane.b32.xlu0 %v2474, 17
  %v2481 = vpop.permute.xlu0 %2480
  %2482 = vrot.lane.b32.xlu0 %v2478, 17
  %v2483 = vpop.permute.xlu0 %2482
  %2484 = vrot.lane.b32.xlu0 %v2475, 17
  %v2485 = vpop.permute.xlu0 %2484
  %2486 = vrot.lane.b32.xlu0 %v2479, 17
  %v2487 = vpop.permute.xlu0 %2486
  %v2488 = vsel %vm964, %v2481, %v2483
  %v2489 = vsel %vm964, %v2483, %v2485
  %v2490 = vsel %vm964, %v2485, %v2487
  %2494 = vst [vmem:[#allocation3 + $0x1b0] sm:$0xf] %v2488
  %2495 = vst [vmem:[#allocation3 + $0x1b8] sm:$0xf] %v2489
  %2496 = vst.msk [vmem:[#allocation3 + $0x1c0] sm:$0xf] %vm153, %v2490
  %v2497 = vld [vmem:[#allocation2] sm:$0xff]
  %v2498 = vld [vmem:[#allocation2 + $0x8] sm:$0xff]
  %v2501 = vcombine.low %v2497, %v2497
  %v2502 = vcombine.low %v2498, %v2498
  %2503 = vrot.lane.b32.xlu0 %v2501, 16
  %v2504 = vpop.permute.xlu0 %2503
  %2505 = vrot.lane.b32.xlu0 %v2497, 16
  %v2506 = vpop.permute.xlu0 %2505
  %2507 = vrot.lane.b32.xlu0 %v2502, 16
  %v2508 = vpop.permute.xlu0 %2507
  %2509 = vrot.lane.b32.xlu0 %v2498, 16
  %v2510 = vpop.permute.xlu0 %2509
  %v2511 = vsel %vm988, %v2504, %v2506
  %v2512 = vsel %vm988, %v2506, %v2508
  %v2513 = vsel %vm988, %v2508, %v2510
  %2517 = vst [vmem:[#allocation3 + $0x1b0] sm:$0xf0] %v2511
  %2518 = vst [vmem:[#allocation3 + $0x1b8] sm:$0xf0] %v2512
  %2519 = vst.msk [vmem:[#allocation3 + $0x1c0] sm:$0xf0] %vm175, %v2513
  %v2520 = vld [vmem:[#allocation2] sm:$0xff]
  %v2521 = vld [vmem:[#allocation2 + $0x8] sm:$0xff]
  %v2524 = vcombine.high %v2520, %v2520
  %v2525 = vcombine.high %v2521, %v2521
  %2526 = vrot.lane.b32.xlu0 %v2520, 15
  %v2527 = vpop.permute.xlu0 %2526
  %2528 = vrot.lane.b32.xlu0 %v2524, 15
  %v2529 = vpop.permute.xlu0 %2528
  %2530 = vrot.lane.b32.xlu0 %v2521, 15
  %v2531 = vpop.permute.xlu0 %2530
  %2532 = vrot.lane.b32.xlu0 %v2525, 15
  %v2533 = vpop.permute.xlu0 %2532
  %v2534 = vsel %vm1012, %v2527, %v2529
  %v2535 = vsel %vm1012, %v2529, %v2531
  %v2536 = vsel %vm1012, %v2531, %v2533
  %2540 = vst [vmem:[#allocation3 + $0x1c8] sm:$0xf] %v2534
  %2541 = vst [vmem:[#allocation3 + $0x1d0] sm:$0xf] %v2535
  %2542 = vst.msk [vmem:[#allocation3 + $0x1d8] sm:$0xf] %vm153, %v2536
  %v2543 = vld [vmem:[#allocation2] sm:$0xff]
  %v2544 = vld [vmem:[#allocation2 + $0x8] sm:$0xff]
  %v2547 = vcombine.low %v2543, %v2543
  %v2548 = vcombine.low %v2544, %v2544
  %2549 = vrot.lane.b32.xlu0 %v2547, 14
  %v2550 = vpop.permute.xlu0 %2549
  %2551 = vrot.lane.b32.xlu0 %v2543, 14
  %v2552 = vpop.permute.xlu0 %2551
  %2553 = vrot.lane.b32.xlu0 %v2548, 14
  %v2554 = vpop.permute.xlu0 %2553
  %2555 = vrot.lane.b32.xlu0 %v2544, 14
  %v2556 = vpop.permute.xlu0 %2555
  %v2557 = vsel %vm1036, %v2550, %v2552
  %v2558 = vsel %vm1036, %v2552, %v2554
  %v2559 = vsel %vm1036, %v2554, %v2556
  %2563 = vst [vmem:[#allocation3 + $0x1c8] sm:$0xf0] %v2557
  %2564 = vst [vmem:[#allocation3 + $0x1d0] sm:$0xf0] %v2558
  %2565 = vst.msk [vmem:[#allocation3 + $0x1d8] sm:$0xf0] %vm175, %v2559
  %v2566 = vld [vmem:[#allocation2] sm:$0xff]
  %v2567 = vld [vmem:[#allocation2 + $0x8] sm:$0xff]
  %v2570 = vcombine.high %v2566, %v2566
  %v2571 = vcombine.high %v2567, %v2567
  %2572 = vrot.lane.b32.xlu0 %v2566, 13
  %v2573 = vpop.permute.xlu0 %2572
  %2574 = vrot.lane.b32.xlu0 %v2570, 13
  %v2575 = vpop.permute.xlu0 %2574
  %2576 = vrot.lane.b32.xlu0 %v2567, 13
  %v2577 = vpop.permute.xlu0 %2576
  %2578 = vrot.lane.b32.xlu0 %v2571, 13
  %v2579 = vpop.permute.xlu0 %2578
  %v2580 = vsel %vm1060, %v2573, %v2575
  %v2581 = vsel %vm1060, %v2575, %v2577
  %v2582 = vsel %vm1060, %v2577, %v2579
  %2586 = vst [vmem:[#allocation3 + $0x1e0] sm:$0xf] %v2580
  %2587 = vst [vmem:[#allocation3 + $0x1e8] sm:$0xf] %v2581
  %2588 = vst.msk [vmem:[#allocation3 + $0x1f0] sm:$0xf] %vm153, %v2582
  %v2589 = vld [vmem:[#allocation2] sm:$0xff]
  %v2590 = vld [vmem:[#allocation2 + $0x8] sm:$0xff]
  %v2593 = vcombine.low %v2589, %v2589
  %v2594 = vcombine.low %v2590, %v2590
  %2595 = vrot.lane.b32.xlu0 %v2593, 12
  %v2596 = vpop.permute.xlu0 %2595
  %2597 = vrot.lane.b32.xlu0 %v2589, 12
  %v2598 = vpop.permute.xlu0 %2597
  %2599 = vrot.lane.b32.xlu0 %v2594, 12
  %v2600 = vpop.permute.xlu0 %2599
  %2601 = vrot.lane.b32.xlu0 %v2590, 12
  %v2602 = vpop.permute.xlu0 %2601
  %v2603 = vsel %vm1084, %v2596, %v2598
  %v2604 = vsel %vm1084, %v2598, %v2600
  %v2605 = vsel %vm1084, %v2600, %v2602
  %2609 = vst [vmem:[#allocation3 + $0x1e0] sm:$0xf0] %v2603
  %2610 = vst [vmem:[#allocation3 + $0x1e8] sm:$0xf0] %v2604
  %2611 = vst.msk [vmem:[#allocation3 + $0x1f0] sm:$0xf0] %vm175, %v2605
  %v2612 = vld [vmem:[#allocation2 + $0x4] sm:$0xff]
  %v2613 = vld [vmem:[#allocation2 + $0xc] sm:$0xf]
  %v2616 = vcombine.high %v2612, %v2612
  %2617 = vrot.lane.b32.xlu0 %v2612, 124
  %v2618 = vpop.permute.xlu0 %2617
  %2619 = vrot.lane.b32.xlu0 %v2616, 124
  %v2620 = vpop.permute.xlu0 %2619
  %2621 = vrot.lane.b32.xlu0 %v2613, 124
  %v2622 = vpop.permute.xlu0 %2621
  %v2623 = vsel %vm229, %v2618, %v2620
  %v2624 = vsel %vm229, %v2620, %v2622
  %2628 = vst [vmem:[#allocation3 + $0x1f8] sm:$0xf] %v2623
  %2629 = vst [vmem:[#allocation3 + $0x200] sm:$0xf] %v2624
  %2630 = vst.msk [vmem:[#allocation3 + $0x208] sm:$0xf] %vm153, %v2622
  %v2631 = vld [vmem:[#allocation2 + $0x4] sm:$0xff]
  %v2632 = vld [vmem:[#allocation2 + $0xc] sm:$0xf]
  %v2635 = vcombine.low %v2631, %v2631
  %v2636 = vcombine.low %v2632, %v2632
  %2637 = vrot.lane.b32.xlu0 %v2635, 123
  %v2638 = vpop.permute.xlu0 %2637
  %2639 = vrot.lane.b32.xlu0 %v2631, 123
  %v2640 = vpop.permute.xlu0 %2639
  %2641 = vrot.lane.b32.xlu0 %v2636, 123
  %v2642 = vpop.permute.xlu0 %2641
  %v2643 = vsel %vm250, %v2638, %v2640
  %v2644 = vsel %vm250, %v2640, %v2642
  %2648 = vst [vmem:[#allocation3 + $0x1f8] sm:$0xf0] %v2643
  %2649 = vst [vmem:[#allocation3 + $0x200] sm:$0xf0] %v2644
  %2650 = vst.msk [vmem:[#allocation3 + $0x208] sm:$0xf0] %vm175, %v2642
  %v2651 = vld [vmem:[#allocation2 + $0x4] sm:$0xff]
  %v2652 = vld [vmem:[#allocation2 + $0xc] sm:$0xf]
  %v2655 = vcombine.high %v2651, %v2651
  %2656 = vrot.lane.b32.xlu0 %v2651, 122
  %v2657 = vpop.permute.xlu0 %2656
  %2658 = vrot.lane.b32.xlu0 %v2655, 122
  %v2659 = vpop.permute.xlu0 %2658
  %2660 = vrot.lane.b32.xlu0 %v2652, 122
  %v2661 = vpop.permute.xlu0 %2660
  %v2662 = vsel %vm270, %v2657, %v2659
  %v2663 = vsel %vm270, %v2659, %v2661
  %2667 = vst [vmem:[#allocation3 + $0x210] sm:$0xf] %v2662
  %2668 = vst [vmem:[#allocation3 + $0x218] sm:$0xf] %v2663
  %2669 = vst.msk [vmem:[#allocation3 + $0x220] sm:$0xf] %vm153, %v2661
  %v2670 = vld [vmem:[#allocation2 + $0x4] sm:$0xff]
  %v2671 = vld [vmem:[#allocation2 + $0xc] sm:$0xf]
  %v2674 = vcombine.low %v2670, %v2670
  %v2675 = vcombine.low %v2671, %v2671
  %2676 = vrot.lane.b32.xlu0 %v2674, 121
  %v2677 = vpop.permute.xlu0 %2676
  %2678 = vrot.lane.b32.xlu0 %v2670, 121
  %v2679 = vpop.permute.xlu0 %2678
  %2680 = vrot.lane.b32.xlu0 %v2675, 121
  %v2681 = vpop.permute.xlu0 %2680
  %v2682 = vsel %vm1164, %v2677, %v2679
  %v2683 = vsel %vm1164, %v2679, %v2681
  %2687 = vst [vmem:[#allocation3 + $0x210] sm:$0xf0] %v2682
  %2688 = vst [vmem:[#allocation3 + $0x218] sm:$0xf0] %v2683
  %2689 = vst.msk [vmem:[#allocation3 + $0x220] sm:$0xf0] %vm175, %v2681
  %v2690 = vld [vmem:[#allocation2 + $0x4] sm:$0xff]
  %v2691 = vld [vmem:[#allocation2 + $0xc] sm:$0xf]
  %v2694 = vcombine.high %v2690, %v2690
  %2695 = vrot.lane.b32.xlu0 %v2690, 120
  %v2696 = vpop.permute.xlu0 %2695
  %2697 = vrot.lane.b32.xlu0 %v2694, 120
  %v2698 = vpop.permute.xlu0 %2697
  %2699 = vrot.lane.b32.xlu0 %v2691, 120
  %v2700 = vpop.permute.xlu0 %2699
  %v2701 = vsel %vm1184, %v2696, %v2698
  %v2702 = vsel %vm1184, %v2698, %v2700
  %2706 = vst [vmem:[#allocation3 + $0x228] sm:$0xf] %v2701
  %2707 = vst [vmem:[#allocation3 + $0x230] sm:$0xf] %v2702
  %2708 = vst.msk [vmem:[#allocation3 + $0x238] sm:$0xf] %vm153, %v2700
  %v2709 = vld [vmem:[#allocation2 + $0x4] sm:$0xff]
  %v2710 = vld [vmem:[#allocation2 + $0xc] sm:$0xf]
  %v2713 = vcombine.low %v2709, %v2709
  %v2714 = vcombine.low %v2710, %v2710
  %2715 = vrot.lane.b32.xlu0 %v2713, 119
  %v2716 = vpop.permute.xlu0 %2715
  %2717 = vrot.lane.b32.xlu0 %v2709, 119
  %v2718 = vpop.permute.xlu0 %2717
  %2719 = vrot.lane.b32.xlu0 %v2714, 119
  %v2720 = vpop.permute.xlu0 %2719
  %v2721 = vsel %vm1205, %v2716, %v2718
  %v2722 = vsel %vm1205, %v2718, %v2720
  %2726 = vst [vmem:[#allocation3 + $0x228] sm:$0xf0] %v2721
  %2727 = vst [vmem:[#allocation3 + $0x230] sm:$0xf0] %v2722
  %2728 = vst.msk [vmem:[#allocation3 + $0x238] sm:$0xf0] %vm175, %v2720
  %v2729 = vld [vmem:[#allocation2 + $0x4] sm:$0xff]
  %v2730 = vld [vmem:[#allocation2 + $0xc] sm:$0xf]
  %v2733 = vcombine.high %v2729, %v2729
  %2734 = vrot.lane.b32.xlu0 %v2729, 118
  %v2735 = vpop.permute.xlu0 %2734
  %2736 = vrot.lane.b32.xlu0 %v2733, 118
  %v2737 = vpop.permute.xlu0 %2736
  %2738 = vrot.lane.b32.xlu0 %v2730, 118
  %v2739 = vpop.permute.xlu0 %2738
  %v2740 = vsel %vm1225, %v2735, %v2737
  %v2741 = vsel %vm1225, %v2737, %v2739
  %2745 = vst [vmem:[#allocation3 + $0x240] sm:$0xf] %v2740
  %2746 = vst [vmem:[#allocation3 + $0x248] sm:$0xf] %v2741
  %2747 = vst.msk [vmem:[#allocation3 + $0x250] sm:$0xf] %vm153, %v2739
  %v2748 = vld [vmem:[%s1] sm:$0xff]
  %v2749 = vld [vmem:[#allocation3] sm:$0xff]
  %v2750 = vld [vmem:[#allocation3 + $0x8] sm:$0xff]
  %v2751 = vld [vmem:[#allocation3 + $0x10] sm:$0xff]
  %v2752 = vld [vmem:[#allocation3 + $0x18] sm:$0xff]
  %v2753 = vld [vmem:[#allocation3 + $0x20] sm:$0xff]
  %v2754 = vld [vmem:[#allocation3 + $0x28] sm:$0xff]
  %v2755 = vld [vmem:[#allocation3 + $0x30] sm:$0xff]
  %v2756 = vld [vmem:[#allocation3 + $0x38] sm:$0xff]
  %v2757 = vld [vmem:[#allocation3 + $0x40] sm:$0xff]
  %v2758 = vld [vmem:[#allocation3 + $0x48] sm:$0xff]
  %v2759 = vld [vmem:[#allocation3 + $0x50] sm:$0xff]
  %v2760 = vld [vmem:[#allocation3 + $0x58] sm:$0xff]
  %v2761 = vld [vmem:[#allocation3 + $0x60] sm:$0xff]
  %v2762 = vld [vmem:[#allocation3 + $0x68] sm:$0xff]
  %v2763 = vld [vmem:[#allocation3 + $0x70] sm:$0xff]
  %v2764 = vld [vmem:[#allocation3 + $0x78] sm:$0xff]
  %v2765 = vld [vmem:[#allocation3 + $0x80] sm:$0xff]
  %v2766 = vld [vmem:[#allocation3 + $0x88] sm:$0xff]
  %v2767 = vld [vmem:[#allocation3 + $0x90] sm:$0xff]
  %v2768 = vld [vmem:[#allocation3 + $0x98] sm:$0xff]
  %v2769 = vld [vmem:[#allocation3 + $0xa0] sm:$0xff]
  %v2770 = vld [vmem:[#allocation3 + $0xa8] sm:$0xff]
  %v2771 = vld [vmem:[#allocation3 + $0xb0] sm:$0xff]
  %v2772 = vld [vmem:[#allocation3 + $0xb8] sm:$0xff]
  %v2773 = vld [vmem:[#allocation3 + $0xc0] sm:$0xff]
  %v2774 = vld [vmem:[#allocation3 + $0xc8] sm:$0xff]
  %v2775 = vld [vmem:[#allocation3 + $0xd0] sm:$0xff]
  %v2776 = vld [vmem:[#allocation3 + $0xd8] sm:$0xff]
  %v2777 = vld [vmem:[#allocation3 + $0xe0] sm:$0xff]
  %v2778 = vld [vmem:[#allocation3 + $0xe8] sm:$0xff]
  %v2779 = vld [vmem:[#allocation3 + $0xf0] sm:$0xff]
  %v2780 = vld [vmem:[#allocation3 + $0xf8] sm:$0xff]
  %v2781 = vld [vmem:[#allocation3 + $0x100] sm:$0xff]
  %v2782 = vld [vmem:[#allocation3 + $0x108] sm:$0xff]
  %v2783 = vld [vmem:[#allocation3 + $0x110] sm:$0xff]
  %v2784 = vld [vmem:[#allocation3 + $0x118] sm:$0xff]
  %v2785 = vld [vmem:[#allocation3 + $0x120] sm:$0xff]
  %v2786 = vld [vmem:[#allocation3 + $0x128] sm:$0xff]
  %v2787 = vld [vmem:[#allocation3 + $0x130] sm:$0xff]
  %v2788 = vld [vmem:[#allocation3 + $0x138] sm:$0xff]
  %v2789 = vld [vmem:[#allocation3 + $0x140] sm:$0xff]
  %v2790 = vld [vmem:[#allocation3 + $0x148] sm:$0xff]
  %v2791 = vld [vmem:[#allocation3 + $0x150] sm:$0xff]
  %v2792 = vld [vmem:[#allocation3 + $0x158] sm:$0xff]
  %v2793 = vld [vmem:[#allocation3 + $0x160] sm:$0xff]
  %v2794 = vld [vmem:[#allocation3 + $0x168] sm:$0xff]
  %v2795 = vld [vmem:[#allocation3 + $0x170] sm:$0xff]
  %v2796 = vld [vmem:[#allocation3 + $0x178] sm:$0xff]
  %v2797 = vld [vmem:[#allocation3 + $0x180] sm:$0xff]
  %v2798 = vld [vmem:[#allocation3 + $0x188] sm:$0xff]
  %v2799 = vld [vmem:[#allocation3 + $0x190] sm:$0xff]
  %v2800 = vld [vmem:[#allocation3 + $0x198] sm:$0xff]
  %v2801 = vld [vmem:[#allocation3 + $0x1a0] sm:$0xff]
  %v2802 = vld [vmem:[#allocation3 + $0x1a8] sm:$0xff]
  %v2803 = vld [vmem:[#allocation3 + $0x1b0] sm:$0xff]
  %v2804 = vld [vmem:[#allocation3 + $0x1b8] sm:$0xff]
  %v2805 = vld [vmem:[#allocation3 + $0x1c0] sm:$0xff]
  %v2806 = vld [vmem:[#allocation3 + $0x1c8] sm:$0xff]
  %v2807 = vld [vmem:[#allocation3 + $0x1d0] sm:$0xff]
  %v2808 = vld [vmem:[#allocation3 + $0x1d8] sm:$0xff]
  %v2809 = vld [vmem:[#allocation3 + $0x1e0] sm:$0xff]
  %v2810 = vld [vmem:[#allocation3 + $0x1e8] sm:$0xff]
  %v2811 = vld [vmem:[#allocation3 + $0x1f0] sm:$0xff]
  %v2812 = vld [vmem:[#allocation3 + $0x1f8] sm:$0xff]
  %v2813 = vld [vmem:[#allocation3 + $0x200] sm:$0xff]
  %v2814 = vld [vmem:[#allocation3 + $0x208] sm:$0xff]
  %v2815 = vld [vmem:[#allocation3 + $0x210] sm:$0xff]
  %v2816 = vld [vmem:[#allocation3 + $0x218] sm:$0xff]
  %v2817 = vld [vmem:[#allocation3 + $0x220] sm:$0xff]
  %v2818 = vld [vmem:[#allocation3 + $0x228] sm:$0xff]
  %v2819 = vld [vmem:[#allocation3 + $0x230] sm:$0xff]
  %v2820 = vld [vmem:[#allocation3 + $0x238] sm:$0xff]
  %v2821 = vld [vmem:[#allocation3 + $0x240] sm:$0xf]
  %v2822 = vld [vmem:[#allocation3 + $0x248] sm:$0xf]
  %v2823 = vld [vmem:[#allocation3 + $0x250] sm:$0xf]
  %v2824 = vld [vmem:[%s2] sm:$0xf]
  %2826 = vset.pattern.permute.xlu0 0
  %2827 = vperm.xlu0 %2826, %v2824
  %v2828 = vpop.permute.xlu0 %2827
  %v2831 = vcombine.high %v2748, %v2748
  %v2832 = vsel %vm1318, %v2831, 0
  %v2835 = vsel %vm15, %v2821, 0
  %v2838 = vsel %vm15, %v2822, 0
  %v2841 = vsel %vm15, %v2823, 0
  %2843 = vmatprep.subr.mxu0 %v2750
  %2844 = vmatpush1.msra.mxu0 %v2749
  %2845 = vmatprep.subr.mxu0 %v2753
  %2846 = vmatpush1.msra.mxu0 %v2752
  %2847 = vmatprep.subr.mxu0 %v2756
  %2848 = vmatpush1.msra.mxu0 %v2755
  %2849 = vmatprep.subr.mxu0 %v2759
  %2850 = vmatpush1.msra.mxu0 %v2758
  %2851 = vmatprep.subr.mxu0 %v2762
  %2852 = vmatpush1.msra.mxu0 %v2761
  %2853 = vmatprep.subr.mxu0 %v2765
  %2854 = vmatpush1.msra.mxu0 %v2764
  %2855 = vmatprep.subr.mxu0 %v2768
  %2856 = vmatpush1.msra.mxu0 %v2767
  %2857 = vmatprep.subr.mxu0 %v2771
  %2858 = vmatpush1.msra.mxu0 %v2770
  %2859 = vmatprep.subr.mxu0 %v2774
  %2860 = vmatpush1.msra.mxu0 %v2773
  %2861 = vmatprep.subr.mxu0 %v2777
  %2862 = vmatpush1.msra.mxu0 %v2776
  %2863 = vmatprep.subr.mxu0 %v2780
  %2864 = vmatpush1.msra.mxu0 %v2779
  %2865 = vmatprep.subr.mxu0 %v2783
  %2866 = vmatpush1.msra.mxu0 %v2782
  %2867 = vmatprep.subr.mxu0 %v2786
  %2868 = vmatpush1.msra.mxu0 %v2785
  %2869 = vmatprep.subr.mxu0 %v2789
  %2870 = vmatpush1.msra.mxu0 %v2788
  %2871 = vmatprep.subr.mxu0 %v2792
  %2872 = vmatpush1.msra.mxu0 %v2791
  %2873 = vmatprep.subr.mxu0 %v2795
  %2874 = vmatpush1.msra.mxu0 %v2794
  %2875 = vmatprep.subr.mxu0 %v2798
  %2876 = vmatpush1.msra.mxu0 %v2797
  %2877 = vmatprep.subr.mxu0 %v2801
  %2878 = vmatpush1.msra.mxu0 %v2800
  %2879 = vmatprep.subr.mxu0 %v2804
  %2880 = vmatpush1.msra.mxu0 %v2803
  %2881 = vmatprep.subr.mxu0 %v2807
  %2882 = vmatpush1.msra.mxu0 %v2806
  %2883 = vmatprep.subr.mxu0 %v2810
  %2884 = vmatpush1.msra.mxu0 %v2809
  %2885 = vmatprep.subr.mxu0 %v2813
  %2886 = vmatpush1.msra.mxu0 %v2812
  %2887 = vmatprep.subr.mxu0 %v2816
  %2888 = vmatpush1.msra.mxu0 %v2815
  %2889 = vmatprep.subr.mxu0 %v2819
  %2890 = vmatpush1.msra.mxu0 %v2818
  %2891 = vmatprep.subr.mxu0 %v2838
  %2892 = vmatpush1.msra.mxu0 %v2835
  %2893 = vmatprep.subr.mxu0 0.0
  %2894 = vmatpush1.msra.mxu0 0.0
  %2895 = vmatprep.subr.mxu0 0.0
  %2896 = vmatpush1.msra.mxu0 0.0
  %2897 = vmatprep.subr.mxu0 0.0
  %2898 = vmatpush1.msra.mxu0 0.0
  %2899 = vmatprep.subr.mxu0 0.0
  %2900 = vmatpush1.msra.mxu0 0.0
  %2901 = vmatprep.subr.mxu0 0.0
  %2902 = vmatpush1.msra.mxu0 0.0
  %2903 = vmatprep.subr.mxu0 0.0
  %2904 = vmatpush1.msra.mxu0 0.0
  %2905 = vmatprep.subr.mxu0 0.0
  %2906 = vmatpush1.msra.mxu0 0.0
  %2907 = vmatprep.mubr.f32.mxu0 %v2832
  %2908 = vmatmul.mubr.f32.gmra.mrb[0].mxu0 %v2748
  %v2909 = vpop.f32.mrb[0].mxu0
  %v2910 = vadd.f32 %v2828, %v2909
  %v2911 = vpop.f32.mrb[0].mxu0
  %v2912 = vadd.f32 %v2828, %v2911
  %2913 = vdwg.mxu0
  %2914 = vmatprep.subr.mxu0 0.0
  %2915 = vmatpush1.msra.mxu0 %v2751
  %2916 = vmatprep.subr.mxu0 0.0
  %2917 = vmatpush1.msra.mxu0 %v2754
  %2918 = vmatprep.subr.mxu0 0.0
  %2919 = vmatpush1.msra.mxu0 %v2757
  %2920 = vmatprep.subr.mxu0 0.0
  %2921 = vmatpush1.msra.mxu0 %v2760
  %2922 = vmatprep.subr.mxu0 0.0
  %2923 = vmatpush1.msra.mxu0 %v2763
  %2924 = vmatprep.subr.mxu0 0.0
  %2925 = vmatpush1.msra.mxu0 %v2766
  %2926 = vmatprep.subr.mxu0 0.0
  %2927 = vmatpush1.msra.mxu0 %v2769
  %2928 = vmatprep.subr.mxu0 0.0
  %2929 = vmatpush1.msra.mxu0 %v2772
  %2930 = vmatprep.subr.mxu0 0.0
  %2931 = vmatpush1.msra.mxu0 %v2775
  %2932 = vmatprep.subr.mxu0 0.0
  %2933 = vmatpush1.msra.mxu0 %v2778
  %2934 = vmatprep.subr.mxu0 0.0
  %2935 = vmatpush1.msra.mxu0 %v2781
  %2936 = vmatprep.subr.mxu0 0.0
  %2937 = vmatpush1.msra.mxu0 %v2784
  %2938 = vmatprep.subr.mxu0 0.0
  %2939 = vmatpush1.msra.mxu0 %v2787
  %2940 = vmatprep.subr.mxu0 0.0
  %2941 = vmatpush1.msra.mxu0 %v2790
  %2942 = vmatprep.subr.mxu0 0.0
  %2943 = vmatpush1.msra.mxu0 %v2793
  %2944 = vmatprep.subr.mxu0 0.0
  %2945 = vmatpush1.msra.mxu0 %v2796
  %2946 = vmatprep.subr.mxu0 0.0
  %2947 = vmatpush1.msra.mxu0 %v2799
  %2948 = vmatprep.subr.mxu0 0.0
  %2949 = vmatpush1.msra.mxu0 %v2802
  %2950 = vmatprep.subr.mxu0 0.0
  %2951 = vmatpush1.msra.mxu0 %v2805
  %2952 = vmatprep.subr.mxu0 0.0
  %2953 = vmatpush1.msra.mxu0 %v2808
  %2954 = vmatprep.subr.mxu0 0.0
  %2955 = vmatpush1.msra.mxu0 %v2811
  %2956 = vmatprep.subr.mxu0 0.0
  %2957 = vmatpush1.msra.mxu0 %v2814
  %2958 = vmatprep.subr.mxu0 0.0
  %2959 = vmatpush1.msra.mxu0 %v2817
  %2960 = vmatprep.subr.mxu0 0.0
  %2961 = vmatpush1.msra.mxu0 %v2820
  %2962 = vmatprep.subr.mxu0 0.0
  %2963 = vmatpush1.msra.mxu0 %v2841
  %2964 = vmatprep.subr.mxu0 0.0
  %2965 = vmatpush1.msra.mxu0 0.0
  %2966 = vmatprep.subr.mxu0 0.0
  %2967 = vmatpush1.msra.mxu0 0.0
  %2968 = vmatprep.subr.mxu0 0.0
  %2969 = vmatpush1.msra.mxu0 0.0
  %2970 = vmatprep.subr.mxu0 0.0
  %2971 = vmatpush1.msra.mxu0 0.0
  %2972 = vmatprep.subr.mxu0 0.0
  %2973 = vmatpush1.msra.mxu0 0.0
  %2974 = vmatprep.subr.mxu0 0.0
  %2975 = vmatpush1.msra.mxu0 0.0
  %2976 = vmatprep.subr.mxu0 0.0
  %2977 = vmatpush1.msra.mxu0 0.0
  %2978 = vmatprep.mubr.f32.mxu0 %v2832
  %2979 = vmatmul.mubr.f32.gmra.mrb[0].mxu0 %v2748
  %v2980 = vpop.f32.mrb[0].mxu0
  %v2981 = vadd.f32 %v2828, %v2980
  %v2982 = vpop.f32.mrb[0].mxu0
  %2983 = vdwg.mxu0
  %v2984 = vsel %vm15, %v2910, -inf
  %v2985 = vrot.slane %v2984, 4
  %v2986 = vmax.f32 %v2984, %v2985
  %v2987 = vrot.slane %v2986, 2
  %v2988 = vmax.f32 %v2986, %v2987
  %v2989 = vrot.slane %v2988, 1
  %v2990 = vmax.f32 %v2988, %v2989
  %v2991 = vsel %vm15, %v2912, -inf
  %v2992 = vrot.slane %v2991, 4
  %v2993 = vmax.f32 %v2991, %v2992
  %v2994 = vrot.slane %v2993, 2
  %v2995 = vmax.f32 %v2993, %v2994
  %v2996 = vrot.slane %v2995, 1
  %v2997 = vmax.f32 %v2995, %v2996
  %v2998 = vsel %vm153, %v2981, -inf
  %v2999 = vrot.slane %v2998, 4
  %v3000 = vmax.f32 %v2998, %v2999
  %v3001 = vrot.slane %v3000, 2
  %v3002 = vmax.f32 %v3000, %v3001
  %v3003 = vrot.slane %v3002, 1
  %v3004 = vmax.f32 %v3002, %v3003
  %v3005 = vsub.f32 %v2910, %v2990
  %v3006 = vsub.f32 %v2912, %v2997
  %v3007 = vsub.f32 %v2981, %v3004
  %v3008 = vmul.f32 %v3005, 1.442695
  %v3009 = vpow.pop %v3008
  %v3010 = vmul.f32 %v3006, 1.442695
  %v3011 = vpow.pop %v3010
  %v3012 = vmul.f32 %v3007, 1.442695
  %v3013 = vpow.pop %v3012
  %v3014 = vsel %vm15, %v3009, 0.0
  %v3015 = vrot.slane %v3014, 4
  %v3016 = vadd.f32 %v3014, %v3015
  %v3017 = vrot.slane %v3016, 2
  %v3018 = vadd.f32 %v3016, %v3017
  %v3019 = vrot.slane %v3018, 1
  %v3020 = vadd.f32 %v3018, %v3019
  %v3021 = vsel %vm15, %v3011, 0.0
  %v3022 = vrot.slane %v3021, 4
  %v3023 = vadd.f32 %v3021, %v3022
  %v3024 = vrot.slane %v3023, 2
  %v3025 = vadd.f32 %v3023, %v3024
  %v3026 = vrot.slane %v3025, 1
  %v3027 = vadd.f32 %v3025, %v3026
  %v3028 = vsel %vm153, %v3013, 0.0
  %v3029 = vrot.slane %v3028, 4
  %v3030 = vadd.f32 %v3028, %v3029
  %v3031 = vrot.slane %v3030, 2
  %v3032 = vadd.f32 %v3030, %v3031
  %v3033 = vrot.slane %v3032, 1
  %v3034 = vadd.f32 %v3032, %v3033
  %v3035 = vrcp.pop %v3020
  %v3036 = vmul.f32 %v3009, %v3035
  %v3037 = vrcp.pop %v3027
  %v3038 = vmul.f32 %v3011, %v3037
  %v3039 = vrcp.pop %v3034
  %v3040 = vmul.f32 %v3013, %v3039
  %s3041 = scalar_lea.vmem %s3, 8
  %3042 = vst.msk [vmem:[%s3041] sm:$0xf] %vm1528, %v3036
  %3044 = vrot.lane.b32.xlu0 %v3036, 122
  %v3045 = vpop.permute.xlu0 %3044
  %3047 = vst.msk [vmem:[%s3041] sm:$0xf] %vm1534, %v3045
  %3048 = vrot.lane.b32.xlu0 %v3036, 116
  %v3049 = vpop.permute.xlu0 %3048
  %3051 = vst.msk [vmem:[%s3041] sm:$0xf] %vm1539, %v3049
  %3052 = vrot.lane.b32.xlu0 %v3036, 110
  %v3053 = vpop.permute.xlu0 %3052
  %3055 = vst.msk [vmem:[%s3041] sm:$0xf] %vm1544, %v3053
  %3056 = vrot.lane.b32.xlu0 %v3036, 104
  %v3057 = vpop.permute.xlu0 %3056
  %3059 = vst.msk [vmem:[%s3041] sm:$0xf] %vm1549, %v3057
  %3060 = vrot.lane.b32.xlu0 %v3036, 98
  %v3061 = vpop.permute.xlu0 %3060
  %3063 = vst.msk [vmem:[%s3041] sm:$0xf] %vm1554, %v3061
  %3065 = vrot.lane.b32.xlu0 %v3038, 92
  %v3066 = vpop.permute.xlu0 %3065
  %3068 = vst.msk [vmem:[%s3041] sm:$0xf] %vm1560, %v3066
  %3069 = vrot.lane.b32.xlu0 %v3038, 86
  %v3070 = vpop.permute.xlu0 %3069
  %3072 = vst.msk [vmem:[%s3041] sm:$0xf] %vm1565, %v3070
  %3073 = vrot.lane.b32.xlu0 %v3038, 80
  %v3074 = vpop.permute.xlu0 %3073
  %3076 = vst.msk [vmem:[%s3041 + $0x4] sm:$0xf] %vm1528, %v3074
  %3077 = vrot.lane.b32.xlu0 %v3038, 74
  %v3078 = vpop.permute.xlu0 %3077
  %3080 = vst.msk [vmem:[%s3041 + $0x4] sm:$0xf] %vm1534, %v3078
  %3081 = vrot.lane.b32.xlu0 %v3038, 68
  %v3082 = vpop.permute.xlu0 %3081
  %3084 = vst.msk [vmem:[%s3041 + $0x4] sm:$0xf] %vm1539, %v3082
  %v3086 = vcombine.low %v3038, %v3040
  %3087 = vrot.lane.b32.xlu0 %v3086, 62
  %v3088 = vpop.permute.xlu0 %3087
  %v3089 = vrot.slane %v3088, 4
  %v3090 = vsel %vm604, %v3088, %v3089
  %3092 = vst.msk [vmem:[%s3041 + $0x4] sm:$0xf] %vm1544, %v3090
  %3093 = vrot.lane.b32.xlu0 %v3040, 56
  %v3094 = vpop.permute.xlu0 %3093
  %3096 = vst.msk [vmem:[%s3041 + $0x4] sm:$0xf] %vm1549, %v3094
  %3097 = vrot.lane.b32.xlu0 %v3040, 50
  %v3098 = vpop.permute.xlu0 %3097
  %3100 = vst.msk [vmem:[%s3041 + $0x4] sm:$0xf] %vm1554, %v3098
  %3101 = vrot.lane.b32.xlu0 %v3040, 44
  %v3102 = vpop.permute.xlu0 %3101
  %3104 = vst.msk [vmem:[%s3041 + $0x4] sm:$0xf] %vm1560, %v3102
  %3105 = vrot.lane.b32.xlu0 %v3040, 38
  %v3106 = vpop.permute.xlu0 %3105
  %3108 = vst.msk [vmem:[%s3041 + $0x4] sm:$0xf] %vm1565, %v3106
  // Predicated region
  $region14: #{_one_step.1} parent=0 // pred_check
    _
  $region15: #{_one_step.1} parent=0 // pred_check_branch
    %3110 = sbr.rel (0) target = $region17
  $region16: #{_one_step.1} parent=0 // pred_region
    _
  $region17: #{_one_step.1} parent=0 // pred_fallthru
    _
  // Predicated region
  $region18: #{_one_step.1} parent=0 // pred_check
    _
  $region19: #{_one_step.1} parent=0 // pred_check_branch
    %3112 = sbr.rel (0) target = $region21
  $region20: #{_one_step.1} parent=0 // pred_region
    _
  $region21: #{_one_step.1} parent=0 // pred_fallthru
    _

</llo_original>
